<compile_context>
chip_gen: v7x
topology: tpu7x:2x2x1
jax: 0.10.0
libtpu: 0.0.40
codegen_flags: <defaults>
</compile_context>

<pallas_src>
import functools
import math

import jax
import jax.numpy as jnp
from jax import lax
from jax.experimental import pallas as pl
from jax.experimental.pallas import tpu as pltpu


LN_EPS = 1e-12  # BERT-style epsilon used by the pytext encoder layers

# params consumed by the kernel (wqkv/bqkv already packed, scale folded into wq/bq)
PACKED_PARAM_ORDER = ("wqkv", "bqkv", "wo", "bo", "g1", "be1",
                      "wi", "bi", "w2", "b2", "g2", "be2")
TAIL_PARAM_ORDER = PACKED_PARAM_ORDER[2:]

# Flipped to False (and the call retried) if this jax build rejects
# pipeline_mode=pl.Buffered(1) on the weight BlockSpecs.
_SINGLE_BUFFER_WEIGHTS_OK = True


# --------------------------------------------------------------------------- #
# chip-dependent knobs
# --------------------------------------------------------------------------- #
def _device_kind():
    try:
        return jax.devices()[0].device_kind.lower().replace(" ", "")
    except Exception:
        return ""


def _vmem_limit_bytes(kind):
    if "v7" in kind or "tpu7" in kind:
        return 48 * 1024 * 1024          # v7x: 64 MiB physical/TC; leave headroom
    if "v6" in kind or "v5" in kind or "v4" in kind:
        return 100 * 1024 * 1024         # 128 MiB physical; allow big blocks
    return None


def _use_bf16_softmax(kind):
    # v6e/v7x have a bf16 EUP path; v5e (and older/unknown) keep f32 exp.
    return ("v6" in kind) or ("v7" in kind) or ("tpu7" in kind)


def _heads_per_group(num_heads, head_dim):
    """Smallest divisor of num_heads whose combined width is 128-lane aligned."""
    for g in range(1, num_heads + 1):
        if num_heads % g == 0 and (g * head_dim) % 128 == 0:
            return g
    return num_heads  # fall back to one full-width (== H) store


# --------------------------------------------------------------------------- #
# kernel
# --------------------------------------------------------------------------- #
def _encoder_layer_kernel(x_ref, kmask_ref, tmask_ref,
                          wqkv_ref, bqkv_ref,
                          wo_ref, bo_ref, g1_ref, be1_ref,
                          wi_ref, bi_ref, w2_ref, b2_ref, g2_ref, be2_ref,
                          out_ref, ctx_ref,
                          *, num_heads, head_dim, heads_per_group,
                          q_block, ffn_chunk, softmax_bf16):
    """One full transformer encoder layer for one batch element (grid axis = batch)."""
    H = num_heads * head_dim
    S = x_ref.shape[1]

    x = x_ref[0]                                    # (S, H) bf16 — stays bf16 for MXU
    kmask = kmask_ref[0].astype(jnp.float32)        # (1, S) 1=attend, 0=masked key
    tmask = tmask_ref[0].astype(jnp.float32)        # (S, 1) 1=valid token row

    neg_bias = (1.0 - kmask) * (-1e9)               # (1, S), broadcasts over query rows

    # --- fused QKV projection (scale already folded into wq/bq at pack time) --
    qkv = (jnp.dot(x, wqkv_ref[...], preferred_element_type=jnp.float32)
           + bqkv_ref[...].astype(jnp.float32)).astype(jnp.bfloat16)   # (S, 3H) bf16

    q = qkv[:, 0 * H:1 * H]
    k = qkv[:, 1 * H:2 * H]
    v = qkv[:, 2 * H:3 * H]

    # --- multi-head self attention, query-block tiled, head-grouped ctx stores
    dims = (((1,), (1,)), ((), ()))                 # contract last dims, no transpose
    group_w = heads_per_group * head_dim
    for g0 in range(0, num_heads, heads_per_group):         # static loops
        glo = g0 * head_dim
        for q0 in range(0, S, q_block):
            qw = min(q_block, S - q0)
            ctx_heads = []
            for hh in range(heads_per_group):
                lo = glo + hh * head_dim
                hi = lo + head_dim
                s = lax.dot_general(q[q0:q0 + qw, lo:hi], k[:, lo:hi], dims,
                                    preferred_element_type=jnp.float32)  # (qw, S)
                s = s + neg_bias
                s = s - jnp.max(s, axis=-1, keepdims=True)
                if softmax_bf16:
                    p = jnp.exp(s.astype(jnp.bfloat16))                  # bf16 EUP
                    denom = jnp.sum(p.astype(jnp.float32), axis=-1, keepdims=True)
                    p = p * pl.reciprocal(denom, approx=True).astype(jnp.bfloat16)
                else:
                    p = jnp.exp(s)
                    p = (p * pl.reciprocal(jnp.sum(p, axis=-1, keepdims=True),
                                           approx=True)).astype(jnp.bfloat16)
                ctx_heads.append(jnp.dot(p, v[:, lo:hi],
                                         preferred_element_type=jnp.float32))
            ctx_blk = (ctx_heads[0] if len(ctx_heads) == 1
                       else jnp.concatenate(ctx_heads, axis=-1))         # (qw, group_w)
            ctx_ref[q0:q0 + qw, glo:glo + group_w] = ctx_blk.astype(ctx_ref.dtype)

    attn = (jnp.dot(ctx_ref[...], wo_ref[...], preferred_element_type=jnp.float32)
            + bo_ref[...].astype(jnp.float32))      # (S, H) f32

    def layer_norm(y, g_ref, b_ref):
        mu = jnp.mean(y, axis=-1, keepdims=True)
        var = jnp.mean((y - mu) ** 2, axis=-1, keepdims=True)
        yhat = (y - mu) * lax.rsqrt(var + LN_EPS)
        return yhat * g_ref[...].astype(jnp.float32) + b_ref[...].astype(jnp.float32)

    h1 = layer_norm(x.astype(jnp.float32) + attn, g1_ref, be1_ref)   # post-LN, f32
    h1_bf = h1.astype(jnp.bfloat16)

    # --- feed-forward, chunked over the intermediate dimension ---------------
    intermediate = wi_ref.shape[1]
    ffn = jnp.zeros((S, H), jnp.float32)
    for c0 in range(0, intermediate, ffn_chunk):    # static loop
        cw = min(ffn_chunk, intermediate - c0)
        t = (jnp.dot(h1_bf, wi_ref[:, c0:c0 + cw], preferred_element_type=jnp.float32)
             + bi_ref[:, c0:c0 + cw].astype(jnp.float32))            # (S, cw) f32
        t = jax.nn.gelu(t, approximate=True).astype(jnp.bfloat16)    # FT tanh GELU
        ffn = ffn + jnp.dot(t, w2_ref[c0:c0 + cw, :],
                            preferred_element_type=jnp.float32)
    ffn = ffn + b2_ref[...].astype(jnp.float32)

    h2 = layer_norm(h1 + ffn, g2_ref, be2_ref)

    # rebuild_padding semantics: padded rows are zeroed before the store.
    out_ref[0] = (h2 * tmask).astype(out_ref.dtype)


# --------------------------------------------------------------------------- #
# wrappers
# --------------------------------------------------------------------------- #
def _weight_specs(shapes, single_buffer):
    specs = []
    for shape in shapes:
        nd = len(shape)
        idx = lambda b, _nd=nd: (0,) * _nd          # constant across the batch grid
        if single_buffer:
            specs.append(pl.BlockSpec(shape, idx, pipeline_mode=pl.Buffered(1)))
        else:
            specs.append(pl.BlockSpec(shape, idx))
    return specs


def pack_layer_params(params, *, num_heads):
    """Pack Q/K/V into one (H,3H) matmul and fold 1/sqrt(head_dim) into wq/bq."""
    hidden = params["wq"].shape[0]
    head_dim = hidden // num_heads
    scale = 1.0 / math.sqrt(head_dim)
    wq = (params["wq"].astype(jnp.float32) * scale).astype(params["wq"].dtype)
    bq = (params["bq"].astype(jnp.float32) * scale).astype(params["bq"].dtype)
    packed = {
        "wqkv": jnp.concatenate([wq, params["wk"], params["wv"]], axis=1),
        "bqkv": jnp.concatenate([bq, params["bk"], params["bv"]], axis=1),
    }
    for key in TAIL_PARAM_ORDER:
        packed[key] = params[key]
    return packed


def encoder_layer(x, key_mask, tok_mask, packed, *, num_heads, head_dim,
                  ffn_chunk=512, q_block=256):
    """x: (B,S,H) bf16; key_mask: (B,1,S); tok_mask: (B,S,1) -> (B,S,H) bf16."""
    global _SINGLE_BUFFER_WEIGHTS_OK
    B, S, H = x.shape
    intermediate = packed["wi"].shape[1]
    ffn_chunk = min(ffn_chunk, intermediate)
    q_block = min(q_block, S)

    weights = [packed[k] for k in PACKED_PARAM_ORDER]
    kind = _device_kind()

    kernel = functools.partial(
        _encoder_layer_kernel,
        num_heads=num_heads, head_dim=head_dim,
        heads_per_group=_heads_per_group(num_heads, head_dim),
        q_block=q_block, ffn_chunk=ffn_chunk,
        softmax_bf16=_use_bf16_softmax(kind))

    base_specs = [
        pl.BlockSpec((1, S, H), lambda b: (b, 0, 0)),   # hidden states
        pl.BlockSpec((1, 1, S), lambda b: (b, 0, 0)),   # key mask -> in-kernel bias
        pl.BlockSpec((1, S, 1), lambda b: (b, 0, 0)),   # token (row) mask for pad zeroing
    ]
    out_specs = pl.BlockSpec((1, S, H), lambda b: (b, 0, 0))

    cp_kwargs = dict(dimension_semantics=("parallel",))
    vlim = _vmem_limit_bytes(kind)
    if vlim is not None:
        cp_kwargs["vmem_limit_bytes"] = vlim

    def run(single_buffer):
        in_specs = base_specs + _weight_specs([w.shape for w in weights],
                                              single_buffer)
        return pl.pallas_call(
            kernel,
            out_shape=jax.ShapeDtypeStruct((B, S, H), x.dtype),
            grid=(B,),
            in_specs=in_specs,
            out_specs=out_specs,
            scratch_shapes=[pltpu.VMEM((S, H), jnp.bfloat16)],   # context slab
            compiler_params=pltpu.CompilerParams(**cp_kwargs),
        )(x, key_mask, tok_mask, *weights)

    if _SINGLE_BUFFER_WEIGHTS_OK:
        try:
            return run(True)
        except Exception:
            # This jax build rejects pipeline_mode=pl.Buffered(1); fall back once.
            _SINGLE_BUFFER_WEIGHTS_OK = False
    return run(False)


def nv_transformer_stack(encoded, neg_padding_mask, layers_params, *, num_heads,
                         ffn_chunk=512):
    """Forward pass of NVTransformerStack.

    encoded:          (B, S, H) bfloat16   (analog of the CUDA half input)
    neg_padding_mask: (B, S) float, 1.0 = valid token, 0.0 = padding
    layers_params:    list of per-layer dicts (raw or already packed)
    returns: list of (layer_num + 1) arrays, each (S, B, H) bfloat16,
             with padded positions zeroed (rebuild_padding semantics).
    """
    B, S, H = encoded.shape
    head_dim = H // num_heads

    # Accept raw weights too, but prefer pre-packed (no per-forward concatenate).
    packed_layers = [p if "wqkv" in p else pack_layer_params(p, num_heads=num_heads)
                     for p in layers_params]

    # Host-side early exit, mirroring `.item()` in the PyTorch module.
    # (Not jit-compatible by construction — same as the original module.)
    total_tokens = int(jax.device_get(jnp.sum(neg_padding_mask)))
    if total_tokens == 0:
        z = jnp.transpose(encoded, (1, 0, 2))
        return [z] + [jnp.zeros_like(z) for _ in packed_layers]

    m = neg_padding_mask.astype(encoded.dtype)
    key_mask = m[:, None, :]          # (B, 1, S) — key-side mask, bias built in-kernel
    tok_mask = m[:, :, None]          # (B, S, 1) — row mask for pad zeroing

    # build_mask_remove_padding equivalent (padded layout): pads carry zeros and are
    # masked out of attention so they never influence valid tokens.
    hidden = encoded * tok_mask

    all_hidden = [hidden]
    for packed in packed_layers:
        hidden = encoder_layer(hidden, key_mask, tok_mask, packed,
                               num_heads=num_heads, head_dim=head_dim,
                               ffn_chunk=ffn_chunk)
        all_hidden.append(hidden)

    # rebuild_padding zeroing is already done in-kernel; just transpose to (S, B, H).
    return [jnp.transpose(hs, (1, 0, 2)) for hs in all_hidden]


def make_layer_params(key, hidden, intermediate, dtype=jnp.bfloat16):
    """Deterministic synthetic weights for one FT/BERT encoder layer."""
    keys = jax.random.split(key, 12)
    s = 0.05
    p = {
        "wq": jax.random.normal(keys[0], (hidden, hidden)) * s,
        "bq": jax.random.normal(keys[1], (1, hidden)) * s,
        "wk": jax.random.normal(keys[2], (hidden, hidden)) * s,
        "bk": jax.random.normal(keys[3], (1, hidden)) * s,
        "wv": jax.random.normal(keys[4], (hidden, hidden)) * s,
        "bv": jax.random.normal(keys[5], (1, hidden)) * s,
        "wo": jax.random.normal(keys[6], (hidden, hidden)) * s,
        "bo": jax.random.normal(keys[7], (1, hidden)) * s,
        "g1": jnp.ones((1, hidden)),
        "be1": jnp.zeros((1, hidden)),
        "wi": jax.random.normal(keys[8], (hidden, intermediate)) * s,
        "bi": jax.random.normal(keys[9], (1, intermediate)) * s,
        "w2": jax.random.normal(keys[10], (intermediate, hidden)) * s,
        "b2": jax.random.normal(keys[11], (1, hidden)) * s,
        "g2": jnp.ones((1, hidden)),
        "be2": jnp.zeros((1, hidden)),
    }
    return {k: v.astype(dtype) for k, v in p.items()}


if __name__ == "__main__":
    B, S, H = 2, 8, 32
    NUM_HEADS = 4
    INTERMEDIATE = 4 * H
    NUM_LAYERS = 2

    root = jax.random.PRNGKey(0)
    k_enc, k_l0, k_l1 = jax.random.split(root, 3)

    encoded = jax.random.normal(k_enc, (B, S, H)).astype(jnp.bfloat16)
    # sequence lengths 8 and 5 -> second sequence has 3 padded positions
    lengths = jnp.array([8, 5], dtype=jnp.int32)
    neg_padding_mask = (jnp.arange(S)[None, :] < lengths[:, None]).astype(jnp.float32)

    raw_layers = [
        make_layer_params(k_l0, H, INTERMEDIATE),
        make_layer_params(k_l1, H, INTERMEDIATE),
    ][:NUM_LAYERS]

    # Pre-pack once, outside the forward pass (QKV fusion + scale folding).
    layers_params = [pack_layer_params(p, num_heads=NUM_HEADS) for p in raw_layers]

    states = nv_transformer_stack(encoded, neg_padding_mask, layers_params,
                                  num_heads=NUM_HEADS)
    states = [jax.block_until_ready(s) for s in states]

    assert len(states) == NUM_LAYERS + 1
    for st in states:
        assert st.shape == (S, B, H)
        assert st.dtype == jnp.bfloat16
        assert bool(jnp.all(jnp.isfinite(st.astype(jnp.float32))))
    # padded positions (batch 1, seq >= 5) must be zero in every returned state
    for st in states:
        assert bool(jnp.all(st[5:, 1, :] == 0))

    print("KERNEL_OK")
</pallas_src>

<mosaic_0001>
module attributes {stable_mosaic.version = 11 : i64} {
  func.func @_encoder_layer_kernel(%arg0: i32, %arg1: memref<1x8x32xbf16, #tpu.memory_space<vmem>>, %arg2: memref<1x1x8xbf16, #tpu.memory_space<vmem>>, %arg3: memref<1x8x1xbf16, #tpu.memory_space<vmem>>, %arg4: memref<32x96xbf16, #tpu.memory_space<vmem>>, %arg5: memref<1x96xbf16, #tpu.memory_space<vmem>>, %arg6: memref<32x32xbf16, #tpu.memory_space<vmem>>, %arg7: memref<1x32xbf16, #tpu.memory_space<vmem>>, %arg8: memref<1x32xbf16, #tpu.memory_space<vmem>>, %arg9: memref<1x32xbf16, #tpu.memory_space<vmem>>, %arg10: memref<32x128xbf16, #tpu.memory_space<vmem>>, %arg11: memref<1x128xbf16, #tpu.memory_space<vmem>>, %arg12: memref<128x32xbf16, #tpu.memory_space<vmem>>, %arg13: memref<1x32xbf16, #tpu.memory_space<vmem>>, %arg14: memref<1x32xbf16, #tpu.memory_space<vmem>>, %arg15: memref<1x32xbf16, #tpu.memory_space<vmem>>, %arg16: memref<1x8x32xbf16, #tpu.memory_space<vmem>>, %arg17: memref<8x32xbf16, #tpu.memory_space<vmem>>) attributes {dimension_semantics = [#tpu.dimension_semantics<parallel>], iteration_bounds = array<i64: 2>, scalar_prefetch = 0 : i64, scratch_operands = 1 : i64, tpu.core_type = #tpu.core_type<tc>, window_params = [{transform_indices = @transform_0, window_bounds = array<i64: 1, 8, 32>}, {transform_indices = @transform_1, window_bounds = array<i64: 1, 1, 8>}, {transform_indices = @transform_2, window_bounds = array<i64: 1, 8, 1>}, {pipeline_mode = #tpu.pipeline_mode<synchronous>, transform_indices = @transform_3, window_bounds = array<i64: 32, 96>}, {pipeline_mode = #tpu.pipeline_mode<synchronous>, transform_indices = @transform_4, window_bounds = array<i64: 1, 96>}, {pipeline_mode = #tpu.pipeline_mode<synchronous>, transform_indices = @transform_5, window_bounds = array<i64: 32, 32>}, {pipeline_mode = #tpu.pipeline_mode<synchronous>, transform_indices = @transform_6, window_bounds = array<i64: 1, 32>}, {pipeline_mode = #tpu.pipeline_mode<synchronous>, transform_indices = @transform_7, window_bounds = array<i64: 1, 32>}, {pipeline_mode = #tpu.pipeline_mode<synchronous>, transform_indices = @transform_8, window_bounds = array<i64: 1, 32>}, {pipeline_mode = #tpu.pipeline_mode<synchronous>, transform_indices = @transform_9, window_bounds = array<i64: 32, 128>}, {pipeline_mode = #tpu.pipeline_mode<synchronous>, transform_indices = @transform_10, window_bounds = array<i64: 1, 128>}, {pipeline_mode = #tpu.pipeline_mode<synchronous>, transform_indices = @transform_11, window_bounds = array<i64: 128, 32>}, {pipeline_mode = #tpu.pipeline_mode<synchronous>, transform_indices = @transform_12, window_bounds = array<i64: 1, 32>}, {pipeline_mode = #tpu.pipeline_mode<synchronous>, transform_indices = @transform_13, window_bounds = array<i64: 1, 32>}, {pipeline_mode = #tpu.pipeline_mode<synchronous>, transform_indices = @transform_14, window_bounds = array<i64: 1, 32>}, {transform_indices = @transform_15, window_bounds = array<i64: 1, 8, 32>}]} {
    %c0 = arith.constant 0 : index
    %c0_0 = arith.constant 0 : index
    %c0_1 = arith.constant 0 : index
    %0 = vector.load %arg1[%c0, %c0_0, %c0_1] : memref<1x8x32xbf16, #tpu.memory_space<vmem>>, vector<1x8x32xbf16>
    %1 = vector.shape_cast %0 : vector<1x8x32xbf16> to vector<8x32xbf16>
    %c0_2 = arith.constant 0 : index
    %c0_3 = arith.constant 0 : index
    %c0_4 = arith.constant 0 : index
    %2 = vector.load %arg2[%c0_2, %c0_3, %c0_4] : memref<1x1x8xbf16, #tpu.memory_space<vmem>>, vector<1x1x8xbf16>
    %3 = vector.shape_cast %2 : vector<1x1x8xbf16> to vector<1x8xbf16>
    %4 = arith.extf %3 : vector<1x8xbf16> to vector<1x8xf32>
    %c0_5 = arith.constant 0 : index
    %c0_6 = arith.constant 0 : index
    %c0_7 = arith.constant 0 : index
    %5 = vector.load %arg3[%c0_5, %c0_6, %c0_7] : memref<1x8x1xbf16, #tpu.memory_space<vmem>>, vector<1x8x1xbf16>
    %6 = vector.shape_cast %5 : vector<1x8x1xbf16> to vector<8x1xbf16>
    %7 = arith.extf %6 : vector<8x1xbf16> to vector<8x1xf32>
    %cst = arith.constant 1.000000e+00 : f32
    %8 = vector.broadcast %cst : f32 to vector<1x8xf32>
    %9 = arith.subf %8, %4 : vector<1x8xf32>
    %cst_8 = arith.constant -1.000000e+09 : f32
    %10 = vector.broadcast %cst_8 : f32 to vector<1x8xf32>
    %11 = arith.mulf %9, %10 : vector<1x8xf32>
    %c0_9 = arith.constant 0 : index
    %c0_10 = arith.constant 0 : index
    %12 = vector.load %arg4[%c0_9, %c0_10] : memref<32x96xbf16, #tpu.memory_space<vmem>>, vector<32x96xbf16>
    %cst_11 = arith.constant dense<0.000000e+00> : vector<8x96xf32>
    %13 = tpu.matmul %1, %12, %cst_11 {dimension_numbers = #tpu.dot_dimension_numbers<[1], [0], [0], [1], [0, 0, 1, 1], [], []>} : vector<8x32xbf16>, vector<32x96xbf16>, vector<8x96xf32> -> vector<8x96xf32>
    %c0_12 = arith.constant 0 : index
    %c0_13 = arith.constant 0 : index
    %14 = vector.load %arg5[%c0_12, %c0_13] : memref<1x96xbf16, #tpu.memory_space<vmem>>, vector<1x96xbf16>
    %15 = arith.extf %14 : vector<1x96xbf16> to vector<1x96xf32>
    %16 = vector.broadcast %15 : vector<1x96xf32> to vector<8x96xf32>
    %17 = arith.addf %13, %16 : vector<8x96xf32>
    %18 = arith.truncf %17 : vector<8x96xf32> to vector<8x96xbf16>
    %19 = vector.extract_strided_slice %18 {offsets = [0, 0], sizes = [8, 32], strides = [1, 1]} : vector<8x96xbf16> to vector<8x32xbf16>
    %20 = vector.extract_strided_slice %18 {offsets = [0, 32], sizes = [8, 32], strides = [1, 1]} : vector<8x96xbf16> to vector<8x32xbf16>
    %21 = vector.extract_strided_slice %18 {offsets = [0, 64], sizes = [8, 32], strides = [1, 1]} : vector<8x96xbf16> to vector<8x32xbf16>
    %22 = vector.extract_strided_slice %19 {offsets = [0, 0], sizes = [8, 8], strides = [1, 1]} : vector<8x32xbf16> to vector<8x8xbf16>
    %23 = vector.extract_strided_slice %20 {offsets = [0, 0], sizes = [8, 8], strides = [1, 1]} : vector<8x32xbf16> to vector<8x8xbf16>
    %cst_14 = arith.constant dense<0.000000e+00> : vector<8x8xf32>
    %24 = tpu.matmul %22, %23, %cst_14 {dimension_numbers = #tpu.dot_dimension_numbers<[1], [1], [0], [0], [0, 0, 1, 0], [], []>} : vector<8x8xbf16>, vector<8x8xbf16>, vector<8x8xf32> -> vector<8x8xf32>
    %25 = vector.broadcast %11 : vector<1x8xf32> to vector<8x8xf32>
    %26 = arith.addf %24, %25 : vector<8x8xf32>
    %cst_15 = arith.constant dense<0xFF800000> : vector<8xf32>
    %27 = vector.multi_reduction <maximumf>, %26, %cst_15 [1] : vector<8x8xf32> to vector<8xf32>
    %28 = vector.shape_cast %27 : vector<8xf32> to vector<8x1xf32>
    %29 = vector.broadcast %28 : vector<8x1xf32> to vector<8x8xf32>
    %30 = arith.subf %26, %29 : vector<8x8xf32>
    %31 = math.exp %30 : vector<8x8xf32>
    %cst_16 = arith.constant dense<0.000000e+00> : vector<8xf32>
    %32 = vector.multi_reduction <add>, %31, %cst_16 [1] : vector<8x8xf32> to vector<8xf32>
    %33 = vector.shape_cast %32 : vector<8xf32> to vector<8x1xf32>
    %34 = tpu.reciprocal %33 {approx = true} : vector<8x1xf32> -> vector<8x1xf32>
    %35 = vector.broadcast %34 : vector<8x1xf32> to vector<8x8xf32>
    %36 = arith.mulf %31, %35 : vector<8x8xf32>
    %37 = arith.truncf %36 : vector<8x8xf32> to vector<8x8xbf16>
    %38 = vector.extract_strided_slice %21 {offsets = [0, 0], sizes = [8, 8], strides = [1, 1]} : vector<8x32xbf16> to vector<8x8xbf16>
    %cst_17 = arith.constant dense<0.000000e+00> : vector<8x8xf32>
    %39 = tpu.matmul %37, %38, %cst_17 {dimension_numbers = #tpu.dot_dimension_numbers<[1], [0], [0], [1], [0, 0, 1, 1], [], []>} : vector<8x8xbf16>, vector<8x8xbf16>, vector<8x8xf32> -> vector<8x8xf32>
    %40 = vector.extract_strided_slice %19 {offsets = [0, 8], sizes = [8, 8], strides = [1, 1]} : vector<8x32xbf16> to vector<8x8xbf16>
    %41 = vector.extract_strided_slice %20 {offsets = [0, 8], sizes = [8, 8], strides = [1, 1]} : vector<8x32xbf16> to vector<8x8xbf16>
    %cst_18 = arith.constant dense<0.000000e+00> : vector<8x8xf32>
    %42 = tpu.matmul %40, %41, %cst_18 {dimension_numbers = #tpu.dot_dimension_numbers<[1], [1], [0], [0], [0, 0, 1, 0], [], []>} : vector<8x8xbf16>, vector<8x8xbf16>, vector<8x8xf32> -> vector<8x8xf32>
    %43 = vector.broadcast %11 : vector<1x8xf32> to vector<8x8xf32>
    %44 = arith.addf %42, %43 : vector<8x8xf32>
    %cst_19 = arith.constant dense<0xFF800000> : vector<8xf32>
    %45 = vector.multi_reduction <maximumf>, %44, %cst_19 [1] : vector<8x8xf32> to vector<8xf32>
    %46 = vector.shape_cast %45 : vector<8xf32> to vector<8x1xf32>
    %47 = vector.broadcast %46 : vector<8x1xf32> to vector<8x8xf32>
    %48 = arith.subf %44, %47 : vector<8x8xf32>
    %49 = math.exp %48 : vector<8x8xf32>
    %cst_20 = arith.constant dense<0.000000e+00> : vector<8xf32>
    %50 = vector.multi_reduction <add>, %49, %cst_20 [1] : vector<8x8xf32> to vector<8xf32>
    %51 = vector.shape_cast %50 : vector<8xf32> to vector<8x1xf32>
    %52 = tpu.reciprocal %51 {approx = true} : vector<8x1xf32> -> vector<8x1xf32>
    %53 = vector.broadcast %52 : vector<8x1xf32> to vector<8x8xf32>
    %54 = arith.mulf %49, %53 : vector<8x8xf32>
    %55 = arith.truncf %54 : vector<8x8xf32> to vector<8x8xbf16>
    %56 = vector.extract_strided_slice %21 {offsets = [0, 8], sizes = [8, 8], strides = [1, 1]} : vector<8x32xbf16> to vector<8x8xbf16>
    %cst_21 = arith.constant dense<0.000000e+00> : vector<8x8xf32>
    %57 = tpu.matmul %55, %56, %cst_21 {dimension_numbers = #tpu.dot_dimension_numbers<[1], [0], [0], [1], [0, 0, 1, 1], [], []>} : vector<8x8xbf16>, vector<8x8xbf16>, vector<8x8xf32> -> vector<8x8xf32>
    %58 = vector.extract_strided_slice %19 {offsets = [0, 16], sizes = [8, 8], strides = [1, 1]} : vector<8x32xbf16> to vector<8x8xbf16>
    %59 = vector.extract_strided_slice %20 {offsets = [0, 16], sizes = [8, 8], strides = [1, 1]} : vector<8x32xbf16> to vector<8x8xbf16>
    %cst_22 = arith.constant dense<0.000000e+00> : vector<8x8xf32>
    %60 = tpu.matmul %58, %59, %cst_22 {dimension_numbers = #tpu.dot_dimension_numbers<[1], [1], [0], [0], [0, 0, 1, 0], [], []>} : vector<8x8xbf16>, vector<8x8xbf16>, vector<8x8xf32> -> vector<8x8xf32>
    %61 = vector.broadcast %11 : vector<1x8xf32> to vector<8x8xf32>
    %62 = arith.addf %60, %61 : vector<8x8xf32>
    %cst_23 = arith.constant dense<0xFF800000> : vector<8xf32>
    %63 = vector.multi_reduction <maximumf>, %62, %cst_23 [1] : vector<8x8xf32> to vector<8xf32>
    %64 = vector.shape_cast %63 : vector<8xf32> to vector<8x1xf32>
    %65 = vector.broadcast %64 : vector<8x1xf32> to vector<8x8xf32>
    %66 = arith.subf %62, %65 : vector<8x8xf32>
    %67 = math.exp %66 : vector<8x8xf32>
    %cst_24 = arith.constant dense<0.000000e+00> : vector<8xf32>
    %68 = vector.multi_reduction <add>, %67, %cst_24 [1] : vector<8x8xf32> to vector<8xf32>
    %69 = vector.shape_cast %68 : vector<8xf32> to vector<8x1xf32>
    %70 = tpu.reciprocal %69 {approx = true} : vector<8x1xf32> -> vector<8x1xf32>
    %71 = vector.broadcast %70 : vector<8x1xf32> to vector<8x8xf32>
    %72 = arith.mulf %67, %71 : vector<8x8xf32>
    %73 = arith.truncf %72 : vector<8x8xf32> to vector<8x8xbf16>
    %74 = vector.extract_strided_slice %21 {offsets = [0, 16], sizes = [8, 8], strides = [1, 1]} : vector<8x32xbf16> to vector<8x8xbf16>
    %cst_25 = arith.constant dense<0.000000e+00> : vector<8x8xf32>
    %75 = tpu.matmul %73, %74, %cst_25 {dimension_numbers = #tpu.dot_dimension_numbers<[1], [0], [0], [1], [0, 0, 1, 1], [], []>} : vector<8x8xbf16>, vector<8x8xbf16>, vector<8x8xf32> -> vector<8x8xf32>
    %76 = vector.extract_strided_slice %19 {offsets = [0, 24], sizes = [8, 8], strides = [1, 1]} : vector<8x32xbf16> to vector<8x8xbf16>
    %77 = vector.extract_strided_slice %20 {offsets = [0, 24], sizes = [8, 8], strides = [1, 1]} : vector<8x32xbf16> to vector<8x8xbf16>
    %cst_26 = arith.constant dense<0.000000e+00> : vector<8x8xf32>
    %78 = tpu.matmul %76, %77, %cst_26 {dimension_numbers = #tpu.dot_dimension_numbers<[1], [1], [0], [0], [0, 0, 1, 0], [], []>} : vector<8x8xbf16>, vector<8x8xbf16>, vector<8x8xf32> -> vector<8x8xf32>
    %79 = vector.broadcast %11 : vector<1x8xf32> to vector<8x8xf32>
    %80 = arith.addf %78, %79 : vector<8x8xf32>
    %cst_27 = arith.constant dense<0xFF800000> : vector<8xf32>
    %81 = vector.multi_reduction <maximumf>, %80, %cst_27 [1] : vector<8x8xf32> to vector<8xf32>
    %82 = vector.shape_cast %81 : vector<8xf32> to vector<8x1xf32>
    %83 = vector.broadcast %82 : vector<8x1xf32> to vector<8x8xf32>
    %84 = arith.subf %80, %83 : vector<8x8xf32>
    %85 = math.exp %84 : vector<8x8xf32>
    %cst_28 = arith.constant dense<0.000000e+00> : vector<8xf32>
    %86 = vector.multi_reduction <add>, %85, %cst_28 [1] : vector<8x8xf32> to vector<8xf32>
    %87 = vector.shape_cast %86 : vector<8xf32> to vector<8x1xf32>
    %88 = tpu.reciprocal %87 {approx = true} : vector<8x1xf32> -> vector<8x1xf32>
    %89 = vector.broadcast %88 : vector<8x1xf32> to vector<8x8xf32>
    %90 = arith.mulf %85, %89 : vector<8x8xf32>
    %91 = arith.truncf %90 : vector<8x8xf32> to vector<8x8xbf16>
    %92 = vector.extract_strided_slice %21 {offsets = [0, 24], sizes = [8, 8], strides = [1, 1]} : vector<8x32xbf16> to vector<8x8xbf16>
    %cst_29 = arith.constant dense<0.000000e+00> : vector<8x8xf32>
    %93 = tpu.matmul %91, %92, %cst_29 {dimension_numbers = #tpu.dot_dimension_numbers<[1], [0], [0], [1], [0, 0, 1, 1], [], []>} : vector<8x8xbf16>, vector<8x8xbf16>, vector<8x8xf32> -> vector<8x8xf32>
    %94 = tpu.concatenate %39, %57, %75, %93 in 1 : vector<8x8xf32>, vector<8x8xf32>, vector<8x8xf32>, vector<8x8xf32> -> vector<8x32xf32>
    %95 = arith.truncf %94 : vector<8x32xf32> to vector<8x32xbf16>
    %c0_30 = arith.constant 0 : index
    %c0_31 = arith.constant 0 : index
    %96 = vector.load %arg17[%c0_30, %c0_31] : memref<8x32xbf16, #tpu.memory_space<vmem>>, vector<8x32xbf16>
    tpu.vector_store %arg17[%c0_30, %c0_31], %95 {strides = array<i32>} : memref<8x32xbf16, #tpu.memory_space<vmem>>, vector<8x32xbf16>,
    %c0_32 = arith.constant 0 : index
    %c0_33 = arith.constant 0 : index
    %97 = vector.load %arg17[%c0_32, %c0_33] : memref<8x32xbf16, #tpu.memory_space<vmem>>, vector<8x32xbf16>
    %c0_34 = arith.constant 0 : index
    %c0_35 = arith.constant 0 : index
    %98 = vector.load %arg6[%c0_34, %c0_35] : memref<32x32xbf16, #tpu.memory_space<vmem>>, vector<32x32xbf16>
    %cst_36 = arith.constant dense<0.000000e+00> : vector<8x32xf32>
    %99 = tpu.matmul %97, %98, %cst_36 {dimension_numbers = #tpu.dot_dimension_numbers<[1], [0], [0], [1], [0, 0, 1, 1], [], []>} : vector<8x32xbf16>, vector<32x32xbf16>, vector<8x32xf32> -> vector<8x32xf32>
    %c0_37 = arith.constant 0 : index
    %c0_38 = arith.constant 0 : index
    %100 = vector.load %arg7[%c0_37, %c0_38] : memref<1x32xbf16, #tpu.memory_space<vmem>>, vector<1x32xbf16>
    %101 = arith.extf %100 : vector<1x32xbf16> to vector<1x32xf32>
    %102 = vector.broadcast %101 : vector<1x32xf32> to vector<8x32xf32>
    %103 = arith.addf %99, %102 : vector<8x32xf32>
    %104 = arith.extf %1 : vector<8x32xbf16> to vector<8x32xf32>
    %105 = arith.addf %104, %103 : vector<8x32xf32>
    %cst_39 = arith.constant dense<0.000000e+00> : vector<8xf32>
    %106 = vector.multi_reduction <add>, %105, %cst_39 [1] : vector<8x32xf32> to vector<8xf32>
    %107 = vector.shape_cast %106 : vector<8xf32> to vector<8x1xf32>
    %cst_40 = arith.constant 3.200000e+01 : f32
    %108 = vector.broadcast %cst_40 : f32 to vector<8x1xf32>
    %109 = arith.divf %107, %108 : vector<8x1xf32>
    %110 = vector.broadcast %109 : vector<8x1xf32> to vector<8x32xf32>
    %111 = arith.subf %105, %110 : vector<8x32xf32>
    %112 = arith.mulf %111, %111 : vector<8x32xf32>
    %cst_41 = arith.constant dense<0.000000e+00> : vector<8xf32>
    %113 = vector.multi_reduction <add>, %112, %cst_41 [1] : vector<8x32xf32> to vector<8xf32>
    %114 = vector.shape_cast %113 : vector<8xf32> to vector<8x1xf32>
    %cst_42 = arith.constant 3.200000e+01 : f32
    %115 = vector.broadcast %cst_42 : f32 to vector<8x1xf32>
    %116 = arith.divf %114, %115 : vector<8x1xf32>
    %117 = vector.broadcast %109 : vector<8x1xf32> to vector<8x32xf32>
    %118 = arith.subf %105, %117 : vector<8x32xf32>
    %cst_43 = arith.constant 9.99999996E-13 : f32
    %119 = vector.broadcast %cst_43 : f32 to vector<8x1xf32>
    %120 = arith.addf %116, %119 : vector<8x1xf32>
    %121 = math.rsqrt %120 : vector<8x1xf32>
    %122 = vector.broadcast %121 : vector<8x1xf32> to vector<8x32xf32>
    %123 = arith.mulf %118, %122 : vector<8x32xf32>
    %c0_44 = arith.constant 0 : index
    %c0_45 = arith.constant 0 : index
    %124 = vector.load %arg8[%c0_44, %c0_45] : memref<1x32xbf16, #tpu.memory_space<vmem>>, vector<1x32xbf16>
    %125 = arith.extf %124 : vector<1x32xbf16> to vector<1x32xf32>
    %126 = vector.broadcast %125 : vector<1x32xf32> to vector<8x32xf32>
    %127 = arith.mulf %123, %126 : vector<8x32xf32>
    %c0_46 = arith.constant 0 : index
    %c0_47 = arith.constant 0 : index
    %128 = vector.load %arg9[%c0_46, %c0_47] : memref<1x32xbf16, #tpu.memory_space<vmem>>, vector<1x32xbf16>
    %129 = arith.extf %128 : vector<1x32xbf16> to vector<1x32xf32>
    %130 = vector.broadcast %129 : vector<1x32xf32> to vector<8x32xf32>
    %131 = arith.addf %127, %130 : vector<8x32xf32>
    %132 = arith.truncf %131 : vector<8x32xf32> to vector<8x32xbf16>
    %cst_48 = arith.constant 0.000000e+00 : f32
    %133 = vector.broadcast %cst_48 : f32 to vector<8x32xf32>
    %c0_49 = arith.constant 0 : index
    %c0_50 = arith.constant 0 : index
    %134 = vector.load %arg10[%c0_49, %c0_50] : memref<32x128xbf16, #tpu.memory_space<vmem>>, vector<32x128xbf16>
    %cst_51 = arith.constant dense<0.000000e+00> : vector<8x128xf32>
    %135 = tpu.matmul %132, %134, %cst_51 {dimension_numbers = #tpu.dot_dimension_numbers<[1], [0], [0], [1], [0, 0, 1, 1], [], []>} : vector<8x32xbf16>, vector<32x128xbf16>, vector<8x128xf32> -> vector<8x128xf32>
    %c0_52 = arith.constant 0 : index
    %c0_53 = arith.constant 0 : index
    %136 = vector.load %arg11[%c0_52, %c0_53] : memref<1x128xbf16, #tpu.memory_space<vmem>>, vector<1x128xbf16>
    %137 = arith.extf %136 : vector<1x128xbf16> to vector<1x128xf32>
    %138 = vector.broadcast %137 : vector<1x128xf32> to vector<8x128xf32>
    %139 = arith.addf %135, %138 : vector<8x128xf32>
    %140 = arith.mulf %139, %139 : vector<8x128xf32>
    %141 = arith.mulf %139, %140 : vector<8x128xf32>
    %cst_54 = arith.constant 4.471500e-02 : f32
    %142 = vector.broadcast %cst_54 : f32 to vector<8x128xf32>
    %143 = arith.mulf %142, %141 : vector<8x128xf32>
    %144 = arith.addf %139, %143 : vector<8x128xf32>
    %cst_55 = arith.constant 0.797884583 : f32
    %145 = vector.broadcast %cst_55 : f32 to vector<8x128xf32>
    %146 = arith.mulf %145, %144 : vector<8x128xf32>
    %147 = math.tanh %146 : vector<8x128xf32>
    %cst_56 = arith.constant 1.000000e+00 : f32
    %148 = vector.broadcast %cst_56 : f32 to vector<8x128xf32>
    %149 = arith.addf %148, %147 : vector<8x128xf32>
    %cst_57 = arith.constant 5.000000e-01 : f32
    %150 = vector.broadcast %cst_57 : f32 to vector<8x128xf32>
    %151 = arith.mulf %150, %149 : vector<8x128xf32>
    %152 = arith.mulf %139, %151 : vector<8x128xf32>
    %153 = arith.truncf %152 : vector<8x128xf32> to vector<8x128xbf16>
    %c0_58 = arith.constant 0 : index
    %c0_59 = arith.constant 0 : index
    %154 = vector.load %arg12[%c0_58, %c0_59] : memref<128x32xbf16, #tpu.memory_space<vmem>>, vector<128x32xbf16>
    %cst_60 = arith.constant dense<0.000000e+00> : vector<8x32xf32>
    %155 = tpu.matmul %153, %154, %cst_60 {dimension_numbers = #tpu.dot_dimension_numbers<[1], [0], [0], [1], [0, 0, 1, 1], [], []>} : vector<8x128xbf16>, vector<128x32xbf16>, vector<8x32xf32> -> vector<8x32xf32>
    %156 = arith.addf %133, %155 : vector<8x32xf32>
    %c0_61 = arith.constant 0 : index
    %c0_62 = arith.constant 0 : index
    %157 = vector.load %arg13[%c0_61, %c0_62] : memref<1x32xbf16, #tpu.memory_space<vmem>>, vector<1x32xbf16>
    %158 = arith.extf %157 : vector<1x32xbf16> to vector<1x32xf32>
    %159 = vector.broadcast %158 : vector<1x32xf32> to vector<8x32xf32>
    %160 = arith.addf %156, %159 : vector<8x32xf32>
    %161 = arith.addf %131, %160 : vector<8x32xf32>
    %cst_63 = arith.constant dense<0.000000e+00> : vector<8xf32>
    %162 = vector.multi_reduction <add>, %161, %cst_63 [1] : vector<8x32xf32> to vector<8xf32>
    %163 = vector.shape_cast %162 : vector<8xf32> to vector<8x1xf32>
    %cst_64 = arith.constant 3.200000e+01 : f32
    %164 = vector.broadcast %cst_64 : f32 to vector<8x1xf32>
    %165 = arith.divf %163, %164 : vector<8x1xf32>
    %166 = vector.broadcast %165 : vector<8x1xf32> to vector<8x32xf32>
    %167 = arith.subf %161, %166 : vector<8x32xf32>
    %168 = arith.mulf %167, %167 : vector<8x32xf32>
    %cst_65 = arith.constant dense<0.000000e+00> : vector<8xf32>
    %169 = vector.multi_reduction <add>, %168, %cst_65 [1] : vector<8x32xf32> to vector<8xf32>
    %170 = vector.shape_cast %169 : vector<8xf32> to vector<8x1xf32>
    %cst_66 = arith.constant 3.200000e+01 : f32
    %171 = vector.broadcast %cst_66 : f32 to vector<8x1xf32>
    %172 = arith.divf %170, %171 : vector<8x1xf32>
    %173 = vector.broadcast %165 : vector<8x1xf32> to vector<8x32xf32>
    %174 = arith.subf %161, %173 : vector<8x32xf32>
    %cst_67 = arith.constant 9.99999996E-13 : f32
    %175 = vector.broadcast %cst_67 : f32 to vector<8x1xf32>
    %176 = arith.addf %172, %175 : vector<8x1xf32>
    %177 = math.rsqrt %176 : vector<8x1xf32>
    %178 = vector.broadcast %177 : vector<8x1xf32> to vector<8x32xf32>
    %179 = arith.mulf %174, %178 : vector<8x32xf32>
    %c0_68 = arith.constant 0 : index
    %c0_69 = arith.constant 0 : index
    %180 = vector.load %arg14[%c0_68, %c0_69] : memref<1x32xbf16, #tpu.memory_space<vmem>>, vector<1x32xbf16>
    %181 = arith.extf %180 : vector<1x32xbf16> to vector<1x32xf32>
    %182 = vector.broadcast %181 : vector<1x32xf32> to vector<8x32xf32>
    %183 = arith.mulf %179, %182 : vector<8x32xf32>
    %c0_70 = arith.constant 0 : index
    %c0_71 = arith.constant 0 : index
    %184 = vector.load %arg15[%c0_70, %c0_71] : memref<1x32xbf16, #tpu.memory_space<vmem>>, vector<1x32xbf16>
    %185 = arith.extf %184 : vector<1x32xbf16> to vector<1x32xf32>
    %186 = vector.broadcast %185 : vector<1x32xf32> to vector<8x32xf32>
    %187 = arith.addf %183, %186 : vector<8x32xf32>
    %188 = vector.broadcast %7 : vector<8x1xf32> to vector<8x32xf32>
    %189 = arith.mulf %187, %188 : vector<8x32xf32>
    %190 = arith.truncf %189 : vector<8x32xf32> to vector<8x32xbf16>
    %c0_72 = arith.constant 0 : index
    %c0_73 = arith.constant 0 : index
    %c0_74 = arith.constant 0 : index
    %191 = vector.load %arg16[%c0_72, %c0_73, %c0_74] : memref<1x8x32xbf16, #tpu.memory_space<vmem>>, vector<1x8x32xbf16>
    %192 = vector.shape_cast %191 : vector<1x8x32xbf16> to vector<8x32xbf16>
    %193 = vector.shape_cast %190 : vector<8x32xbf16> to vector<1x8x32xbf16>
    tpu.vector_store %arg16[%c0_72, %c0_73, %c0_74], %193 {strides = array<i32>} : memref<1x8x32xbf16, #tpu.memory_space<vmem>>, vector<1x8x32xbf16>,
    return
  }
  func.func @transform_0(%arg0: i32) -> (i32, i32, i32) {
    %c0_i32 = arith.constant 0 : i32
    %c0_i32_0 = arith.constant 0 : i32
    %c0_i32_1 = arith.constant 0 : i32
    return %arg0, %c0_i32, %c0_i32_0 : i32, i32, i32
  }
  func.func @transform_1(%arg0: i32) -> (i32, i32, i32) {
    %c0_i32 = arith.constant 0 : i32
    %c0_i32_0 = arith.constant 0 : i32
    %c0_i32_1 = arith.constant 0 : i32
    return %arg0, %c0_i32, %c0_i32_0 : i32, i32, i32
  }
  func.func @transform_2(%arg0: i32) -> (i32, i32, i32) {
    %c0_i32 = arith.constant 0 : i32
    %c0_i32_0 = arith.constant 0 : i32
    %c0_i32_1 = arith.constant 0 : i32
    return %arg0, %c0_i32, %c0_i32_0 : i32, i32, i32
  }
  func.func @transform_3(%arg0: i32) -> (i32, i32) {
    %c0_i32 = arith.constant 0 : i32
    %c0_i32_0 = arith.constant 0 : i32
    %c0_i32_1 = arith.constant 0 : i32
    return %c0_i32, %c0_i32_0 : i32, i32
  }
  func.func @transform_4(%arg0: i32) -> (i32, i32) {
    %c0_i32 = arith.constant 0 : i32
    %c0_i32_0 = arith.constant 0 : i32
    %c0_i32_1 = arith.constant 0 : i32
    return %c0_i32, %c0_i32_0 : i32, i32
  }
  func.func @transform_5(%arg0: i32) -> (i32, i32) {
    %c0_i32 = arith.constant 0 : i32
    %c0_i32_0 = arith.constant 0 : i32
    %c0_i32_1 = arith.constant 0 : i32
    return %c0_i32, %c0_i32_0 : i32, i32
  }
  func.func @transform_6(%arg0: i32) -> (i32, i32) {
    %c0_i32 = arith.constant 0 : i32
    %c0_i32_0 = arith.constant 0 : i32
    %c0_i32_1 = arith.constant 0 : i32
    return %c0_i32, %c0_i32_0 : i32, i32
  }
  func.func @transform_7(%arg0: i32) -> (i32, i32) {
    %c0_i32 = arith.constant 0 : i32
    %c0_i32_0 = arith.constant 0 : i32
    %c0_i32_1 = arith.constant 0 : i32
    return %c0_i32, %c0_i32_0 : i32, i32
  }
  func.func @transform_8(%arg0: i32) -> (i32, i32) {
    %c0_i32 = arith.constant 0 : i32
    %c0_i32_0 = arith.constant 0 : i32
    %c0_i32_1 = arith.constant 0 : i32
    return %c0_i32, %c0_i32_0 : i32, i32
  }
  func.func @transform_9(%arg0: i32) -> (i32, i32) {
    %c0_i32 = arith.constant 0 : i32
    %c0_i32_0 = arith.constant 0 : i32
    %c0_i32_1 = arith.constant 0 : i32
    return %c0_i32, %c0_i32_0 : i32, i32
  }
  func.func @transform_10(%arg0: i32) -> (i32, i32) {
    %c0_i32 = arith.constant 0 : i32
    %c0_i32_0 = arith.constant 0 : i32
    %c0_i32_1 = arith.constant 0 : i32
    return %c0_i32, %c0_i32_0 : i32, i32
  }
  func.func @transform_11(%arg0: i32) -> (i32, i32) {
    %c0_i32 = arith.constant 0 : i32
    %c0_i32_0 = arith.constant 0 : i32
    %c0_i32_1 = arith.constant 0 : i32
    return %c0_i32, %c0_i32_0 : i32, i32
  }
  func.func @transform_12(%arg0: i32) -> (i32, i32) {
    %c0_i32 = arith.constant 0 : i32
    %c0_i32_0 = arith.constant 0 : i32
    %c0_i32_1 = arith.constant 0 : i32
    return %c0_i32, %c0_i32_0 : i32, i32
  }
  func.func @transform_13(%arg0: i32) -> (i32, i32) {
    %c0_i32 = arith.constant 0 : i32
    %c0_i32_0 = arith.constant 0 : i32
    %c0_i32_1 = arith.constant 0 : i32
    return %c0_i32, %c0_i32_0 : i32, i32
  }
  func.func @transform_14(%arg0: i32) -> (i32, i32) {
    %c0_i32 = arith.constant 0 : i32
    %c0_i32_0 = arith.constant 0 : i32
    %c0_i32_1 = arith.constant 0 : i32
    return %c0_i32, %c0_i32_0 : i32, i32
  }
  func.func @transform_15(%arg0: i32) -> (i32, i32, i32) {
    %c0_i32 = arith.constant 0 : i32
    %c0_i32_0 = arith.constant 0 : i32
    %c0_i32_1 = arith.constant 0 : i32
    return %arg0, %c0_i32, %c0_i32_0 : i32, i32, i32
  }
}

module attributes {stable_mosaic.version = 11 : i64} {
  func.func @_encoder_layer_kernel(%arg0: i32, %arg1: memref<1x8x32xbf16, #tpu.memory_space<vmem>>, %arg2: memref<1x1x8xbf16, #tpu.memory_space<vmem>>, %arg3: memref<1x8x1xbf16, #tpu.memory_space<vmem>>, %arg4: memref<32x96xbf16, #tpu.memory_space<vmem>>, %arg5: memref<1x96xbf16, #tpu.memory_space<vmem>>, %arg6: memref<32x32xbf16, #tpu.memory_space<vmem>>, %arg7: memref<1x32xbf16, #tpu.memory_space<vmem>>, %arg8: memref<1x32xbf16, #tpu.memory_space<vmem>>, %arg9: memref<1x32xbf16, #tpu.memory_space<vmem>>, %arg10: memref<32x128xbf16, #tpu.memory_space<vmem>>, %arg11: memref<1x128xbf16, #tpu.memory_space<vmem>>, %arg12: memref<128x32xbf16, #tpu.memory_space<vmem>>, %arg13: memref<1x32xbf16, #tpu.memory_space<vmem>>, %arg14: memref<1x32xbf16, #tpu.memory_space<vmem>>, %arg15: memref<1x32xbf16, #tpu.memory_space<vmem>>, %arg16: memref<1x8x32xbf16, #tpu.memory_space<vmem>>, %arg17: memref<8x32xbf16, #tpu.memory_space<vmem>>) attributes {dimension_semantics = [#tpu.dimension_semantics<parallel>], iteration_bounds = array<i64: 2>, scalar_prefetch = 0 : i64, scratch_operands = 1 : i64, tpu.core_type = #tpu.core_type<tc>, window_params = [{transform_indices = @transform_0, window_bounds = array<i64: 1, 8, 32>}, {transform_indices = @transform_1, window_bounds = array<i64: 1, 1, 8>}, {transform_indices = @transform_2, window_bounds = array<i64: 1, 8, 1>}, {pipeline_mode = #tpu.pipeline_mode<synchronous>, transform_indices = @transform_3, window_bounds = array<i64: 32, 96>}, {pipeline_mode = #tpu.pipeline_mode<synchronous>, transform_indices = @transform_4, window_bounds = array<i64: 1, 96>}, {pipeline_mode = #tpu.pipeline_mode<synchronous>, transform_indices = @transform_5, window_bounds = array<i64: 32, 32>}, {pipeline_mode = #tpu.pipeline_mode<synchronous>, transform_indices = @transform_6, window_bounds = array<i64: 1, 32>}, {pipeline_mode = #tpu.pipeline_mode<synchronous>, transform_indices = @transform_7, window_bounds = array<i64: 1, 32>}, {pipeline_mode = #tpu.pipeline_mode<synchronous>, transform_indices = @transform_8, window_bounds = array<i64: 1, 32>}, {pipeline_mode = #tpu.pipeline_mode<synchronous>, transform_indices = @transform_9, window_bounds = array<i64: 32, 128>}, {pipeline_mode = #tpu.pipeline_mode<synchronous>, transform_indices = @transform_10, window_bounds = array<i64: 1, 128>}, {pipeline_mode = #tpu.pipeline_mode<synchronous>, transform_indices = @transform_11, window_bounds = array<i64: 128, 32>}, {pipeline_mode = #tpu.pipeline_mode<synchronous>, transform_indices = @transform_12, window_bounds = array<i64: 1, 32>}, {pipeline_mode = #tpu.pipeline_mode<synchronous>, transform_indices = @transform_13, window_bounds = array<i64: 1, 32>}, {pipeline_mode = #tpu.pipeline_mode<synchronous>, transform_indices = @transform_14, window_bounds = array<i64: 1, 32>}, {transform_indices = @transform_15, window_bounds = array<i64: 1, 8, 32>}]} {
    %c0 = arith.constant 0 : index
    %c0_0 = arith.constant 0 : index
    %c0_1 = arith.constant 0 : index
    %0 = vector.load %arg1[%c0, %c0_0, %c0_1] : memref<1x8x32xbf16, #tpu.memory_space<vmem>>, vector<1x8x32xbf16>
    %1 = vector.shape_cast %0 : vector<1x8x32xbf16> to vector<8x32xbf16>
    %c0_2 = arith.constant 0 : index
    %c0_3 = arith.constant 0 : index
    %c0_4 = arith.constant 0 : index
    %2 = vector.load %arg2[%c0_2, %c0_3, %c0_4] : memref<1x1x8xbf16, #tpu.memory_space<vmem>>, vector<1x1x8xbf16>
    %3 = vector.shape_cast %2 : vector<1x1x8xbf16> to vector<1x8xbf16>
    %4 = arith.extf %3 : vector<1x8xbf16> to vector<1x8xf32>
    %c0_5 = arith.constant 0 : index
    %c0_6 = arith.constant 0 : index
    %c0_7 = arith.constant 0 : index
    %5 = vector.load %arg3[%c0_5, %c0_6, %c0_7] : memref<1x8x1xbf16, #tpu.memory_space<vmem>>, vector<1x8x1xbf16>
    %6 = vector.shape_cast %5 : vector<1x8x1xbf16> to vector<8x1xbf16>
    %7 = arith.extf %6 : vector<8x1xbf16> to vector<8x1xf32>
    %cst = arith.constant 1.000000e+00 : f32
    %8 = vector.broadcast %cst : f32 to vector<1x8xf32>
    %9 = arith.subf %8, %4 : vector<1x8xf32>
    %cst_8 = arith.constant -1.000000e+09 : f32
    %10 = vector.broadcast %cst_8 : f32 to vector<1x8xf32>
    %11 = arith.mulf %9, %10 : vector<1x8xf32>
    %c0_9 = arith.constant 0 : index
    %c0_10 = arith.constant 0 : index
    %12 = vector.load %arg4[%c0_9, %c0_10] : memref<32x96xbf16, #tpu.memory_space<vmem>>, vector<32x96xbf16>
    %cst_11 = arith.constant dense<0.000000e+00> : vector<8x96xf32>
    %13 = tpu.matmul %1, %12, %cst_11 {dimension_numbers = #tpu.dot_dimension_numbers<[1], [0], [0], [1], [0, 0, 1, 1], [], []>} : vector<8x32xbf16>, vector<32x96xbf16>, vector<8x96xf32> -> vector<8x96xf32>
    %c0_12 = arith.constant 0 : index
    %c0_13 = arith.constant 0 : index
    %14 = vector.load %arg5[%c0_12, %c0_13] : memref<1x96xbf16, #tpu.memory_space<vmem>>, vector<1x96xbf16>
    %15 = arith.extf %14 : vector<1x96xbf16> to vector<1x96xf32>
    %16 = vector.broadcast %15 : vector<1x96xf32> to vector<8x96xf32>
    %17 = arith.addf %13, %16 : vector<8x96xf32>
    %18 = arith.truncf %17 : vector<8x96xf32> to vector<8x96xbf16>
    %19 = vector.extract_strided_slice %18 {offsets = [0, 0], sizes = [8, 32], strides = [1, 1]} : vector<8x96xbf16> to vector<8x32xbf16>
    %20 = vector.extract_strided_slice %18 {offsets = [0, 32], sizes = [8, 32], strides = [1, 1]} : vector<8x96xbf16> to vector<8x32xbf16>
    %21 = vector.extract_strided_slice %18 {offsets = [0, 64], sizes = [8, 32], strides = [1, 1]} : vector<8x96xbf16> to vector<8x32xbf16>
    %22 = vector.extract_strided_slice %19 {offsets = [0, 0], sizes = [8, 8], strides = [1, 1]} : vector<8x32xbf16> to vector<8x8xbf16>
    %23 = vector.extract_strided_slice %20 {offsets = [0, 0], sizes = [8, 8], strides = [1, 1]} : vector<8x32xbf16> to vector<8x8xbf16>
    %cst_14 = arith.constant dense<0.000000e+00> : vector<8x8xf32>
    %24 = tpu.matmul %22, %23, %cst_14 {dimension_numbers = #tpu.dot_dimension_numbers<[1], [1], [0], [0], [0, 0, 1, 0], [], []>} : vector<8x8xbf16>, vector<8x8xbf16>, vector<8x8xf32> -> vector<8x8xf32>
    %25 = vector.broadcast %11 : vector<1x8xf32> to vector<8x8xf32>
    %26 = arith.addf %24, %25 : vector<8x8xf32>
    %cst_15 = arith.constant dense<0xFF800000> : vector<8xf32>
    %27 = vector.multi_reduction <maximumf>, %26, %cst_15 [1] : vector<8x8xf32> to vector<8xf32>
    %28 = vector.shape_cast %27 : vector<8xf32> to vector<8x1xf32>
    %29 = vector.broadcast %28 : vector<8x1xf32> to vector<8x8xf32>
    %30 = arith.subf %26, %29 : vector<8x8xf32>
    %31 = math.exp %30 : vector<8x8xf32>
    %cst_16 = arith.constant dense<0.000000e+00> : vector<8xf32>
    %32 = vector.multi_reduction <add>, %31, %cst_16 [1] : vector<8x8xf32> to vector<8xf32>
    %33 = vector.shape_cast %32 : vector<8xf32> to vector<8x1xf32>
    %34 = tpu.reciprocal %33 {approx = true} : vector<8x1xf32> -> vector<8x1xf32>
    %35 = vector.broadcast %34 : vector<8x1xf32> to vector<8x8xf32>
    %36 = arith.mulf %31, %35 : vector<8x8xf32>
    %37 = arith.truncf %36 : vector<8x8xf32> to vector<8x8xbf16>
    %38 = vector.extract_strided_slice %21 {offsets = [0, 0], sizes = [8, 8], strides = [1, 1]} : vector<8x32xbf16> to vector<8x8xbf16>
    %cst_17 = arith.constant dense<0.000000e+00> : vector<8x8xf32>
    %39 = tpu.matmul %37, %38, %cst_17 {dimension_numbers = #tpu.dot_dimension_numbers<[1], [0], [0], [1], [0, 0, 1, 1], [], []>} : vector<8x8xbf16>, vector<8x8xbf16>, vector<8x8xf32> -> vector<8x8xf32>
    %40 = vector.extract_strided_slice %19 {offsets = [0, 8], sizes = [8, 8], strides = [1, 1]} : vector<8x32xbf16> to vector<8x8xbf16>
    %41 = vector.extract_strided_slice %20 {offsets = [0, 8], sizes = [8, 8], strides = [1, 1]} : vector<8x32xbf16> to vector<8x8xbf16>
    %cst_18 = arith.constant dense<0.000000e+00> : vector<8x8xf32>
    %42 = tpu.matmul %40, %41, %cst_18 {dimension_numbers = #tpu.dot_dimension_numbers<[1], [1], [0], [0], [0, 0, 1, 0], [], []>} : vector<8x8xbf16>, vector<8x8xbf16>, vector<8x8xf32> -> vector<8x8xf32>
    %43 = vector.broadcast %11 : vector<1x8xf32> to vector<8x8xf32>
    %44 = arith.addf %42, %43 : vector<8x8xf32>
    %cst_19 = arith.constant dense<0xFF800000> : vector<8xf32>
    %45 = vector.multi_reduction <maximumf>, %44, %cst_19 [1] : vector<8x8xf32> to vector<8xf32>
    %46 = vector.shape_cast %45 : vector<8xf32> to vector<8x1xf32>
    %47 = vector.broadcast %46 : vector<8x1xf32> to vector<8x8xf32>
    %48 = arith.subf %44, %47 : vector<8x8xf32>
    %49 = math.exp %48 : vector<8x8xf32>
    %cst_20 = arith.constant dense<0.000000e+00> : vector<8xf32>
    %50 = vector.multi_reduction <add>, %49, %cst_20 [1] : vector<8x8xf32> to vector<8xf32>
    %51 = vector.shape_cast %50 : vector<8xf32> to vector<8x1xf32>
    %52 = tpu.reciprocal %51 {approx = true} : vector<8x1xf32> -> vector<8x1xf32>
    %53 = vector.broadcast %52 : vector<8x1xf32> to vector<8x8xf32>
    %54 = arith.mulf %49, %53 : vector<8x8xf32>
    %55 = arith.truncf %54 : vector<8x8xf32> to vector<8x8xbf16>
    %56 = vector.extract_strided_slice %21 {offsets = [0, 8], sizes = [8, 8], strides = [1, 1]} : vector<8x32xbf16> to vector<8x8xbf16>
    %cst_21 = arith.constant dense<0.000000e+00> : vector<8x8xf32>
    %57 = tpu.matmul %55, %56, %cst_21 {dimension_numbers = #tpu.dot_dimension_numbers<[1], [0], [0], [1], [0, 0, 1, 1], [], []>} : vector<8x8xbf16>, vector<8x8xbf16>, vector<8x8xf32> -> vector<8x8xf32>
    %58 = vector.extract_strided_slice %19 {offsets = [0, 16], sizes = [8, 8], strides = [1, 1]} : vector<8x32xbf16> to vector<8x8xbf16>
    %59 = vector.extract_strided_slice %20 {offsets = [0, 16], sizes = [8, 8], strides = [1, 1]} : vector<8x32xbf16> to vector<8x8xbf16>
    %cst_22 = arith.constant dense<0.000000e+00> : vector<8x8xf32>
    %60 = tpu.matmul %58, %59, %cst_22 {dimension_numbers = #tpu.dot_dimension_numbers<[1], [1], [0], [0], [0, 0, 1, 0], [], []>} : vector<8x8xbf16>, vector<8x8xbf16>, vector<8x8xf32> -> vector<8x8xf32>
    %61 = vector.broadcast %11 : vector<1x8xf32> to vector<8x8xf32>
    %62 = arith.addf %60, %61 : vector<8x8xf32>
    %cst_23 = arith.constant dense<0xFF800000> : vector<8xf32>
    %63 = vector.multi_reduction <maximumf>, %62, %cst_23 [1] : vector<8x8xf32> to vector<8xf32>
    %64 = vector.shape_cast %63 : vector<8xf32> to vector<8x1xf32>
    %65 = vector.broadcast %64 : vector<8x1xf32> to vector<8x8xf32>
    %66 = arith.subf %62, %65 : vector<8x8xf32>
    %67 = math.exp %66 : vector<8x8xf32>
    %cst_24 = arith.constant dense<0.000000e+00> : vector<8xf32>
    %68 = vector.multi_reduction <add>, %67, %cst_24 [1] : vector<8x8xf32> to vector<8xf32>
    %69 = vector.shape_cast %68 : vector<8xf32> to vector<8x1xf32>
    %70 = tpu.reciprocal %69 {approx = true} : vector<8x1xf32> -> vector<8x1xf32>
    %71 = vector.broadcast %70 : vector<8x1xf32> to vector<8x8xf32>
    %72 = arith.mulf %67, %71 : vector<8x8xf32>
    %73 = arith.truncf %72 : vector<8x8xf32> to vector<8x8xbf16>
    %74 = vector.extract_strided_slice %21 {offsets = [0, 16], sizes = [8, 8], strides = [1, 1]} : vector<8x32xbf16> to vector<8x8xbf16>
    %cst_25 = arith.constant dense<0.000000e+00> : vector<8x8xf32>
    %75 = tpu.matmul %73, %74, %cst_25 {dimension_numbers = #tpu.dot_dimension_numbers<[1], [0], [0], [1], [0, 0, 1, 1], [], []>} : vector<8x8xbf16>, vector<8x8xbf16>, vector<8x8xf32> -> vector<8x8xf32>
    %76 = vector.extract_strided_slice %19 {offsets = [0, 24], sizes = [8, 8], strides = [1, 1]} : vector<8x32xbf16> to vector<8x8xbf16>
    %77 = vector.extract_strided_slice %20 {offsets = [0, 24], sizes = [8, 8], strides = [1, 1]} : vector<8x32xbf16> to vector<8x8xbf16>
    %cst_26 = arith.constant dense<0.000000e+00> : vector<8x8xf32>
    %78 = tpu.matmul %76, %77, %cst_26 {dimension_numbers = #tpu.dot_dimension_numbers<[1], [1], [0], [0], [0, 0, 1, 0], [], []>} : vector<8x8xbf16>, vector<8x8xbf16>, vector<8x8xf32> -> vector<8x8xf32>
    %79 = vector.broadcast %11 : vector<1x8xf32> to vector<8x8xf32>
    %80 = arith.addf %78, %79 : vector<8x8xf32>
    %cst_27 = arith.constant dense<0xFF800000> : vector<8xf32>
    %81 = vector.multi_reduction <maximumf>, %80, %cst_27 [1] : vector<8x8xf32> to vector<8xf32>
    %82 = vector.shape_cast %81 : vector<8xf32> to vector<8x1xf32>
    %83 = vector.broadcast %82 : vector<8x1xf32> to vector<8x8xf32>
    %84 = arith.subf %80, %83 : vector<8x8xf32>
    %85 = math.exp %84 : vector<8x8xf32>
    %cst_28 = arith.constant dense<0.000000e+00> : vector<8xf32>
    %86 = vector.multi_reduction <add>, %85, %cst_28 [1] : vector<8x8xf32> to vector<8xf32>
    %87 = vector.shape_cast %86 : vector<8xf32> to vector<8x1xf32>
    %88 = tpu.reciprocal %87 {approx = true} : vector<8x1xf32> -> vector<8x1xf32>
    %89 = vector.broadcast %88 : vector<8x1xf32> to vector<8x8xf32>
    %90 = arith.mulf %85, %89 : vector<8x8xf32>
    %91 = arith.truncf %90 : vector<8x8xf32> to vector<8x8xbf16>
    %92 = vector.extract_strided_slice %21 {offsets = [0, 24], sizes = [8, 8], strides = [1, 1]} : vector<8x32xbf16> to vector<8x8xbf16>
    %cst_29 = arith.constant dense<0.000000e+00> : vector<8x8xf32>
    %93 = tpu.matmul %91, %92, %cst_29 {dimension_numbers = #tpu.dot_dimension_numbers<[1], [0], [0], [1], [0, 0, 1, 1], [], []>} : vector<8x8xbf16>, vector<8x8xbf16>, vector<8x8xf32> -> vector<8x8xf32>
    %94 = tpu.concatenate %39, %57, %75, %93 in 1 : vector<8x8xf32>, vector<8x8xf32>, vector<8x8xf32>, vector<8x8xf32> -> vector<8x32xf32>
    %95 = arith.truncf %94 : vector<8x32xf32> to vector<8x32xbf16>
    %c0_30 = arith.constant 0 : index
    %c0_31 = arith.constant 0 : index
    %96 = vector.load %arg17[%c0_30, %c0_31] : memref<8x32xbf16, #tpu.memory_space<vmem>>, vector<8x32xbf16>
    tpu.vector_store %arg17[%c0_30, %c0_31], %95 {strides = array<i32>} : memref<8x32xbf16, #tpu.memory_space<vmem>>, vector<8x32xbf16>,
    %c0_32 = arith.constant 0 : index
    %c0_33 = arith.constant 0 : index
    %97 = vector.load %arg17[%c0_32, %c0_33] : memref<8x32xbf16, #tpu.memory_space<vmem>>, vector<8x32xbf16>
    %c0_34 = arith.constant 0 : index
    %c0_35 = arith.constant 0 : index
    %98 = vector.load %arg6[%c0_34, %c0_35] : memref<32x32xbf16, #tpu.memory_space<vmem>>, vector<32x32xbf16>
    %cst_36 = arith.constant dense<0.000000e+00> : vector<8x32xf32>
    %99 = tpu.matmul %97, %98, %cst_36 {dimension_numbers = #tpu.dot_dimension_numbers<[1], [0], [0], [1], [0, 0, 1, 1], [], []>} : vector<8x32xbf16>, vector<32x32xbf16>, vector<8x32xf32> -> vector<8x32xf32>
    %c0_37 = arith.constant 0 : index
    %c0_38 = arith.constant 0 : index
    %100 = vector.load %arg7[%c0_37, %c0_38] : memref<1x32xbf16, #tpu.memory_space<vmem>>, vector<1x32xbf16>
    %101 = arith.extf %100 : vector<1x32xbf16> to vector<1x32xf32>
    %102 = vector.broadcast %101 : vector<1x32xf32> to vector<8x32xf32>
    %103 = arith.addf %99, %102 : vector<8x32xf32>
    %104 = arith.extf %1 : vector<8x32xbf16> to vector<8x32xf32>
    %105 = arith.addf %104, %103 : vector<8x32xf32>
    %cst_39 = arith.constant dense<0.000000e+00> : vector<8xf32>
    %106 = vector.multi_reduction <add>, %105, %cst_39 [1] : vector<8x32xf32> to vector<8xf32>
    %107 = vector.shape_cast %106 : vector<8xf32> to vector<8x1xf32>
    %cst_40 = arith.constant 3.200000e+01 : f32
    %108 = vector.broadcast %cst_40 : f32 to vector<8x1xf32>
    %109 = arith.divf %107, %108 : vector<8x1xf32>
    %110 = vector.broadcast %109 : vector<8x1xf32> to vector<8x32xf32>
    %111 = arith.subf %105, %110 : vector<8x32xf32>
    %112 = arith.mulf %111, %111 : vector<8x32xf32>
    %cst_41 = arith.constant dense<0.000000e+00> : vector<8xf32>
    %113 = vector.multi_reduction <add>, %112, %cst_41 [1] : vector<8x32xf32> to vector<8xf32>
    %114 = vector.shape_cast %113 : vector<8xf32> to vector<8x1xf32>
    %cst_42 = arith.constant 3.200000e+01 : f32
    %115 = vector.broadcast %cst_42 : f32 to vector<8x1xf32>
    %116 = arith.divf %114, %115 : vector<8x1xf32>
    %117 = vector.broadcast %109 : vector<8x1xf32> to vector<8x32xf32>
    %118 = arith.subf %105, %117 : vector<8x32xf32>
    %cst_43 = arith.constant 9.99999996E-13 : f32
    %119 = vector.broadcast %cst_43 : f32 to vector<8x1xf32>
    %120 = arith.addf %116, %119 : vector<8x1xf32>
    %121 = math.rsqrt %120 : vector<8x1xf32>
    %122 = vector.broadcast %121 : vector<8x1xf32> to vector<8x32xf32>
    %123 = arith.mulf %118, %122 : vector<8x32xf32>
    %c0_44 = arith.constant 0 : index
    %c0_45 = arith.constant 0 : index
    %124 = vector.load %arg8[%c0_44, %c0_45] : memref<1x32xbf16, #tpu.memory_space<vmem>>, vector<1x32xbf16>
    %125 = arith.extf %124 : vector<1x32xbf16> to vector<1x32xf32>
    %126 = vector.broadcast %125 : vector<1x32xf32> to vector<8x32xf32>
    %127 = arith.mulf %123, %126 : vector<8x32xf32>
    %c0_46 = arith.constant 0 : index
    %c0_47 = arith.constant 0 : index
    %128 = vector.load %arg9[%c0_46, %c0_47] : memref<1x32xbf16, #tpu.memory_space<vmem>>, vector<1x32xbf16>
    %129 = arith.extf %128 : vector<1x32xbf16> to vector<1x32xf32>
    %130 = vector.broadcast %129 : vector<1x32xf32> to vector<8x32xf32>
    %131 = arith.addf %127, %130 : vector<8x32xf32>
    %132 = arith.truncf %131 : vector<8x32xf32> to vector<8x32xbf16>
    %cst_48 = arith.constant 0.000000e+00 : f32
    %133 = vector.broadcast %cst_48 : f32 to vector<8x32xf32>
    %c0_49 = arith.constant 0 : index
    %c0_50 = arith.constant 0 : index
    %134 = vector.load %arg10[%c0_49, %c0_50] : memref<32x128xbf16, #tpu.memory_space<vmem>>, vector<32x128xbf16>
    %cst_51 = arith.constant dense<0.000000e+00> : vector<8x128xf32>
    %135 = tpu.matmul %132, %134, %cst_51 {dimension_numbers = #tpu.dot_dimension_numbers<[1], [0], [0], [1], [0, 0, 1, 1], [], []>} : vector<8x32xbf16>, vector<32x128xbf16>, vector<8x128xf32> -> vector<8x128xf32>
    %c0_52 = arith.constant 0 : index
    %c0_53 = arith.constant 0 : index
    %136 = vector.load %arg11[%c0_52, %c0_53] : memref<1x128xbf16, #tpu.memory_space<vmem>>, vector<1x128xbf16>
    %137 = arith.extf %136 : vector<1x128xbf16> to vector<1x128xf32>
    %138 = vector.broadcast %137 : vector<1x128xf32> to vector<8x128xf32>
    %139 = arith.addf %135, %138 : vector<8x128xf32>
    %140 = arith.mulf %139, %139 : vector<8x128xf32>
    %141 = arith.mulf %139, %140 : vector<8x128xf32>
    %cst_54 = arith.constant 4.471500e-02 : f32
    %142 = vector.broadcast %cst_54 : f32 to vector<8x128xf32>
    %143 = arith.mulf %142, %141 : vector<8x128xf32>
    %144 = arith.addf %139, %143 : vector<8x128xf32>
    %cst_55 = arith.constant 0.797884583 : f32
    %145 = vector.broadcast %cst_55 : f32 to vector<8x128xf32>
    %146 = arith.mulf %145, %144 : vector<8x128xf32>
    %147 = math.tanh %146 : vector<8x128xf32>
    %cst_56 = arith.constant 1.000000e+00 : f32
    %148 = vector.broadcast %cst_56 : f32 to vector<8x128xf32>
    %149 = arith.addf %148, %147 : vector<8x128xf32>
    %cst_57 = arith.constant 5.000000e-01 : f32
    %150 = vector.broadcast %cst_57 : f32 to vector<8x128xf32>
    %151 = arith.mulf %150, %149 : vector<8x128xf32>
    %152 = arith.mulf %139, %151 : vector<8x128xf32>
    %153 = arith.truncf %152 : vector<8x128xf32> to vector<8x128xbf16>
    %c0_58 = arith.constant 0 : index
    %c0_59 = arith.constant 0 : index
    %154 = vector.load %arg12[%c0_58, %c0_59] : memref<128x32xbf16, #tpu.memory_space<vmem>>, vector<128x32xbf16>
    %cst_60 = arith.constant dense<0.000000e+00> : vector<8x32xf32>
    %155 = tpu.matmul %153, %154, %cst_60 {dimension_numbers = #tpu.dot_dimension_numbers<[1], [0], [0], [1], [0, 0, 1, 1], [], []>} : vector<8x128xbf16>, vector<128x32xbf16>, vector<8x32xf32> -> vector<8x32xf32>
    %156 = arith.addf %133, %155 : vector<8x32xf32>
    %c0_61 = arith.constant 0 : index
    %c0_62 = arith.constant 0 : index
    %157 = vector.load %arg13[%c0_61, %c0_62] : memref<1x32xbf16, #tpu.memory_space<vmem>>, vector<1x32xbf16>
    %158 = arith.extf %157 : vector<1x32xbf16> to vector<1x32xf32>
    %159 = vector.broadcast %158 : vector<1x32xf32> to vector<8x32xf32>
    %160 = arith.addf %156, %159 : vector<8x32xf32>
    %161 = arith.addf %131, %160 : vector<8x32xf32>
    %cst_63 = arith.constant dense<0.000000e+00> : vector<8xf32>
    %162 = vector.multi_reduction <add>, %161, %cst_63 [1] : vector<8x32xf32> to vector<8xf32>
    %163 = vector.shape_cast %162 : vector<8xf32> to vector<8x1xf32>
    %cst_64 = arith.constant 3.200000e+01 : f32
    %164 = vector.broadcast %cst_64 : f32 to vector<8x1xf32>
    %165 = arith.divf %163, %164 : vector<8x1xf32>
    %166 = vector.broadcast %165 : vector<8x1xf32> to vector<8x32xf32>
    %167 = arith.subf %161, %166 : vector<8x32xf32>
    %168 = arith.mulf %167, %167 : vector<8x32xf32>
    %cst_65 = arith.constant dense<0.000000e+00> : vector<8xf32>
    %169 = vector.multi_reduction <add>, %168, %cst_65 [1] : vector<8x32xf32> to vector<8xf32>
    %170 = vector.shape_cast %169 : vector<8xf32> to vector<8x1xf32>
    %cst_66 = arith.constant 3.200000e+01 : f32
    %171 = vector.broadcast %cst_66 : f32 to vector<8x1xf32>
    %172 = arith.divf %170, %171 : vector<8x1xf32>
    %173 = vector.broadcast %165 : vector<8x1xf32> to vector<8x32xf32>
    %174 = arith.subf %161, %173 : vector<8x32xf32>
    %cst_67 = arith.constant 9.99999996E-13 : f32
    %175 = vector.broadcast %cst_67 : f32 to vector<8x1xf32>
    %176 = arith.addf %172, %175 : vector<8x1xf32>
    %177 = math.rsqrt %176 : vector<8x1xf32>
    %178 = vector.broadcast %177 : vector<8x1xf32> to vector<8x32xf32>
    %179 = arith.mulf %174, %178 : vector<8x32xf32>
    %c0_68 = arith.constant 0 : index
    %c0_69 = arith.constant 0 : index
    %180 = vector.load %arg14[%c0_68, %c0_69] : memref<1x32xbf16, #tpu.memory_space<vmem>>, vector<1x32xbf16>
    %181 = arith.extf %180 : vector<1x32xbf16> to vector<1x32xf32>
    %182 = vector.broadcast %181 : vector<1x32xf32> to vector<8x32xf32>
    %183 = arith.mulf %179, %182 : vector<8x32xf32>
    %c0_70 = arith.constant 0 : index
    %c0_71 = arith.constant 0 : index
    %184 = vector.load %arg15[%c0_70, %c0_71] : memref<1x32xbf16, #tpu.memory_space<vmem>>, vector<1x32xbf16>
    %185 = arith.extf %184 : vector<1x32xbf16> to vector<1x32xf32>
    %186 = vector.broadcast %185 : vector<1x32xf32> to vector<8x32xf32>
    %187 = arith.addf %183, %186 : vector<8x32xf32>
    %188 = vector.broadcast %7 : vector<8x1xf32> to vector<8x32xf32>
    %189 = arith.mulf %187, %188 : vector<8x32xf32>
    %190 = arith.truncf %189 : vector<8x32xf32> to vector<8x32xbf16>
    %c0_72 = arith.constant 0 : index
    %c0_73 = arith.constant 0 : index
    %c0_74 = arith.constant 0 : index
    %191 = vector.load %arg16[%c0_72, %c0_73, %c0_74] : memref<1x8x32xbf16, #tpu.memory_space<vmem>>, vector<1x8x32xbf16>
    %192 = vector.shape_cast %191 : vector<1x8x32xbf16> to vector<8x32xbf16>
    %193 = vector.shape_cast %190 : vector<8x32xbf16> to vector<1x8x32xbf16>
    tpu.vector_store %arg16[%c0_72, %c0_73, %c0_74], %193 {strides = array<i32>} : memref<1x8x32xbf16, #tpu.memory_space<vmem>>, vector<1x8x32xbf16>,
    return
  }
  func.func @transform_0(%arg0: i32) -> (i32, i32, i32) {
    %c0_i32 = arith.constant 0 : i32
    %c0_i32_0 = arith.constant 0 : i32
    %c0_i32_1 = arith.constant 0 : i32
    return %arg0, %c0_i32, %c0_i32_0 : i32, i32, i32
  }
  func.func @transform_1(%arg0: i32) -> (i32, i32, i32) {
    %c0_i32 = arith.constant 0 : i32
    %c0_i32_0 = arith.constant 0 : i32
    %c0_i32_1 = arith.constant 0 : i32
    return %arg0, %c0_i32, %c0_i32_0 : i32, i32, i32
  }
  func.func @transform_2(%arg0: i32) -> (i32, i32, i32) {
    %c0_i32 = arith.constant 0 : i32
    %c0_i32_0 = arith.constant 0 : i32
    %c0_i32_1 = arith.constant 0 : i32
    return %arg0, %c0_i32, %c0_i32_0 : i32, i32, i32
  }
  func.func @transform_3(%arg0: i32) -> (i32, i32) {
    %c0_i32 = arith.constant 0 : i32
    %c0_i32_0 = arith.constant 0 : i32
    %c0_i32_1 = arith.constant 0 : i32
    return %c0_i32, %c0_i32_0 : i32, i32
  }
  func.func @transform_4(%arg0: i32) -> (i32, i32) {
    %c0_i32 = arith.constant 0 : i32
    %c0_i32_0 = arith.constant 0 : i32
    %c0_i32_1 = arith.constant 0 : i32
    return %c0_i32, %c0_i32_0 : i32, i32
  }
  func.func @transform_5(%arg0: i32) -> (i32, i32) {
    %c0_i32 = arith.constant 0 : i32
    %c0_i32_0 = arith.constant 0 : i32
    %c0_i32_1 = arith.constant 0 : i32
    return %c0_i32, %c0_i32_0 : i32, i32
  }
  func.func @transform_6(%arg0: i32) -> (i32, i32) {
    %c0_i32 = arith.constant 0 : i32
    %c0_i32_0 = arith.constant 0 : i32
    %c0_i32_1 = arith.constant 0 : i32
    return %c0_i32, %c0_i32_0 : i32, i32
  }
  func.func @transform_7(%arg0: i32) -> (i32, i32) {
    %c0_i32 = arith.constant 0 : i32
    %c0_i32_0 = arith.constant 0 : i32
    %c0_i32_1 = arith.constant 0 : i32
    return %c0_i32, %c0_i32_0 : i32, i32
  }
  func.func @transform_8(%arg0: i32) -> (i32, i32) {
    %c0_i32 = arith.constant 0 : i32
    %c0_i32_0 = arith.constant 0 : i32
    %c0_i32_1 = arith.constant 0 : i32
    return %c0_i32, %c0_i32_0 : i32, i32
  }
  func.func @transform_9(%arg0: i32) -> (i32, i32) {
    %c0_i32 = arith.constant 0 : i32
    %c0_i32_0 = arith.constant 0 : i32
    %c0_i32_1 = arith.constant 0 : i32
    return %c0_i32, %c0_i32_0 : i32, i32
  }
  func.func @transform_10(%arg0: i32) -> (i32, i32) {
    %c0_i32 = arith.constant 0 : i32
    %c0_i32_0 = arith.constant 0 : i32
    %c0_i32_1 = arith.constant 0 : i32
    return %c0_i32, %c0_i32_0 : i32, i32
  }
  func.func @transform_11(%arg0: i32) -> (i32, i32) {
    %c0_i32 = arith.constant 0 : i32
    %c0_i32_0 = arith.constant 0 : i32
    %c0_i32_1 = arith.constant 0 : i32
    return %c0_i32, %c0_i32_0 : i32, i32
  }
  func.func @transform_12(%arg0: i32) -> (i32, i32) {
    %c0_i32 = arith.constant 0 : i32
    %c0_i32_0 = arith.constant 0 : i32
    %c0_i32_1 = arith.constant 0 : i32
    return %c0_i32, %c0_i32_0 : i32, i32
  }
  func.func @transform_13(%arg0: i32) -> (i32, i32) {
    %c0_i32 = arith.constant 0 : i32
    %c0_i32_0 = arith.constant 0 : i32
    %c0_i32_1 = arith.constant 0 : i32
    return %c0_i32, %c0_i32_0 : i32, i32
  }
  func.func @transform_14(%arg0: i32) -> (i32, i32) {
    %c0_i32 = arith.constant 0 : i32
    %c0_i32_0 = arith.constant 0 : i32
    %c0_i32_1 = arith.constant 0 : i32
    return %c0_i32, %c0_i32_0 : i32, i32
  }
  func.func @transform_15(%arg0: i32) -> (i32, i32, i32) {
    %c0_i32 = arith.constant 0 : i32
    %c0_i32_0 = arith.constant 0 : i32
    %c0_i32_1 = arith.constant 0 : i32
    return %arg0, %c0_i32, %c0_i32_0 : i32, i32, i32
  }
}

</mosaic_0001>

<llo_original>
// kernel: tpu_custom_call.1
$region0: #{tpu_custom_call.1}
  #allocation0 [shape = 'u32[]', space=smem, size = 0x4, offset = 0x4, fixed_abs, tag = 'smem constant byte address 0x4 - core index']
  #allocation1 [shape = 'u32[144,128]{1,0:T(1,128)}', space=vmem, size = 0x12000, scoped, tag = 'internal scratch']
  #allocation2 [shape = 'bf16[8,32]{1,0:T(8,128)(2,1)}', space=vmem, size = 0x800, scoped, tag = 'scratch operand']
  %s0 = inlined_call_operand.vmem [shape: bf16[2,8,32], index: 0, kind: input, shape index: {}]
  %s1 = inlined_call_operand.vmem [shape: bf16[2,1,8], index: 1, kind: input, shape index: {}]
  %s2 = inlined_call_operand.vmem [shape: bf16[2,8,1], index: 2, kind: input, shape index: {}]
  %s3 = inlined_call_operand.vmem [shape: bf16[32,96], index: 3, kind: input, shape index: {}]
  %s4 = inlined_call_operand.vmem [shape: bf16[1,96], index: 4, kind: input, shape index: {}]
  %s5 = inlined_call_operand.vmem [shape: bf16[32,32], index: 5, kind: input, shape index: {}]
  %s6 = inlined_call_operand.vmem [shape: bf16[1,32], index: 6, kind: input, shape index: {}]
  %s7 = inlined_call_operand.vmem [shape: bf16[1,32], index: 7, kind: input, shape index: {}]
  %s8 = inlined_call_operand.vmem [shape: bf16[1,32], index: 8, kind: input, shape index: {}]
  %s9 = inlined_call_operand.vmem [shape: bf16[32,128], index: 9, kind: input, shape index: {}]
  %s10 = inlined_call_operand.vmem [shape: bf16[1,128], index: 10, kind: input, shape index: {}]
  %s11 = inlined_call_operand.vmem [shape: bf16[128,32], index: 11, kind: input, shape index: {}]
  %s12 = inlined_call_operand.vmem [shape: bf16[1,32], index: 12, kind: input, shape index: {}]
  %s13 = inlined_call_operand.vmem [shape: bf16[1,32], index: 13, kind: input, shape index: {}]
  %s14 = inlined_call_operand.vmem [shape: bf16[1,32], index: 14, kind: input, shape index: {}]
  %s15 = inlined_call_operand.hbm [shape: bf16[2,8,32], index: 15, kind: output, shape index: {}]
  %s16 = sld [smem:[#allocation0]]
  $region93: #{tpu_custom_call.1} parent=0
    _
  %s18 = ssub.s32 1, %s16
  %s19 = scalar_select 0, %s18, %s16
  $region1: #{tpu_custom_call.1} parent=0
    #allocation3 [shape = 'u8[4096]{0}', space=vmem, size = 0x1000, scoped, tag = 'output window, operand 0']
    #allocation4 [shape = 's32[2]{0}', space=sflag, size = 0x8, scoped, tag = 'scoped memory for tpu_custom_call.1']
    %20 = vsyncpa [#allocation4], 0
    %s21 = scalar_lea.sflag [#allocation4], 1
    %22 = vsyncpa %s21, 0
    loop: start=0, step=1, limit=4
    $region2: #{tpu_custom_call.1} parent=1 // loop_pre_header
      _
    $region3: #{tpu_custom_call.1} parent=1 // loop_header
      %s24 = sphi 0, %s28
      %p25 = scmp.ge.s32.totalorder %s24, 4
      %s34 = sphi 0, %s36
      %s37 = sphi 0, %s34
      %s38 = sphi 0, %s37
      %s54 = sphi 0, %s38
      %s60 = sphi 0, %s62
      %s63 = sphi 0, %s60
      %s64 = sphi 0, %s63
      %s80 = sphi 0, %s64
      %s86 = sphi 0, %s88
      %s89 = sphi 0, %s86
      %s90 = sphi 0, %s89
      %s106 = sphi 0, %s90
      %s110 = sphi 0, %s110
      %s112 = sphi 0, %s110
      %s113 = sphi 0, %s112
      %s127 = sphi 0, %s113
      %s131 = sphi 0, %s131
      %s133 = sphi 0, %s131
      %s134 = sphi 0, %s133
      %s148 = sphi 0, %s134
      %s152 = sphi 0, %s152
      %s154 = sphi 0, %s152
      %s155 = sphi 0, %s154
      %s169 = sphi 0, %s155
      %s173 = sphi 0, %s173
      %s175 = sphi 0, %s173
      %s176 = sphi 0, %s175
      %s190 = sphi 0, %s176
      %s194 = sphi 0, %s194
      %s196 = sphi 0, %s194
      %s197 = sphi 0, %s196
      %s211 = sphi 0, %s197
      %s215 = sphi 0, %s215
      %s217 = sphi 0, %s215
      %s218 = sphi 0, %s217
      %s232 = sphi 0, %s218
      %s236 = sphi 0, %s236
      %s238 = sphi 0, %s236
      %s239 = sphi 0, %s238
      %s253 = sphi 0, %s239
      %s257 = sphi 0, %s257
      %s259 = sphi 0, %s257
      %s260 = sphi 0, %s259
      %s274 = sphi 0, %s260
      %s278 = sphi 0, %s278
      %s280 = sphi 0, %s278
      %s281 = sphi 0, %s280
      %s295 = sphi 0, %s281
      %s299 = sphi 0, %s299
      %s301 = sphi 0, %s299
      %s302 = sphi 0, %s301
      %s316 = sphi 0, %s302
      %s320 = sphi 0, %s320
      %s322 = sphi 0, %s320
      %s323 = sphi 0, %s322
      %s337 = sphi 0, %s323
      %s341 = sphi 0, %s341
      %s343 = sphi 0, %s341
      %s344 = sphi 0, %s343
      %s358 = sphi 0, %s344
      %s364 = sphi 0, %s366
      %s367 = sphi 0, %s364
      %s368 = sphi 0, %s367
      %s384 = sphi 0, %s368
    $region4: #{tpu_custom_call.1} parent=1 // loop_header_branch
      %27 = sbr.rel (%p25) target = $region8
    $region5: #{tpu_custom_call.1} parent=1 // loop_body
      %s29 = ssub.s32 %s24, 1
      %s30 = ssub.s32 %s24, 2
      %s31 = sadd.s32 %s24, 1
      %s32 = ssub.s32 %s24, %s31
      %p33 = scmp.eq.s32.totalorder %s32, 0
      %s35 = sadd.s32 %s34, 1
      %s36 = scalar_select %p33, %s34, %s35
      %p39 = pneg %p33
      %p40 = scmp.eq.s32.totalorder %s24, 1
      %p41 = por %p39, %p40
      %p42 = scmp.ne.s32.totalorder %s34, %s37
      %p43 = scmp.eq.s32.totalorder %s24, 0
      %p44 = por %p42, %p43
      %p45 = scmp.ne.s32.totalorder %s34, %s37
      %p46 = scmp.eq.s32.totalorder %s29, 1
      %p47 = por %p45, %p46
      %p48 = scmp.ne.s32.totalorder %s37, %s38
      %p49 = scmp.eq.s32.totalorder %s29, 0
      %p50 = por %p48, %p49
      %p51 = scmp.ne.s32.totalorder %s37, %s38
      %p52 = scmp.eq.s32.totalorder %s30, 1
      %p53 = por %p51, %p52
      %p55 = scmp.ne.s32.totalorder %s38, %s54
      %p56 = scmp.eq.s32.totalorder %s30, 0
      %p57 = por %p55, %p56
      %s58 = ssub.s32 %s24, %s31
      %p59 = scmp.eq.s32.totalorder %s58, 0
      %s61 = sadd.s32 %s60, 1
      %s62 = scalar_select %p59, %s60, %s61
      %p65 = pneg %p59
      %p66 = scmp.eq.s32.totalorder %s24, 1
      %p67 = por %p65, %p66
      %p68 = scmp.ne.s32.totalorder %s60, %s63
      %p69 = scmp.eq.s32.totalorder %s24, 0
      %p70 = por %p68, %p69
      %p71 = scmp.ne.s32.totalorder %s60, %s63
      %p72 = scmp.eq.s32.totalorder %s29, 1
      %p73 = por %p71, %p72
      %p74 = scmp.ne.s32.totalorder %s63, %s64
      %p75 = scmp.eq.s32.totalorder %s29, 0
      %p76 = por %p74, %p75
      %p77 = scmp.ne.s32.totalorder %s63, %s64
      %p78 = scmp.eq.s32.totalorder %s30, 1
      %p79 = por %p77, %p78
      %p81 = scmp.ne.s32.totalorder %s64, %s80
      %p82 = scmp.eq.s32.totalorder %s30, 0
      %p83 = por %p81, %p82
      %s84 = ssub.s32 %s24, %s31
      %p85 = scmp.eq.s32.totalorder %s84, 0
      %s87 = sadd.s32 %s86, 1
      %s88 = scalar_select %p85, %s86, %s87
      %p91 = pneg %p85
      %p92 = scmp.eq.s32.totalorder %s24, 1
      %p93 = por %p91, %p92
      %p94 = scmp.ne.s32.totalorder %s86, %s89
      %p95 = scmp.eq.s32.totalorder %s24, 0
      %p96 = por %p94, %p95
      %p97 = scmp.ne.s32.totalorder %s86, %s89
      %p98 = scmp.eq.s32.totalorder %s29, 1
      %p99 = por %p97, %p98
      %p100 = scmp.ne.s32.totalorder %s89, %s90
      %p101 = scmp.eq.s32.totalorder %s29, 0
      %p102 = por %p100, %p101
      %p103 = scmp.ne.s32.totalorder %s89, %s90
      %p104 = scmp.eq.s32.totalorder %s30, 1
      %p105 = por %p103, %p104
      %p107 = scmp.ne.s32.totalorder %s90, %s106
      %p108 = scmp.eq.s32.totalorder %s30, 0
      %p109 = por %p107, %p108
      %s111 = sadd.s32 %s110, 1
      %p114 = scmp.eq.s32.totalorder %s24, 1
      %p115 = scmp.ne.s32.totalorder %s110, %s112
      %p116 = scmp.eq.s32.totalorder %s24, 0
      %p117 = por %p115, %p116
      %p118 = scmp.ne.s32.totalorder %s110, %s112
      %p119 = scmp.eq.s32.totalorder %s29, 1
      %p120 = por %p118, %p119
      %p121 = scmp.ne.s32.totalorder %s112, %s113
      %p122 = scmp.eq.s32.totalorder %s29, 0
      %p123 = por %p121, %p122
      %p124 = scmp.ne.s32.totalorder %s112, %s113
      %p125 = scmp.eq.s32.totalorder %s30, 1
      %p126 = por %p124, %p125
      %p128 = scmp.ne.s32.totalorder %s113, %s127
      %p129 = scmp.eq.s32.totalorder %s30, 0
      %p130 = por %p128, %p129
      %s132 = sadd.s32 %s131, 1
      %p135 = scmp.eq.s32.totalorder %s24, 1
      %p136 = scmp.ne.s32.totalorder %s131, %s133
      %p137 = scmp.eq.s32.totalorder %s24, 0
      %p138 = por %p136, %p137
      %p139 = scmp.ne.s32.totalorder %s131, %s133
      %p140 = scmp.eq.s32.totalorder %s29, 1
      %p141 = por %p139, %p140
      %p142 = scmp.ne.s32.totalorder %s133, %s134
      %p143 = scmp.eq.s32.totalorder %s29, 0
      %p144 = por %p142, %p143
      %p145 = scmp.ne.s32.totalorder %s133, %s134
      %p146 = scmp.eq.s32.totalorder %s30, 1
      %p147 = por %p145, %p146
      %p149 = scmp.ne.s32.totalorder %s134, %s148
      %p150 = scmp.eq.s32.totalorder %s30, 0
      %p151 = por %p149, %p150
      %s153 = sadd.s32 %s152, 1
      %p156 = scmp.eq.s32.totalorder %s24, 1
      %p157 = scmp.ne.s32.totalorder %s152, %s154
      %p158 = scmp.eq.s32.totalorder %s24, 0
      %p159 = por %p157, %p158
      %p160 = scmp.ne.s32.totalorder %s152, %s154
      %p161 = scmp.eq.s32.totalorder %s29, 1
      %p162 = por %p160, %p161
      %p163 = scmp.ne.s32.totalorder %s154, %s155
      %p164 = scmp.eq.s32.totalorder %s29, 0
      %p165 = por %p163, %p164
      %p166 = scmp.ne.s32.totalorder %s154, %s155
      %p167 = scmp.eq.s32.totalorder %s30, 1
      %p168 = por %p166, %p167
      %p170 = scmp.ne.s32.totalorder %s155, %s169
      %p171 = scmp.eq.s32.totalorder %s30, 0
      %p172 = por %p170, %p171
      %s174 = sadd.s32 %s173, 1
      %p177 = scmp.eq.s32.totalorder %s24, 1
      %p178 = scmp.ne.s32.totalorder %s173, %s175
      %p179 = scmp.eq.s32.totalorder %s24, 0
      %p180 = por %p178, %p179
      %p181 = scmp.ne.s32.totalorder %s173, %s175
      %p182 = scmp.eq.s32.totalorder %s29, 1
      %p183 = por %p181, %p182
      %p184 = scmp.ne.s32.totalorder %s175, %s176
      %p185 = scmp.eq.s32.totalorder %s29, 0
      %p186 = por %p184, %p185
      %p187 = scmp.ne.s32.totalorder %s175, %s176
      %p188 = scmp.eq.s32.totalorder %s30, 1
      %p189 = por %p187, %p188
      %p191 = scmp.ne.s32.totalorder %s176, %s190
      %p192 = scmp.eq.s32.totalorder %s30, 0
      %p193 = por %p191, %p192
      %s195 = sadd.s32 %s194, 1
      %p198 = scmp.eq.s32.totalorder %s24, 1
      %p199 = scmp.ne.s32.totalorder %s194, %s196
      %p200 = scmp.eq.s32.totalorder %s24, 0
      %p201 = por %p199, %p200
      %p202 = scmp.ne.s32.totalorder %s194, %s196
      %p203 = scmp.eq.s32.totalorder %s29, 1
      %p204 = por %p202, %p203
      %p205 = scmp.ne.s32.totalorder %s196, %s197
      %p206 = scmp.eq.s32.totalorder %s29, 0
      %p207 = por %p205, %p206
      %p208 = scmp.ne.s32.totalorder %s196, %s197
      %p209 = scmp.eq.s32.totalorder %s30, 1
      %p210 = por %p208, %p209
      %p212 = scmp.ne.s32.totalorder %s197, %s211
      %p213 = scmp.eq.s32.totalorder %s30, 0
      %p214 = por %p212, %p213
      %s216 = sadd.s32 %s215, 1
      %p219 = scmp.eq.s32.totalorder %s24, 1
      %p220 = scmp.ne.s32.totalorder %s215, %s217
      %p221 = scmp.eq.s32.totalorder %s24, 0
      %p222 = por %p220, %p221
      %p223 = scmp.ne.s32.totalorder %s215, %s217
      %p224 = scmp.eq.s32.totalorder %s29, 1
      %p225 = por %p223, %p224
      %p226 = scmp.ne.s32.totalorder %s217, %s218
      %p227 = scmp.eq.s32.totalorder %s29, 0
      %p228 = por %p226, %p227
      %p229 = scmp.ne.s32.totalorder %s217, %s218
      %p230 = scmp.eq.s32.totalorder %s30, 1
      %p231 = por %p229, %p230
      %p233 = scmp.ne.s32.totalorder %s218, %s232
      %p234 = scmp.eq.s32.totalorder %s30, 0
      %p235 = por %p233, %p234
      %s237 = sadd.s32 %s236, 1
      %p240 = scmp.eq.s32.totalorder %s24, 1
      %p241 = scmp.ne.s32.totalorder %s236, %s238
      %p242 = scmp.eq.s32.totalorder %s24, 0
      %p243 = por %p241, %p242
      %p244 = scmp.ne.s32.totalorder %s236, %s238
      %p245 = scmp.eq.s32.totalorder %s29, 1
      %p246 = por %p244, %p245
      %p247 = scmp.ne.s32.totalorder %s238, %s239
      %p248 = scmp.eq.s32.totalorder %s29, 0
      %p249 = por %p247, %p248
      %p250 = scmp.ne.s32.totalorder %s238, %s239
      %p251 = scmp.eq.s32.totalorder %s30, 1
      %p252 = por %p250, %p251
      %p254 = scmp.ne.s32.totalorder %s239, %s253
      %p255 = scmp.eq.s32.totalorder %s30, 0
      %p256 = por %p254, %p255
      %s258 = sadd.s32 %s257, 1
      %p261 = scmp.eq.s32.totalorder %s24, 1
      %p262 = scmp.ne.s32.totalorder %s257, %s259
      %p263 = scmp.eq.s32.totalorder %s24, 0
      %p264 = por %p262, %p263
      %p265 = scmp.ne.s32.totalorder %s257, %s259
      %p266 = scmp.eq.s32.totalorder %s29, 1
      %p267 = por %p265, %p266
      %p268 = scmp.ne.s32.totalorder %s259, %s260
      %p269 = scmp.eq.s32.totalorder %s29, 0
      %p270 = por %p268, %p269
      %p271 = scmp.ne.s32.totalorder %s259, %s260
      %p272 = scmp.eq.s32.totalorder %s30, 1
      %p273 = por %p271, %p272
      %p275 = scmp.ne.s32.totalorder %s260, %s274
      %p276 = scmp.eq.s32.totalorder %s30, 0
      %p277 = por %p275, %p276
      %s279 = sadd.s32 %s278, 1
      %p282 = scmp.eq.s32.totalorder %s24, 1
      %p283 = scmp.ne.s32.totalorder %s278, %s280
      %p284 = scmp.eq.s32.totalorder %s24, 0
      %p285 = por %p283, %p284
      %p286 = scmp.ne.s32.totalorder %s278, %s280
      %p287 = scmp.eq.s32.totalorder %s29, 1
      %p288 = por %p286, %p287
      %p289 = scmp.ne.s32.totalorder %s280, %s281
      %p290 = scmp.eq.s32.totalorder %s29, 0
      %p291 = por %p289, %p290
      %p292 = scmp.ne.s32.totalorder %s280, %s281
      %p293 = scmp.eq.s32.totalorder %s30, 1
      %p294 = por %p292, %p293
      %p296 = scmp.ne.s32.totalorder %s281, %s295
      %p297 = scmp.eq.s32.totalorder %s30, 0
      %p298 = por %p296, %p297
      %s300 = sadd.s32 %s299, 1
      %p303 = scmp.eq.s32.totalorder %s24, 1
      %p304 = scmp.ne.s32.totalorder %s299, %s301
      %p305 = scmp.eq.s32.totalorder %s24, 0
      %p306 = por %p304, %p305
      %p307 = scmp.ne.s32.totalorder %s299, %s301
      %p308 = scmp.eq.s32.totalorder %s29, 1
      %p309 = por %p307, %p308
      %p310 = scmp.ne.s32.totalorder %s301, %s302
      %p311 = scmp.eq.s32.totalorder %s29, 0
      %p312 = por %p310, %p311
      %p313 = scmp.ne.s32.totalorder %s301, %s302
      %p314 = scmp.eq.s32.totalorder %s30, 1
      %p315 = por %p313, %p314
      %p317 = scmp.ne.s32.totalorder %s302, %s316
      %p318 = scmp.eq.s32.totalorder %s30, 0
      %p319 = por %p317, %p318
      %s321 = sadd.s32 %s320, 1
      %p324 = scmp.eq.s32.totalorder %s24, 1
      %p325 = scmp.ne.s32.totalorder %s320, %s322
      %p326 = scmp.eq.s32.totalorder %s24, 0
      %p327 = por %p325, %p326
      %p328 = scmp.ne.s32.totalorder %s320, %s322
      %p329 = scmp.eq.s32.totalorder %s29, 1
      %p330 = por %p328, %p329
      %p331 = scmp.ne.s32.totalorder %s322, %s323
      %p332 = scmp.eq.s32.totalorder %s29, 0
      %p333 = por %p331, %p332
      %p334 = scmp.ne.s32.totalorder %s322, %s323
      %p335 = scmp.eq.s32.totalorder %s30, 1
      %p336 = por %p334, %p335
      %p338 = scmp.ne.s32.totalorder %s323, %s337
      %p339 = scmp.eq.s32.totalorder %s30, 0
      %p340 = por %p338, %p339
      %s342 = sadd.s32 %s341, 1
      %p345 = scmp.eq.s32.totalorder %s24, 1
      %p346 = scmp.ne.s32.totalorder %s341, %s343
      %p347 = scmp.eq.s32.totalorder %s24, 0
      %p348 = por %p346, %p347
      %p349 = scmp.ne.s32.totalorder %s341, %s343
      %p350 = scmp.eq.s32.totalorder %s29, 1
      %p351 = por %p349, %p350
      %p352 = scmp.ne.s32.totalorder %s343, %s344
      %p353 = scmp.eq.s32.totalorder %s29, 0
      %p354 = por %p352, %p353
      %p355 = scmp.ne.s32.totalorder %s343, %s344
      %p356 = scmp.eq.s32.totalorder %s30, 1
      %p357 = por %p355, %p356
      %p359 = scmp.ne.s32.totalorder %s344, %s358
      %p360 = scmp.eq.s32.totalorder %s30, 0
      %p361 = por %p359, %p360
      %s362 = ssub.s32 %s24, %s31
      %p363 = scmp.eq.s32.totalorder %s362, 0
      %s365 = sadd.s32 %s364, 1
      %s366 = scalar_select %p363, %s364, %s365
      %p369 = pneg %p363
      %p370 = scmp.eq.s32.totalorder %s24, 1
      %p371 = por %p369, %p370
      %p372 = scmp.ne.s32.totalorder %s364, %s367
      %p373 = scmp.eq.s32.totalorder %s24, 0
      %p374 = por %p372, %p373
      %p375 = scmp.ne.s32.totalorder %s364, %s367
      %p376 = scmp.eq.s32.totalorder %s29, 1
      %p377 = por %p375, %p376
      %p378 = scmp.ne.s32.totalorder %s367, %s368
      %p379 = scmp.eq.s32.totalorder %s29, 0
      %p380 = por %p378, %p379
      %p381 = scmp.ne.s32.totalorder %s367, %s368
      %p382 = scmp.eq.s32.totalorder %s30, 1
      %p383 = por %p381, %p382
      %p385 = scmp.ne.s32.totalorder %s368, %s384
      %p386 = scmp.eq.s32.totalorder %s30, 0
      %p387 = por %p385, %p386
      %p388 = scmp.le.s32.totalorder 1, %s24
      %p389 = scmp.lt.s32.totalorder %s24, 3
      %p390 = pnand %p388, %p389
      %p391 = pneg %p390
      // Predicated region
      $region9: #{tpu_custom_call.1} parent=5 // pred_check
        _
      $region10: #{tpu_custom_call.1} parent=5 // pred_check_branch
        %393 = sbr.rel (%p390) target = $region12
      $region11: #{tpu_custom_call.1} parent=5 // pred_region
        %s394 = ssub.s32 %s24, 1
        // Predicated region
        $region13: #{tpu_custom_call.1} parent=11 // pred_check
          %p395 = pneg %p123
        $region14: #{tpu_custom_call.1} parent=11 // pred_check_branch
          %397 = sbr.rel (%p395) target = $region16
        $region15: #{tpu_custom_call.1} parent=11 // pred_region
          _
        $region16: #{tpu_custom_call.1} parent=11 // pred_fallthru
          _
        // Predicated region
        $region17: #{tpu_custom_call.1} parent=11 // pred_check
          %p398 = pneg %p144
        $region18: #{tpu_custom_call.1} parent=11 // pred_check_branch
          %400 = sbr.rel (%p398) target = $region20
        $region19: #{tpu_custom_call.1} parent=11 // pred_region
          _
        $region20: #{tpu_custom_call.1} parent=11 // pred_fallthru
          _
        // Predicated region
        $region21: #{tpu_custom_call.1} parent=11 // pred_check
          %p401 = pneg %p165
        $region22: #{tpu_custom_call.1} parent=11 // pred_check_branch
          %403 = sbr.rel (%p401) target = $region24
        $region23: #{tpu_custom_call.1} parent=11 // pred_region
          _
        $region24: #{tpu_custom_call.1} parent=11 // pred_fallthru
          _
        // Predicated region
        $region25: #{tpu_custom_call.1} parent=11 // pred_check
          %p404 = pneg %p186
        $region26: #{tpu_custom_call.1} parent=11 // pred_check_branch
          %406 = sbr.rel (%p404) target = $region28
        $region27: #{tpu_custom_call.1} parent=11 // pred_region
          _
        $region28: #{tpu_custom_call.1} parent=11 // pred_fallthru
          _
        // Predicated region
        $region29: #{tpu_custom_call.1} parent=11 // pred_check
          %p407 = pneg %p207
        $region30: #{tpu_custom_call.1} parent=11 // pred_check_branch
          %409 = sbr.rel (%p407) target = $region32
        $region31: #{tpu_custom_call.1} parent=11 // pred_region
          _
        $region32: #{tpu_custom_call.1} parent=11 // pred_fallthru
          _
        // Predicated region
        $region33: #{tpu_custom_call.1} parent=11 // pred_check
          %p410 = pneg %p228
        $region34: #{tpu_custom_call.1} parent=11 // pred_check_branch
          %412 = sbr.rel (%p410) target = $region36
        $region35: #{tpu_custom_call.1} parent=11 // pred_region
          _
        $region36: #{tpu_custom_call.1} parent=11 // pred_fallthru
          _
        // Predicated region
        $region37: #{tpu_custom_call.1} parent=11 // pred_check
          %p413 = pneg %p249
        $region38: #{tpu_custom_call.1} parent=11 // pred_check_branch
          %415 = sbr.rel (%p413) target = $region40
        $region39: #{tpu_custom_call.1} parent=11 // pred_region
          _
        $region40: #{tpu_custom_call.1} parent=11 // pred_fallthru
          _
        // Predicated region
        $region41: #{tpu_custom_call.1} parent=11 // pred_check
          %p416 = pneg %p270
        $region42: #{tpu_custom_call.1} parent=11 // pred_check_branch
          %418 = sbr.rel (%p416) target = $region44
        $region43: #{tpu_custom_call.1} parent=11 // pred_region
          _
        $region44: #{tpu_custom_call.1} parent=11 // pred_fallthru
          _
        // Predicated region
        $region45: #{tpu_custom_call.1} parent=11 // pred_check
          %p419 = pneg %p291
        $region46: #{tpu_custom_call.1} parent=11 // pred_check_branch
          %421 = sbr.rel (%p419) target = $region48
        $region47: #{tpu_custom_call.1} parent=11 // pred_region
          _
        $region48: #{tpu_custom_call.1} parent=11 // pred_fallthru
          _
        // Predicated region
        $region49: #{tpu_custom_call.1} parent=11 // pred_check
          %p422 = pneg %p312
        $region50: #{tpu_custom_call.1} parent=11 // pred_check_branch
          %424 = sbr.rel (%p422) target = $region52
        $region51: #{tpu_custom_call.1} parent=11 // pred_region
          _
        $region52: #{tpu_custom_call.1} parent=11 // pred_fallthru
          _
        // Predicated region
        $region53: #{tpu_custom_call.1} parent=11 // pred_check
          %p425 = pneg %p333
        $region54: #{tpu_custom_call.1} parent=11 // pred_check_branch
          %427 = sbr.rel (%p425) target = $region56
        $region55: #{tpu_custom_call.1} parent=11 // pred_region
          _
        $region56: #{tpu_custom_call.1} parent=11 // pred_fallthru
          _
        // Predicated region
        $region57: #{tpu_custom_call.1} parent=11 // pred_check
          %p428 = pneg %p354
        $region58: #{tpu_custom_call.1} parent=11 // pred_check_branch
          %430 = sbr.rel (%p428) target = $region60
        $region59: #{tpu_custom_call.1} parent=11 // pred_region
          _
        $region60: #{tpu_custom_call.1} parent=11 // pred_fallthru
          _
      $region12: #{tpu_custom_call.1} parent=5 // pred_fallthru
        _
      %p431 = scmp.lt.s32.totalorder %s24, 2
      // Predicated region
      $region61: #{tpu_custom_call.1} parent=5 // pred_check
        %p432 = pneg %p431
      $region62: #{tpu_custom_call.1} parent=5 // pred_check_branch
        %434 = sbr.rel (%p432) target = $region64
      $region63: #{tpu_custom_call.1} parent=5 // pred_region
        // Predicated region
        $region65: #{tpu_custom_call.1} parent=63 // pred_check
          %p435 = pneg %p44
        $region66: #{tpu_custom_call.1} parent=63 // pred_check_branch
          %437 = sbr.rel (%p435) target = $region68
        $region67: #{tpu_custom_call.1} parent=63 // pred_region
          %p438 = scmp.lt.s32.totalorder %s24, 1
          %s439 = scalar_select %p438, %s24, 1
          %s440 = smul.addr %s439, 4
          %s441 = scalar_lea.vmem %s0, %s440
        $region68: #{tpu_custom_call.1} parent=63 // pred_fallthru
          _
        // Predicated region
        $region69: #{tpu_custom_call.1} parent=63 // pred_check
          %p442 = pneg %p70
        $region70: #{tpu_custom_call.1} parent=63 // pred_check_branch
          %444 = sbr.rel (%p442) target = $region72
        $region71: #{tpu_custom_call.1} parent=63 // pred_region
          %p445 = scmp.lt.s32.totalorder %s24, 1
          %s446 = scalar_select %p445, %s24, 1
          %s447 = scalar_lea.vmem %s1, %s446
        $region72: #{tpu_custom_call.1} parent=63 // pred_fallthru
          _
        // Predicated region
        $region73: #{tpu_custom_call.1} parent=63 // pred_check
          %p448 = pneg %p96
        $region74: #{tpu_custom_call.1} parent=63 // pred_check_branch
          %450 = sbr.rel (%p448) target = $region76
        $region75: #{tpu_custom_call.1} parent=63 // pred_region
          %p451 = scmp.lt.s32.totalorder %s24, 1
          %s452 = scalar_select %p451, %s24, 1
          %s453 = smul.addr %s452, 4
          %s454 = scalar_lea.vmem %s2, %s453
        $region76: #{tpu_custom_call.1} parent=63 // pred_fallthru
          _
      $region64: #{tpu_custom_call.1} parent=5 // pred_fallthru
        _
      %p455 = scmp.le.s32.totalorder 1, %s24
      %p456 = scmp.lt.s32.totalorder %s24, 3
      %p457 = pnand %p455, %p456
      %p458 = pneg %p457
      // Predicated region
      $region77: #{tpu_custom_call.1} parent=5 // pred_check
        _
      $region78: #{tpu_custom_call.1} parent=5 // pred_check_branch
        %460 = sbr.rel (%p457) target = $region80
      $region79: #{tpu_custom_call.1} parent=5 // pred_region
        %s461 = ssub.s32 %s24, 1
        %p462 = scmp.lt.s32.totalorder %s29, 1
        %s463 = scalar_select %p462, %s29, 1
        %s464 = smul.addr %s463, 4
        %s465 = scalar_lea.vmem %s0, %s464
        %p466 = pneg %p50
        %p467 = pneg %p47
        %p468 = scmp.lt.s32.totalorder %s29, 1
        %s469 = scalar_select %p468, %s29, 1
        %s470 = scalar_lea.vmem %s1, %s469
        %p471 = pneg %p76
        %p472 = pneg %p73
        %p473 = scmp.lt.s32.totalorder %s29, 1
        %s474 = scalar_select %p473, %s29, 1
        %s475 = smul.addr %s474, 4
        %s476 = scalar_lea.vmem %s2, %s475
        %p477 = pneg %p102
        %p478 = pneg %p99
        %p479 = pneg %p123
        %p480 = pneg %p120
        %p481 = pneg %p144
        %p482 = pneg %p141
        %p483 = pneg %p165
        %p484 = pneg %p162
        %p485 = pneg %p186
        %p486 = pneg %p183
        %p487 = pneg %p207
        %p488 = pneg %p204
        %p489 = pneg %p228
        %p490 = pneg %p225
        %p491 = pneg %p249
        %p492 = pneg %p246
        %p493 = pneg %p270
        %p494 = pneg %p267
        %p495 = pneg %p291
        %p496 = pneg %p288
        %p497 = pneg %p312
        %p498 = pneg %p309
        %p499 = pneg %p333
        %p500 = pneg %p330
        %p501 = pneg %p354
        %p502 = pneg %p351
        %p503 = pneg %p380
        %p504 = pneg %p377
        %s505 = sand.u32 %s367, 1
        %s506 = scalar_lea.sflag [#allocation4], %s505
        %s507 = sand.u32 %s367, 1
        %s508 = smul.addr %s507, 4
        %s509 = scalar_lea.vmem [#allocation3], %s508
        %p510 = scmp.lt.s32.totalorder %s29, 1
        %s511 = scalar_select %p510, %s29, 1
        %s512 = smul.addr %s511, 4
        %s513 = scalar_lea.vmem %s0, %s512
        %p514 = scmp.lt.s32.totalorder %s29, 1
        %s515 = scalar_select %p514, %s29, 1
        %s516 = scalar_lea.vmem %s1, %s515
        %p517 = scmp.lt.s32.totalorder %s29, 1
        %s518 = scalar_select %p517, %s29, 1
        %s519 = smul.addr %s518, 4
        %s520 = scalar_lea.vmem %s2, %s519
        %v522 = vld [vmem:[%s513] sm:$0xf]
        %v523 = vld [vmem:[%s516] sm:$0x1]
        %v524 = vunpack.c.l.bf16 %v523
        %v525 = vld [vmem:[%s520] sm:$0xf]
        %v526 = vunpack.c.l.bf16 %v525
        %v527 = vsub.f32 1.0, %v524
        %v528 = vmul.f32 %v527, -1e+09
        %v529 = vld [vmem:[%s3] sm:$0xf]
        %v530 = vld [vmem:[%s3 + $0x4] sm:$0xf]
        %v531 = vld [vmem:[%s3 + $0x8] sm:$0xf]
        %v532 = vld [vmem:[%s3 + $0xc] sm:$0xf]
        %v533 = vld [vmem:[%s4] sm:$0x1]
        %v534 = vunpack.c.l.bf16 %v533
        %v535 = vlaneseq
        %v536 = vshrl.u32 %v535, 7
        %v537 = vsub.s32 0, %v536
        %v538 = vrot.slane %v534, %v537
        %v543 = vunpack.c.l.b16 %v529
        %v544 = vunpack.c.l.b16 %v530
        %v545 = vunpack.c.l.b16 %v531
        %v546 = vunpack.c.l.b16 %v532
        %v547 = vpack.c.b16 %v544, %v543
        %v548 = vpack.c.b16 %v546, %v545
        %vm551 = vcmask 261120
        %v553 = vsel %vm551, %v522, 0
        %555 = vmatprep.subr.bf16.mxu0 0
        %556 = vmatpush1.bf16.msra.mxu0 %v547
        %557 = vmatprep.subr.bf16.mxu0 0
        %558 = vmatpush1.bf16.msra.mxu0 %v548
        %559 = vmatprep.subr.bf16.mxu0 0
        %560 = vmatpush1.bf16.msra.mxu0 0
        %561 = vmatprep.subr.bf16.mxu0 0
        %562 = vmatpush1.bf16.msra.mxu0 0
        %563 = vmatprep.subr.bf16.mxu0 0
        %564 = vmatpush1.bf16.msra.mxu0 0
        %565 = vmatprep.subr.bf16.mxu0 0
        %566 = vmatpush1.bf16.msra.mxu0 0
        %567 = vmatprep.subr.bf16.mxu0 0
        %568 = vmatpush1.bf16.msra.mxu0 0
        %569 = vmatprep.subr.bf16.mxu0 0
        %570 = vmatpush1.bf16.msra.mxu0 0
        %571 = vmatprep.subr.bf16.mxu0 0
        %572 = vmatpush1.bf16.msra.mxu0 0
        %573 = vmatprep.subr.bf16.mxu0 0
        %574 = vmatpush1.bf16.msra.mxu0 0
        %575 = vmatprep.subr.bf16.mxu0 0
        %576 = vmatpush1.bf16.msra.mxu0 0
        %577 = vmatprep.subr.bf16.mxu0 0
        %578 = vmatpush1.bf16.msra.mxu0 0
        %579 = vmatprep.subr.bf16.mxu0 0
        %580 = vmatpush1.bf16.msra.mxu0 0
        %581 = vmatprep.subr.bf16.mxu0 0
        %582 = vmatpush1.bf16.msra.mxu0 0
        %583 = vmatprep.subr.bf16.mxu0 0
        %584 = vmatpush1.bf16.msra.mxu0 0
        %585 = vmatprep.subr.bf16.mxu0 0
        %586 = vmatpush1.bf16.msra.mxu0 0
        %587 = vmatprep.mubr.bf16.mxu0 0
        %588 = vmatmul.mubr.bf16.gmra.mrb[0].mxu0 %v553
        %v589 = vpop.f32.mrb[0].mxu0
        %v590 = vadd.f32 %v538, %v589
        %v591 = vpop.f32.mrb[0].mxu0
        %v592 = vpop.f32.mrb[0].mxu0
        %v593 = vpop.f32.mrb[0].mxu0
        %594 = vdwg.mxu0
        %v595 = vpack.c.bf16 %v590, %v590
        %v596 = vlaneseq
        %v597 = vshrl.u32 %v596, 7
        %v598 = vsub.s32 0, %v597
        %v599 = vrot.slane %v528, %v598
        %601 = vrot.lane.b32.xlu0 %v595, 96
        %v602 = vpop.permute.xlu0 %601
        %vm603 = vcmask 64512
        %v605 = vsel %vm603, %v595, 0
        %v608 = vsel %vm603, %v602, 0
        %610 = vmatprep.subr.bf16.mxu0 0
        %611 = vmatpush1.bf16.xpose.msra.mxu0 %v608
        %612 = vmatprep.subr.bf16.mxu0 0
        %613 = vmatpush1.bf16.xpose.msra.mxu0 0
        %614 = vmatprep.subr.bf16.mxu0 0
        %615 = vmatpush1.bf16.xpose.msra.mxu0 0
        %616 = vmatprep.subr.bf16.mxu0 0
        %617 = vmatpush1.bf16.xpose.msra.mxu0 0
        %618 = vmatprep.subr.bf16.mxu0 0
        %619 = vmatpush1.bf16.xpose.msra.mxu0 0
        %620 = vmatprep.subr.bf16.mxu0 0
        %621 = vmatpush1.bf16.xpose.msra.mxu0 0
        %622 = vmatprep.subr.bf16.mxu0 0
        %623 = vmatpush1.bf16.xpose.msra.mxu0 0
        %624 = vmatprep.subr.bf16.mxu0 0
        %625 = vmatpush1.bf16.xpose.msra.mxu0 0
        %626 = vmatprep.subr.bf16.mxu0 0
        %627 = vmatpush1.bf16.xpose.msra.mxu0 0
        %628 = vmatprep.subr.bf16.mxu0 0
        %629 = vmatpush1.bf16.xpose.msra.mxu0 0
        %630 = vmatprep.subr.bf16.mxu0 0
        %631 = vmatpush1.bf16.xpose.msra.mxu0 0
        %632 = vmatprep.subr.bf16.mxu0 0
        %633 = vmatpush1.bf16.xpose.msra.mxu0 0
        %634 = vmatprep.subr.bf16.mxu0 0
        %635 = vmatpush1.bf16.xpose.msra.mxu0 0
        %636 = vmatprep.subr.bf16.mxu0 0
        %637 = vmatpush1.bf16.xpose.msra.mxu0 0
        %638 = vmatprep.subr.bf16.mxu0 0
        %639 = vmatpush1.bf16.xpose.msra.mxu0 0
        %640 = vmatprep.subr.bf16.mxu0 0
        %641 = vmatpush1.bf16.xpose.msra.mxu0 0
        %642 = vmatprep.mubr.bf16.mxu0 0
        %643 = vmatmul.mubr.bf16.gmra.mrb[0].mxu0 %v605
        %v644 = vpop.f32.mrb[0].mxu0
        %v645 = vadd.f32 %v599, %v644
        %v646 = vpop.f32.mrb[0].mxu0
        %v647 = vpop.f32.mrb[0].mxu0
        %v648 = vpop.f32.mrb[0].mxu0
        %649 = vdwg.mxu0
        %v650 = vsel %vm603, %v645, -inf
        %651 = vmax.xlane.f32.xlu0 %v650
        %v652 = vpop.xlane.xlu0 %651
        %v653 = vsub.f32 %v645, %v652
        %v654 = vmul.f32 %v653, 1.442695
        %v655 = vpow.pop %v654
        %v656 = vsel %vm603, %v655, 0.0
        %657 = vadd.xlane.f32.xlu0 %v656
        %v658 = vpop.xlane.xlu0 %657
        %v659 = vrcp.pop %v658
        %v660 = vmul.f32 %v655, %v659
        %v661 = vpack.c.bf16 %v660, %v660
        %662 = vrot.lane.b32.xlu0 %v595, 64
        %v663 = vpop.permute.xlu0 %662
        %v665 = vsel %vm603, %v661, 0
        %vm667 = vcmask 1043456
        %v669 = vsel %vm667, %v663, 0
        %671 = vmatprep.subr.bf16.mxu0 0
        %672 = vmatpush1.bf16.msra.mxu0 %v669
        %673 = vmatprep.subr.bf16.mxu0 0
        %674 = vmatpush1.bf16.msra.mxu0 0
        %675 = vmatprep.subr.bf16.mxu0 0
        %676 = vmatpush1.bf16.msra.mxu0 0
        %677 = vmatprep.subr.bf16.mxu0 0
        %678 = vmatpush1.bf16.msra.mxu0 0
        %679 = vmatprep.subr.bf16.mxu0 0
        %680 = vmatpush1.bf16.msra.mxu0 0
        %681 = vmatprep.subr.bf16.mxu0 0
        %682 = vmatpush1.bf16.msra.mxu0 0
        %683 = vmatprep.subr.bf16.mxu0 0
        %684 = vmatpush1.bf16.msra.mxu0 0
        %685 = vmatprep.subr.bf16.mxu0 0
        %686 = vmatpush1.bf16.msra.mxu0 0
        %687 = vmatprep.subr.bf16.mxu0 0
        %688 = vmatpush1.bf16.msra.mxu0 0
        %689 = vmatprep.subr.bf16.mxu0 0
        %690 = vmatpush1.bf16.msra.mxu0 0
        %691 = vmatprep.subr.bf16.mxu0 0
        %692 = vmatpush1.bf16.msra.mxu0 0
        %693 = vmatprep.subr.bf16.mxu0 0
        %694 = vmatpush1.bf16.msra.mxu0 0
        %695 = vmatprep.subr.bf16.mxu0 0
        %696 = vmatpush1.bf16.msra.mxu0 0
        %697 = vmatprep.subr.bf16.mxu0 0
        %698 = vmatpush1.bf16.msra.mxu0 0
        %699 = vmatprep.subr.bf16.mxu0 0
        %700 = vmatpush1.bf16.msra.mxu0 0
        %701 = vmatprep.subr.bf16.mxu0 0
        %702 = vmatpush1.bf16.msra.mxu0 0
        %703 = vmatprep.mubr.bf16.mxu0 0
        %704 = vmatmul.mubr.bf16.gmra.mrb[0].mxu0 %v665
        %v705 = vpop.f32.mrb[0].mxu0
        %v706 = vadd.f32 0.0, %v705
        %v707 = vpop.f32.mrb[0].mxu0
        %v708 = vpop.f32.mrb[0].mxu0
        %v709 = vpop.f32.mrb[0].mxu0
        %710 = vdwg.mxu0
        %711 = vrot.lane.b32.xlu0 %v595, 120
        %v712 = vpop.permute.xlu0 %711
        %713 = vrot.lane.b32.xlu0 %v595, 88
        %v714 = vpop.permute.xlu0 %713
        %v716 = vsel %vm603, %v712, 0
        %v719 = vsel %vm603, %v714, 0
        %721 = vmatprep.subr.bf16.mxu0 0
        %722 = vmatpush1.bf16.xpose.msra.mxu0 %v719
        %723 = vmatprep.subr.bf16.mxu0 0
        %724 = vmatpush1.bf16.xpose.msra.mxu0 0
        %725 = vmatprep.subr.bf16.mxu0 0
        %726 = vmatpush1.bf16.xpose.msra.mxu0 0
        %727 = vmatprep.subr.bf16.mxu0 0
        %728 = vmatpush1.bf16.xpose.msra.mxu0 0
        %729 = vmatprep.subr.bf16.mxu0 0
        %730 = vmatpush1.bf16.xpose.msra.mxu0 0
        %731 = vmatprep.subr.bf16.mxu0 0
        %732 = vmatpush1.bf16.xpose.msra.mxu0 0
        %733 = vmatprep.subr.bf16.mxu0 0
        %734 = vmatpush1.bf16.xpose.msra.mxu0 0
        %735 = vmatprep.subr.bf16.mxu0 0
        %736 = vmatpush1.bf16.xpose.msra.mxu0 0
        %737 = vmatprep.subr.bf16.mxu0 0
        %738 = vmatpush1.bf16.xpose.msra.mxu0 0
        %739 = vmatprep.subr.bf16.mxu0 0
        %740 = vmatpush1.bf16.xpose.msra.mxu0 0
        %741 = vmatprep.subr.bf16.mxu0 0
        %742 = vmatpush1.bf16.xpose.msra.mxu0 0
        %743 = vmatprep.subr.bf16.mxu0 0
        %744 = vmatpush1.bf16.xpose.msra.mxu0 0
        %745 = vmatprep.subr.bf16.mxu0 0
        %746 = vmatpush1.bf16.xpose.msra.mxu0 0
        %747 = vmatprep.subr.bf16.mxu0 0
        %748 = vmatpush1.bf16.xpose.msra.mxu0 0
        %749 = vmatprep.subr.bf16.mxu0 0
        %750 = vmatpush1.bf16.xpose.msra.mxu0 0
        %751 = vmatprep.subr.bf16.mxu0 0
        %752 = vmatpush1.bf16.xpose.msra.mxu0 0
        %753 = vmatprep.mubr.bf16.mxu0 0
        %754 = vmatmul.mubr.bf16.gmra.mrb[0].mxu0 %v716
        %v755 = vpop.f32.mrb[0].mxu0
        %v756 = vadd.f32 %v599, %v755
        %v757 = vpop.f32.mrb[0].mxu0
        %v758 = vpop.f32.mrb[0].mxu0
        %v759 = vpop.f32.mrb[0].mxu0
        %760 = vdwg.mxu0
        %v761 = vsel %vm603, %v756, -inf
        %762 = vmax.xlane.f32.xlu0 %v761
        %v763 = vpop.xlane.xlu0 %762
        %v764 = vsub.f32 %v756, %v763
        %v765 = vmul.f32 %v764, 1.442695
        %v766 = vpow.pop %v765
        %v767 = vsel %vm603, %v766, 0.0
        %768 = vadd.xlane.f32.xlu0 %v767
        %v769 = vpop.xlane.xlu0 %768
        %v770 = vrcp.pop %v769
        %v771 = vmul.f32 %v766, %v770
        %v772 = vpack.c.bf16 %v771, %v771
        %773 = vrot.lane.b32.xlu0 %v595, 56
        %v774 = vpop.permute.xlu0 %773
        %v776 = vsel %vm603, %v772, 0
        %v779 = vsel %vm667, %v774, 0
        %781 = vmatprep.subr.bf16.mxu0 0
        %782 = vmatpush1.bf16.msra.mxu0 %v779
        %783 = vmatprep.subr.bf16.mxu0 0
        %784 = vmatpush1.bf16.msra.mxu0 0
        %785 = vmatprep.subr.bf16.mxu0 0
        %786 = vmatpush1.bf16.msra.mxu0 0
        %787 = vmatprep.subr.bf16.mxu0 0
        %788 = vmatpush1.bf16.msra.mxu0 0
        %789 = vmatprep.subr.bf16.mxu0 0
        %790 = vmatpush1.bf16.msra.mxu0 0
        %791 = vmatprep.subr.bf16.mxu0 0
        %792 = vmatpush1.bf16.msra.mxu0 0
        %793 = vmatprep.subr.bf16.mxu0 0
        %794 = vmatpush1.bf16.msra.mxu0 0
        %795 = vmatprep.subr.bf16.mxu0 0
        %796 = vmatpush1.bf16.msra.mxu0 0
        %797 = vmatprep.subr.bf16.mxu0 0
        %798 = vmatpush1.bf16.msra.mxu0 0
        %799 = vmatprep.subr.bf16.mxu0 0
        %800 = vmatpush1.bf16.msra.mxu0 0
        %801 = vmatprep.subr.bf16.mxu0 0
        %802 = vmatpush1.bf16.msra.mxu0 0
        %803 = vmatprep.subr.bf16.mxu0 0
        %804 = vmatpush1.bf16.msra.mxu0 0
        %805 = vmatprep.subr.bf16.mxu0 0
        %806 = vmatpush1.bf16.msra.mxu0 0
        %807 = vmatprep.subr.bf16.mxu0 0
        %808 = vmatpush1.bf16.msra.mxu0 0
        %809 = vmatprep.subr.bf16.mxu0 0
        %810 = vmatpush1.bf16.msra.mxu0 0
        %811 = vmatprep.subr.bf16.mxu0 0
        %812 = vmatpush1.bf16.msra.mxu0 0
        %813 = vmatprep.mubr.bf16.mxu0 0
        %814 = vmatmul.mubr.bf16.gmra.mrb[0].mxu0 %v776
        %v815 = vpop.f32.mrb[0].mxu0
        %v816 = vadd.f32 0.0, %v815
        %v817 = vpop.f32.mrb[0].mxu0
        %v818 = vpop.f32.mrb[0].mxu0
        %v819 = vpop.f32.mrb[0].mxu0
        %820 = vdwg.mxu0
        %821 = vrot.lane.b32.xlu0 %v595, 112
        %v822 = vpop.permute.xlu0 %821
        %823 = vrot.lane.b32.xlu0 %v595, 80
        %v824 = vpop.permute.xlu0 %823
        %v826 = vsel %vm603, %v822, 0
        %v829 = vsel %vm603, %v824, 0
        %831 = vmatprep.subr.bf16.mxu0 0
        %832 = vmatpush1.bf16.xpose.msra.mxu0 %v829
        %833 = vmatprep.subr.bf16.mxu0 0
        %834 = vmatpush1.bf16.xpose.msra.mxu0 0
        %835 = vmatprep.subr.bf16.mxu0 0
        %836 = vmatpush1.bf16.xpose.msra.mxu0 0
        %837 = vmatprep.subr.bf16.mxu0 0
        %838 = vmatpush1.bf16.xpose.msra.mxu0 0
        %839 = vmatprep.subr.bf16.mxu0 0
        %840 = vmatpush1.bf16.xpose.msra.mxu0 0
        %841 = vmatprep.subr.bf16.mxu0 0
        %842 = vmatpush1.bf16.xpose.msra.mxu0 0
        %843 = vmatprep.subr.bf16.mxu0 0
        %844 = vmatpush1.bf16.xpose.msra.mxu0 0
        %845 = vmatprep.subr.bf16.mxu0 0
        %846 = vmatpush1.bf16.xpose.msra.mxu0 0
        %847 = vmatprep.subr.bf16.mxu0 0
        %848 = vmatpush1.bf16.xpose.msra.mxu0 0
        %849 = vmatprep.subr.bf16.mxu0 0
        %850 = vmatpush1.bf16.xpose.msra.mxu0 0
        %851 = vmatprep.subr.bf16.mxu0 0
        %852 = vmatpush1.bf16.xpose.msra.mxu0 0
        %853 = vmatprep.subr.bf16.mxu0 0
        %854 = vmatpush1.bf16.xpose.msra.mxu0 0
        %855 = vmatprep.subr.bf16.mxu0 0
        %856 = vmatpush1.bf16.xpose.msra.mxu0 0
        %857 = vmatprep.subr.bf16.mxu0 0
        %858 = vmatpush1.bf16.xpose.msra.mxu0 0
        %859 = vmatprep.subr.bf16.mxu0 0
        %860 = vmatpush1.bf16.xpose.msra.mxu0 0
        %861 = vmatprep.subr.bf16.mxu0 0
        %862 = vmatpush1.bf16.xpose.msra.mxu0 0
        %863 = vmatprep.mubr.bf16.mxu0 0
        %864 = vmatmul.mubr.bf16.gmra.mrb[0].mxu0 %v826
        %v865 = vpop.f32.mrb[0].mxu0
        %v866 = vadd.f32 %v599, %v865
        %v867 = vpop.f32.mrb[0].mxu0
        %v868 = vpop.f32.mrb[0].mxu0
        %v869 = vpop.f32.mrb[0].mxu0
        %870 = vdwg.mxu0
        %v871 = vsel %vm603, %v866, -inf
        %872 = vmax.xlane.f32.xlu0 %v871
        %v873 = vpop.xlane.xlu0 %872
        %v874 = vsub.f32 %v866, %v873
        %v875 = vmul.f32 %v874, 1.442695
        %v876 = vpow.pop %v875
        %v877 = vsel %vm603, %v876, 0.0
        %878 = vadd.xlane.f32.xlu0 %v877
        %v879 = vpop.xlane.xlu0 %878
        %v880 = vrcp.pop %v879
        %v881 = vmul.f32 %v876, %v880
        %v882 = vpack.c.bf16 %v881, %v881
        %883 = vrot.lane.b32.xlu0 %v595, 48
        %v884 = vpop.permute.xlu0 %883
        %v886 = vsel %vm603, %v882, 0
        %v889 = vsel %vm667, %v884, 0
        %891 = vmatprep.subr.bf16.mxu0 0
        %892 = vmatpush1.bf16.msra.mxu0 %v889
        %893 = vmatprep.subr.bf16.mxu0 0
        %894 = vmatpush1.bf16.msra.mxu0 0
        %895 = vmatprep.subr.bf16.mxu0 0
        %896 = vmatpush1.bf16.msra.mxu0 0
        %897 = vmatprep.subr.bf16.mxu0 0
        %898 = vmatpush1.bf16.msra.mxu0 0
        %899 = vmatprep.subr.bf16.mxu0 0
        %900 = vmatpush1.bf16.msra.mxu0 0
        %901 = vmatprep.subr.bf16.mxu0 0
        %902 = vmatpush1.bf16.msra.mxu0 0
        %903 = vmatprep.subr.bf16.mxu0 0
        %904 = vmatpush1.bf16.msra.mxu0 0
        %905 = vmatprep.subr.bf16.mxu0 0
        %906 = vmatpush1.bf16.msra.mxu0 0
        %907 = vmatprep.subr.bf16.mxu0 0
        %908 = vmatpush1.bf16.msra.mxu0 0
        %909 = vmatprep.subr.bf16.mxu0 0
        %910 = vmatpush1.bf16.msra.mxu0 0
        %911 = vmatprep.subr.bf16.mxu0 0
        %912 = vmatpush1.bf16.msra.mxu0 0
        %913 = vmatprep.subr.bf16.mxu0 0
        %914 = vmatpush1.bf16.msra.mxu0 0
        %915 = vmatprep.subr.bf16.mxu0 0
        %916 = vmatpush1.bf16.msra.mxu0 0
        %917 = vmatprep.subr.bf16.mxu0 0
        %918 = vmatpush1.bf16.msra.mxu0 0
        %919 = vmatprep.subr.bf16.mxu0 0
        %920 = vmatpush1.bf16.msra.mxu0 0
        %921 = vmatprep.subr.bf16.mxu0 0
        %922 = vmatpush1.bf16.msra.mxu0 0
        %923 = vmatprep.mubr.bf16.mxu0 0
        %924 = vmatmul.mubr.bf16.gmra.mrb[0].mxu0 %v886
        %v925 = vpop.f32.mrb[0].mxu0
        %v926 = vadd.f32 0.0, %v925
        %v927 = vpop.f32.mrb[0].mxu0
        %v928 = vpop.f32.mrb[0].mxu0
        %v929 = vpop.f32.mrb[0].mxu0
        %930 = vdwg.mxu0
        %931 = vrot.lane.b32.xlu0 %v595, 104
        %v932 = vpop.permute.xlu0 %931
        %933 = vrot.lane.b32.xlu0 %v595, 72
        %v934 = vpop.permute.xlu0 %933
        %v936 = vsel %vm603, %v932, 0
        %v939 = vsel %vm603, %v934, 0
        %941 = vmatprep.subr.bf16.mxu0 0
        %942 = vmatpush1.bf16.xpose.msra.mxu0 %v939
        %943 = vmatprep.subr.bf16.mxu0 0
        %944 = vmatpush1.bf16.xpose.msra.mxu0 0
        %945 = vmatprep.subr.bf16.mxu0 0
        %946 = vmatpush1.bf16.xpose.msra.mxu0 0
        %947 = vmatprep.subr.bf16.mxu0 0
        %948 = vmatpush1.bf16.xpose.msra.mxu0 0
        %949 = vmatprep.subr.bf16.mxu0 0
        %950 = vmatpush1.bf16.xpose.msra.mxu0 0
        %951 = vmatprep.subr.bf16.mxu0 0
        %952 = vmatpush1.bf16.xpose.msra.mxu0 0
        %953 = vmatprep.subr.bf16.mxu0 0
        %954 = vmatpush1.bf16.xpose.msra.mxu0 0
        %955 = vmatprep.subr.bf16.mxu0 0
        %956 = vmatpush1.bf16.xpose.msra.mxu0 0
        %957 = vmatprep.subr.bf16.mxu0 0
        %958 = vmatpush1.bf16.xpose.msra.mxu0 0
        %959 = vmatprep.subr.bf16.mxu0 0
        %960 = vmatpush1.bf16.xpose.msra.mxu0 0
        %961 = vmatprep.subr.bf16.mxu0 0
        %962 = vmatpush1.bf16.xpose.msra.mxu0 0
        %963 = vmatprep.subr.bf16.mxu0 0
        %964 = vmatpush1.bf16.xpose.msra.mxu0 0
        %965 = vmatprep.subr.bf16.mxu0 0
        %966 = vmatpush1.bf16.xpose.msra.mxu0 0
        %967 = vmatprep.subr.bf16.mxu0 0
        %968 = vmatpush1.bf16.xpose.msra.mxu0 0
        %969 = vmatprep.subr.bf16.mxu0 0
        %970 = vmatpush1.bf16.xpose.msra.mxu0 0
        %971 = vmatprep.subr.bf16.mxu0 0
        %972 = vmatpush1.bf16.xpose.msra.mxu0 0
        %973 = vmatprep.mubr.bf16.mxu0 0
        %974 = vmatmul.mubr.bf16.gmra.mrb[0].mxu0 %v936
        %v975 = vpop.f32.mrb[0].mxu0
        %v976 = vadd.f32 %v599, %v975
        %v977 = vpop.f32.mrb[0].mxu0
        %v978 = vpop.f32.mrb[0].mxu0
        %v979 = vpop.f32.mrb[0].mxu0
        %980 = vdwg.mxu0
        %v981 = vsel %vm603, %v976, -inf
        %982 = vmax.xlane.f32.xlu0 %v981
        %v983 = vpop.xlane.xlu0 %982
        %v984 = vsub.f32 %v976, %v983
        %v985 = vmul.f32 %v984, 1.442695
        %v986 = vpow.pop %v985
        %v987 = vsel %vm603, %v986, 0.0
        %988 = vadd.xlane.f32.xlu0 %v987
        %v989 = vpop.xlane.xlu0 %988
        %v990 = vrcp.pop %v989
        %v991 = vmul.f32 %v986, %v990
        %v992 = vpack.c.bf16 %v991, %v991
        %993 = vrot.lane.b32.xlu0 %v595, 40
        %v994 = vpop.permute.xlu0 %993
        %v996 = vsel %vm603, %v992, 0
        %v999 = vsel %vm667, %v994, 0
        %1001 = vmatprep.subr.bf16.mxu0 0
        %1002 = vmatpush1.bf16.msra.mxu0 %v999
        %1003 = vmatprep.subr.bf16.mxu0 0
        %1004 = vmatpush1.bf16.msra.mxu0 0
        %1005 = vmatprep.subr.bf16.mxu0 0
        %1006 = vmatpush1.bf16.msra.mxu0 0
        %1007 = vmatprep.subr.bf16.mxu0 0
        %1008 = vmatpush1.bf16.msra.mxu0 0
        %1009 = vmatprep.subr.bf16.mxu0 0
        %1010 = vmatpush1.bf16.msra.mxu0 0
        %1011 = vmatprep.subr.bf16.mxu0 0
        %1012 = vmatpush1.bf16.msra.mxu0 0
        %1013 = vmatprep.subr.bf16.mxu0 0
        %1014 = vmatpush1.bf16.msra.mxu0 0
        %1015 = vmatprep.subr.bf16.mxu0 0
        %1016 = vmatpush1.bf16.msra.mxu0 0
        %1017 = vmatprep.subr.bf16.mxu0 0
        %1018 = vmatpush1.bf16.msra.mxu0 0
        %1019 = vmatprep.subr.bf16.mxu0 0
        %1020 = vmatpush1.bf16.msra.mxu0 0
        %1021 = vmatprep.subr.bf16.mxu0 0
        %1022 = vmatpush1.bf16.msra.mxu0 0
        %1023 = vmatprep.subr.bf16.mxu0 0
        %1024 = vmatpush1.bf16.msra.mxu0 0
        %1025 = vmatprep.subr.bf16.mxu0 0
        %1026 = vmatpush1.bf16.msra.mxu0 0
        %1027 = vmatprep.subr.bf16.mxu0 0
        %1028 = vmatpush1.bf16.msra.mxu0 0
        %1029 = vmatprep.subr.bf16.mxu0 0
        %1030 = vmatpush1.bf16.msra.mxu0 0
        %1031 = vmatprep.subr.bf16.mxu0 0
        %1032 = vmatpush1.bf16.msra.mxu0 0
        %1033 = vmatprep.mubr.bf16.mxu0 0
        %1034 = vmatmul.mubr.bf16.gmra.mrb[0].mxu0 %v996
        %v1035 = vpop.f32.mrb[0].mxu0
        %v1036 = vadd.f32 0.0, %v1035
        %v1037 = vpop.f32.mrb[0].mxu0
        %v1038 = vpop.f32.mrb[0].mxu0
        %v1039 = vpop.f32.mrb[0].mxu0
        %1040 = vdwg.mxu0
        %1042 = vrot.lane.b32.xlu0 %v816, 8
        %v1043 = vpop.permute.xlu0 %1042
        %1046 = vrot.lane.b32.xlu0 %v926, 16
        %v1047 = vpop.permute.xlu0 %1046
        %1050 = vrot.lane.b32.xlu0 %v1036, 24
        %v1051 = vpop.permute.xlu0 %1050
        %v1053 = vsel %vm603, %v706, %v1043
        %vm1054 = vcmask 130048
        %v1055 = vsel %vm1054, %v1053, %v1047
        %vm1056 = vcmask 195584
        %v1057 = vsel %vm1056, %v1055, %v1051
        %v1058 = vpack.c.bf16 %v1057, %v1057
        %vm1059 = vcmask 257024
        %1060 = vst.msk [vmem:[#allocation2] sm:$0xf] %vm1059, %v1058
        %v1061 = vld [vmem:[#allocation2] sm:$0xf]
        %v1062 = vld [vmem:[%s5] sm:$0xf]
        %v1063 = vld [vmem:[%s5 + $0x4] sm:$0xf]
        %v1064 = vld [vmem:[%s5 + $0x8] sm:$0xf]
        %v1065 = vld [vmem:[%s5 + $0xc] sm:$0xf]
        %v1066 = vld [vmem:[%s6] sm:$0x1]
        %v1067 = vunpack.c.l.bf16 %v1066
        %v1068 = vlaneseq
        %v1069 = vshrl.u32 %v1068, 7
        %v1070 = vsub.s32 0, %v1069
        %v1071 = vrot.slane %v1067, %v1070
        %v1076 = vunpack.c.l.b16 %v1062
        %v1077 = vunpack.c.l.b16 %v1063
        %v1078 = vunpack.c.l.b16 %v1064
        %v1079 = vunpack.c.l.b16 %v1065
        %v1080 = vpack.c.b16 %v1077, %v1076
        %v1081 = vpack.c.b16 %v1079, %v1078
        %v1085 = vsel %vm551, %v1061, 0
        %1087 = vmatprep.subr.bf16.mxu0 0
        %1088 = vmatpush1.bf16.msra.mxu0 %v1080
        %1089 = vmatprep.subr.bf16.mxu0 0
        %1090 = vmatpush1.bf16.msra.mxu0 %v1081
        %1091 = vmatprep.subr.bf16.mxu0 0
        %1092 = vmatpush1.bf16.msra.mxu0 0
        %1093 = vmatprep.subr.bf16.mxu0 0
        %1094 = vmatpush1.bf16.msra.mxu0 0
        %1095 = vmatprep.subr.bf16.mxu0 0
        %1096 = vmatpush1.bf16.msra.mxu0 0
        %1097 = vmatprep.subr.bf16.mxu0 0
        %1098 = vmatpush1.bf16.msra.mxu0 0
        %1099 = vmatprep.subr.bf16.mxu0 0
        %1100 = vmatpush1.bf16.msra.mxu0 0
        %1101 = vmatprep.subr.bf16.mxu0 0
        %1102 = vmatpush1.bf16.msra.mxu0 0
        %1103 = vmatprep.subr.bf16.mxu0 0
        %1104 = vmatpush1.bf16.msra.mxu0 0
        %1105 = vmatprep.subr.bf16.mxu0 0
        %1106 = vmatpush1.bf16.msra.mxu0 0
        %1107 = vmatprep.subr.bf16.mxu0 0
        %1108 = vmatpush1.bf16.msra.mxu0 0
        %1109 = vmatprep.subr.bf16.mxu0 0
        %1110 = vmatpush1.bf16.msra.mxu0 0
        %1111 = vmatprep.subr.bf16.mxu0 0
        %1112 = vmatpush1.bf16.msra.mxu0 0
        %1113 = vmatprep.subr.bf16.mxu0 0
        %1114 = vmatpush1.bf16.msra.mxu0 0
        %1115 = vmatprep.subr.bf16.mxu0 0
        %1116 = vmatpush1.bf16.msra.mxu0 0
        %1117 = vmatprep.subr.bf16.mxu0 0
        %1118 = vmatpush1.bf16.msra.mxu0 0
        %1119 = vmatprep.mubr.bf16.mxu0 0
        %1120 = vmatmul.mubr.bf16.gmra.mrb[0].mxu0 %v1085
        %v1121 = vpop.f32.mrb[0].mxu0
        %v1122 = vadd.f32 %v1071, %v1121
        %v1123 = vpop.f32.mrb[0].mxu0
        %v1124 = vpop.f32.mrb[0].mxu0
        %v1125 = vpop.f32.mrb[0].mxu0
        %1126 = vdwg.mxu0
        %v1127 = vunpack.c.l.bf16 %v522
        %v1128 = vadd.f32 %v1127, %v1122
        %v1129 = vsel %vm551, %v1128, 0.0
        %1130 = vadd.xlane.f32.xlu0 %v1129
        %v1131 = vpop.xlane.xlu0 %1130
        %v1132 = vrcp.pop 32.0
        %v1133 = vmul.f32 %v1131, %v1132
        %v1134 = vsub.f32 %v1128, %v1133
        %v1135 = vmul.f32 %v1134, %v1134
        %v1136 = vsel %vm551, %v1135, 0.0
        %1137 = vadd.xlane.f32.xlu0 %v1136
        %v1138 = vpop.xlane.xlu0 %1137
        %v1139 = vmul.f32 %v1138, %v1132
        %v1140 = vadd.f32 %v1139, 1e-12
        %v1141 = vrsqrt.pop %v1140
        %v1142 = vmul.f32 %v1134, %v1141
        %v1143 = vld [vmem:[%s7] sm:$0x1]
        %v1144 = vunpack.c.l.bf16 %v1143
        %v1145 = vlaneseq
        %v1146 = vshrl.u32 %v1145, 7
        %v1147 = vsub.s32 0, %v1146
        %v1148 = vrot.slane %v1144, %v1147
        %v1149 = vmul.f32 %v1142, %v1148
        %v1150 = vld [vmem:[%s8] sm:$0x1]
        %v1151 = vunpack.c.l.bf16 %v1150
        %v1152 = vlaneseq
        %v1153 = vshrl.u32 %v1152, 7
        %v1154 = vsub.s32 0, %v1153
        %v1155 = vrot.slane %v1151, %v1154
        %v1156 = vadd.f32 %v1149, %v1155
        %v1157 = vpack.c.bf16 %v1156, %v1156
        %v1158 = vld [vmem:[%s9] sm:$0xf]
        %v1159 = vld [vmem:[%s9 + $0x4] sm:$0xf]
        %v1160 = vld [vmem:[%s9 + $0x8] sm:$0xf]
        %v1161 = vld [vmem:[%s9 + $0xc] sm:$0xf]
        %v1162 = vld [vmem:[%s10] sm:$0x1]
        %v1163 = vunpack.c.l.bf16 %v1162
        %v1164 = vlaneseq
        %v1165 = vshrl.u32 %v1164, 7
        %v1166 = vsub.s32 0, %v1165
        %v1167 = vrot.slane %v1163, %v1166
        %v1172 = vunpack.c.l.b16 %v1158
        %v1173 = vunpack.c.l.b16 %v1159
        %v1174 = vunpack.c.l.b16 %v1160
        %v1175 = vunpack.c.l.b16 %v1161
        %v1176 = vpack.c.b16 %v1173, %v1172
        %v1177 = vpack.c.b16 %v1175, %v1174
        %v1181 = vsel %vm551, %v1157, 0
        %1183 = vmatprep.subr.bf16.mxu0 0
        %1184 = vmatpush1.bf16.msra.mxu0 %v1176
        %1185 = vmatprep.subr.bf16.mxu0 0
        %1186 = vmatpush1.bf16.msra.mxu0 %v1177
        %1187 = vmatprep.subr.bf16.mxu0 0
        %1188 = vmatpush1.bf16.msra.mxu0 0
        %1189 = vmatprep.subr.bf16.mxu0 0
        %1190 = vmatpush1.bf16.msra.mxu0 0
        %1191 = vmatprep.subr.bf16.mxu0 0
        %1192 = vmatpush1.bf16.msra.mxu0 0
        %1193 = vmatprep.subr.bf16.mxu0 0
        %1194 = vmatpush1.bf16.msra.mxu0 0
        %1195 = vmatprep.subr.bf16.mxu0 0
        %1196 = vmatpush1.bf16.msra.mxu0 0
        %1197 = vmatprep.subr.bf16.mxu0 0
        %1198 = vmatpush1.bf16.msra.mxu0 0
        %1199 = vmatprep.subr.bf16.mxu0 0
        %1200 = vmatpush1.bf16.msra.mxu0 0
        %1201 = vmatprep.subr.bf16.mxu0 0
        %1202 = vmatpush1.bf16.msra.mxu0 0
        %1203 = vmatprep.subr.bf16.mxu0 0
        %1204 = vmatpush1.bf16.msra.mxu0 0
        %1205 = vmatprep.subr.bf16.mxu0 0
        %1206 = vmatpush1.bf16.msra.mxu0 0
        %1207 = vmatprep.subr.bf16.mxu0 0
        %1208 = vmatpush1.bf16.msra.mxu0 0
        %1209 = vmatprep.subr.bf16.mxu0 0
        %1210 = vmatpush1.bf16.msra.mxu0 0
        %1211 = vmatprep.subr.bf16.mxu0 0
        %1212 = vmatpush1.bf16.msra.mxu0 0
        %1213 = vmatprep.subr.bf16.mxu0 0
        %1214 = vmatpush1.bf16.msra.mxu0 0
        %1215 = vmatprep.mubr.bf16.mxu0 0
        %1216 = vmatmul.mubr.bf16.gmra.mrb[0].mxu0 %v1181
        %v1217 = vpop.f32.mrb[0].mxu0
        %v1218 = vadd.f32 %v1167, %v1217
        %v1219 = vpop.f32.mrb[0].mxu0
        %v1220 = vpop.f32.mrb[0].mxu0
        %v1221 = vpop.f32.mrb[0].mxu0
        %1222 = vdwg.mxu0
        %v1223 = vmul.f32 %v1218, %v1218
        %v1224 = vmul.f32 %v1218, %v1223
        %v1225 = vmul.f32 %v1224, 0.044715
        %v1226 = vadd.f32 %v1218, %v1225
        %v1227 = vmul.f32 %v1226, 0.7978846
        %v1228 = vtanh.pop %v1227
        %v1229 = vadd.f32 %v1228, 1.0
        %v1230 = vmul.f32 %v1229, 0.5
        %v1231 = vmul.f32 %v1218, %v1230
        %v1232 = vpack.c.bf16 %v1231, %v1231
        %v1233 = vld [vmem:[%s11] sm:$0xf]
        %v1234 = vld [vmem:[%s11 + $0x4] sm:$0xf]
        %v1235 = vld [vmem:[%s11 + $0x8] sm:$0xf]
        %v1236 = vld [vmem:[%s11 + $0xc] sm:$0xf]
        %v1237 = vld [vmem:[%s11 + $0x10] sm:$0xf]
        %v1238 = vld [vmem:[%s11 + $0x14] sm:$0xf]
        %v1239 = vld [vmem:[%s11 + $0x18] sm:$0xf]
        %v1240 = vld [vmem:[%s11 + $0x1c] sm:$0xf]
        %v1241 = vld [vmem:[%s11 + $0x20] sm:$0xf]
        %v1242 = vld [vmem:[%s11 + $0x24] sm:$0xf]
        %v1243 = vld [vmem:[%s11 + $0x28] sm:$0xf]
        %v1244 = vld [vmem:[%s11 + $0x2c] sm:$0xf]
        %v1245 = vld [vmem:[%s11 + $0x30] sm:$0xf]
        %v1246 = vld [vmem:[%s11 + $0x34] sm:$0xf]
        %v1247 = vld [vmem:[%s11 + $0x38] sm:$0xf]
        %v1248 = vld [vmem:[%s11 + $0x3c] sm:$0xf]
        %v1249 = vld [vmem:[%s12] sm:$0x1]
        %v1250 = vunpack.c.l.bf16 %v1249
        %v1251 = vlaneseq
        %v1252 = vshrl.u32 %v1251, 7
        %v1253 = vsub.s32 0, %v1252
        %v1254 = vrot.slane %v1250, %v1253
        %v1271 = vunpack.c.l.b16 %v1233
        %v1272 = vunpack.c.l.b16 %v1234
        %v1273 = vunpack.c.l.b16 %v1235
        %v1274 = vunpack.c.l.b16 %v1236
        %v1275 = vunpack.c.l.b16 %v1237
        %v1276 = vunpack.c.l.b16 %v1238
        %v1277 = vunpack.c.l.b16 %v1239
        %v1278 = vunpack.c.l.b16 %v1240
        %v1279 = vunpack.c.l.b16 %v1241
        %v1280 = vunpack.c.l.b16 %v1242
        %v1281 = vunpack.c.l.b16 %v1243
        %v1282 = vunpack.c.l.b16 %v1244
        %v1283 = vunpack.c.l.b16 %v1245
        %v1284 = vunpack.c.l.b16 %v1246
        %v1285 = vunpack.c.l.b16 %v1247
        %v1286 = vunpack.c.l.b16 %v1248
        %v1287 = vpack.c.b16 %v1272, %v1271
        %v1288 = vpack.c.b16 %v1274, %v1273
        %v1289 = vpack.c.b16 %v1276, %v1275
        %v1290 = vpack.c.b16 %v1278, %v1277
        %v1291 = vpack.c.b16 %v1280, %v1279
        %v1292 = vpack.c.b16 %v1282, %v1281
        %v1293 = vpack.c.b16 %v1284, %v1283
        %v1294 = vpack.c.b16 %v1286, %v1285
        %1303 = vmatprep.subr.bf16.mxu0 0
        %1304 = vmatpush1.bf16.msra.mxu0 %v1287
        %1305 = vmatprep.subr.bf16.mxu0 0
        %1306 = vmatpush1.bf16.msra.mxu0 %v1288
        %1307 = vmatprep.subr.bf16.mxu0 0
        %1308 = vmatpush1.bf16.msra.mxu0 %v1289
        %1309 = vmatprep.subr.bf16.mxu0 0
        %1310 = vmatpush1.bf16.msra.mxu0 %v1290
        %1311 = vmatprep.subr.bf16.mxu0 0
        %1312 = vmatpush1.bf16.msra.mxu0 %v1291
        %1313 = vmatprep.subr.bf16.mxu0 0
        %1314 = vmatpush1.bf16.msra.mxu0 %v1292
        %1315 = vmatprep.subr.bf16.mxu0 0
        %1316 = vmatpush1.bf16.msra.mxu0 %v1293
        %1317 = vmatprep.subr.bf16.mxu0 0
        %1318 = vmatpush1.bf16.msra.mxu0 %v1294
        %1319 = vmatprep.subr.bf16.mxu0 0
        %1320 = vmatpush1.bf16.msra.mxu0 0
        %1321 = vmatprep.subr.bf16.mxu0 0
        %1322 = vmatpush1.bf16.msra.mxu0 0
        %1323 = vmatprep.subr.bf16.mxu0 0
        %1324 = vmatpush1.bf16.msra.mxu0 0
        %1325 = vmatprep.subr.bf16.mxu0 0
        %1326 = vmatpush1.bf16.msra.mxu0 0
        %1327 = vmatprep.subr.bf16.mxu0 0
        %1328 = vmatpush1.bf16.msra.mxu0 0
        %1329 = vmatprep.subr.bf16.mxu0 0
        %1330 = vmatpush1.bf16.msra.mxu0 0
        %1331 = vmatprep.subr.bf16.mxu0 0
        %1332 = vmatpush1.bf16.msra.mxu0 0
        %1333 = vmatprep.subr.bf16.mxu0 0
        %1334 = vmatpush1.bf16.msra.mxu0 0
        %1335 = vmatprep.mubr.bf16.mxu0 0
        %1336 = vmatmul.mubr.bf16.gmra.mrb[0].mxu0 %v1232
        %v1337 = vpop.f32.mrb[0].mxu0
        %v1338 = vadd.f32 %v1254, %v1337
        %v1339 = vpop.f32.mrb[0].mxu0
        %v1340 = vpop.f32.mrb[0].mxu0
        %v1341 = vpop.f32.mrb[0].mxu0
        %1342 = vdwg.mxu0
        %v1343 = vadd.f32 %v1156, %v1338
        %v1344 = vsel %vm551, %v1343, 0.0
        %1345 = vadd.xlane.f32.xlu0 %v1344
        %v1346 = vpop.xlane.xlu0 %1345
        %v1347 = vmul.f32 %v1346, %v1132
        %v1348 = vsub.f32 %v1343, %v1347
        %v1349 = vmul.f32 %v1348, %v1348
        %v1350 = vsel %vm551, %v1349, 0.0
        %1351 = vadd.xlane.f32.xlu0 %v1350
        %v1352 = vpop.xlane.xlu0 %1351
        %v1353 = vmul.f32 %v1352, %v1132
        %v1354 = vadd.f32 %v1353, 1e-12
        %v1355 = vrsqrt.pop %v1354
        %v1356 = vmul.f32 %v1348, %v1355
        %v1357 = vld [vmem:[%s13] sm:$0x1]
        %v1358 = vunpack.c.l.bf16 %v1357
        %v1359 = vlaneseq
        %v1360 = vshrl.u32 %v1359, 7
        %v1361 = vsub.s32 0, %v1360
        %v1362 = vrot.slane %v1358, %v1361
        %v1363 = vmul.f32 %v1356, %v1362
        %v1364 = vld [vmem:[%s14] sm:$0x1]
        %v1365 = vunpack.c.l.bf16 %v1364
        %v1366 = vlaneseq
        %v1367 = vshrl.u32 %v1366, 7
        %v1368 = vsub.s32 0, %v1367
        %v1369 = vrot.slane %v1365, %v1368
        %v1370 = vadd.f32 %v1363, %v1369
        %1372 = vset.pattern.permute.xlu0 0
        %1373 = vperm.xlu0 %1372, %v526
        %v1374 = vpop.permute.xlu0 %1373
        %v1376 = vmul.f32 %v1370, %v1374
        %v1377 = vpack.c.bf16 %v1376, %v1376
        %1378 = vst.msk [vmem:[%s509] sm:$0xf] %vm1059, %v1377
        %s1379 = sand.u32 %s367, 1
        %s1380 = scalar_lea.sflag [#allocation4], %s1379
        %s1381 = sand.u32 %s367, 1
        %s1382 = smul.addr %s1381, 4
        %s1383 = scalar_lea.vmem [#allocation3], %s1382
        // Predicated region
        $region81: #{tpu_custom_call.1} parent=79 // pred_check
          %p1384 = pneg %p377
        $region82: #{tpu_custom_call.1} parent=79 // pred_check_branch
          %1386 = sbr.rel (%p1384) target = $region84
        $region83: #{tpu_custom_call.1} parent=79 // pred_region
          %s1388 = ssub.s32 64, 64
          %1389 = vsyncadd %s1380, %s1388
          %s1390 = smul.addr %s29, 64
          %s1391 = scalar_lea.hbm %s15, %s1390
          %s1393 = sshll.u32 %s1383, 4
          %s1394 = int_to_ptr.vmem [resolvable:$true] %s1393
          %1396 = dma.vmem_to_hbm [thread:$0]  %s1394, 64, %s1391, %s1380
        $region84: #{tpu_custom_call.1} parent=79 // pred_fallthru
          _
      $region80: #{tpu_custom_call.1} parent=5 // pred_fallthru
        _
      %p1397 = scmp.le.s32.totalorder 2, %s24
      // Predicated region
      $region85: #{tpu_custom_call.1} parent=5 // pred_check
        %p1398 = pneg %p1397
      $region86: #{tpu_custom_call.1} parent=5 // pred_check_branch
        %1400 = sbr.rel (%p1398) target = $region88
      $region87: #{tpu_custom_call.1} parent=5 // pred_region
        %s1401 = ssub.s32 %s24, 2
        // Predicated region
        $region89: #{tpu_custom_call.1} parent=87 // pred_check
          %p1402 = pneg %p383
        $region90: #{tpu_custom_call.1} parent=87 // pred_check_branch
          %1404 = sbr.rel (%p1402) target = $region92
        $region91: #{tpu_custom_call.1} parent=87 // pred_region
          %s1405 = sand.u32 %s368, 1
          %s1406 = scalar_lea.sflag [#allocation4], %s1405
          %s1407 = sand.u32 %s368, 1
          %s1408 = smul.addr %s1407, 4
          %s1409 = scalar_lea.vmem [#allocation3], %s1408
          %1410 = dma.done %s1406, 64
        $region92: #{tpu_custom_call.1} parent=87 // pred_fallthru
          _
      $region88: #{tpu_custom_call.1} parent=5 // pred_fallthru
        _
    $region6: #{tpu_custom_call.1} parent=1 // loop_footer
      %s28 = sadd.s32 1, %s24
    $region7: #{tpu_custom_call.1} parent=1 // loop_footer_branch
      %23 = sbr.rel target = $region3
    $region8: #{tpu_custom_call.1} parent=1 // loop_exit
      _
    %1411 = vsyncpa [#allocation4], 1
    %s1412 = scalar_lea.sflag [#allocation4], 1
    %1413 = vsyncpa %s1412, 1

// kernel: tpu_custom_call.1
$region0: #{tpu_custom_call.1}
  #allocation0 [shape = 'u32[]', space=smem, size = 0x4, offset = 0x4, fixed_abs, tag = 'smem constant byte address 0x4 - core index']
  #allocation1 [shape = 'u32[144,128]{1,0:T(1,128)}', space=vmem, size = 0x12000, scoped, tag = 'internal scratch']
  #allocation2 [shape = 'bf16[8,32]{1,0:T(8,128)(2,1)}', space=vmem, size = 0x800, scoped, tag = 'scratch operand']
  %s0 = inlined_call_operand.vmem [shape: bf16[2,8,32], index: 0, kind: input, shape index: {}]
  %s1 = inlined_call_operand.vmem [shape: bf16[2,1,8], index: 1, kind: input, shape index: {}]
  %s2 = inlined_call_operand.vmem [shape: bf16[2,8,1], index: 2, kind: input, shape index: {}]
  %s3 = inlined_call_operand.vmem [shape: bf16[32,96], index: 3, kind: input, shape index: {}]
  %s4 = inlined_call_operand.vmem [shape: bf16[1,96], index: 4, kind: input, shape index: {}]
  %s5 = inlined_call_operand.vmem [shape: bf16[32,32], index: 5, kind: input, shape index: {}]
  %s6 = inlined_call_operand.vmem [shape: bf16[1,32], index: 6, kind: input, shape index: {}]
  %s7 = inlined_call_operand.vmem [shape: bf16[1,32], index: 7, kind: input, shape index: {}]
  %s8 = inlined_call_operand.vmem [shape: bf16[1,32], index: 8, kind: input, shape index: {}]
  %s9 = inlined_call_operand.vmem [shape: bf16[32,128], index: 9, kind: input, shape index: {}]
  %s10 = inlined_call_operand.vmem [shape: bf16[1,128], index: 10, kind: input, shape index: {}]
  %s11 = inlined_call_operand.vmem [shape: bf16[128,32], index: 11, kind: input, shape index: {}]
  %s12 = inlined_call_operand.vmem [shape: bf16[1,32], index: 12, kind: input, shape index: {}]
  %s13 = inlined_call_operand.vmem [shape: bf16[1,32], index: 13, kind: input, shape index: {}]
  %s14 = inlined_call_operand.vmem [shape: bf16[1,32], index: 14, kind: input, shape index: {}]
  %s15 = inlined_call_operand.hbm [shape: bf16[2,8,32], index: 15, kind: output, shape index: {}]
  %s16 = sld [smem:[#allocation0]]
  $region93: #{tpu_custom_call.1} parent=0
    _
  %s18 = ssub.s32 1, %s16
  %s19 = scalar_select 0, %s18, %s16
  $region1: #{tpu_custom_call.1} parent=0
    #allocation3 [shape = 'u8[4096]{0}', space=vmem, size = 0x1000, scoped, tag = 'output window, operand 0']
    #allocation4 [shape = 's32[2]{0}', space=sflag, size = 0x8, scoped, tag = 'scoped memory for tpu_custom_call.1']
    %20 = vsyncpa [#allocation4], 0
    %s21 = scalar_lea.sflag [#allocation4], 1
    %22 = vsyncpa %s21, 0
    loop: start=0, step=1, limit=4
    $region2: #{tpu_custom_call.1} parent=1 // loop_pre_header
      _
    $region3: #{tpu_custom_call.1} parent=1 // loop_header
      %s24 = sphi 0, %s28
      %p25 = scmp.ge.s32.totalorder %s24, 4
      %s34 = sphi 0, %s36
      %s37 = sphi 0, %s34
      %s38 = sphi 0, %s37
      %s54 = sphi 0, %s38
      %s60 = sphi 0, %s62
      %s63 = sphi 0, %s60
      %s64 = sphi 0, %s63
      %s80 = sphi 0, %s64
      %s86 = sphi 0, %s88
      %s89 = sphi 0, %s86
      %s90 = sphi 0, %s89
      %s106 = sphi 0, %s90
      %s110 = sphi 0, %s110
      %s112 = sphi 0, %s110
      %s113 = sphi 0, %s112
      %s127 = sphi 0, %s113
      %s131 = sphi 0, %s131
      %s133 = sphi 0, %s131
      %s134 = sphi 0, %s133
      %s148 = sphi 0, %s134
      %s152 = sphi 0, %s152
      %s154 = sphi 0, %s152
      %s155 = sphi 0, %s154
      %s169 = sphi 0, %s155
      %s173 = sphi 0, %s173
      %s175 = sphi 0, %s173
      %s176 = sphi 0, %s175
      %s190 = sphi 0, %s176
      %s194 = sphi 0, %s194
      %s196 = sphi 0, %s194
      %s197 = sphi 0, %s196
      %s211 = sphi 0, %s197
      %s215 = sphi 0, %s215
      %s217 = sphi 0, %s215
      %s218 = sphi 0, %s217
      %s232 = sphi 0, %s218
      %s236 = sphi 0, %s236
      %s238 = sphi 0, %s236
      %s239 = sphi 0, %s238
      %s253 = sphi 0, %s239
      %s257 = sphi 0, %s257
      %s259 = sphi 0, %s257
      %s260 = sphi 0, %s259
      %s274 = sphi 0, %s260
      %s278 = sphi 0, %s278
      %s280 = sphi 0, %s278
      %s281 = sphi 0, %s280
      %s295 = sphi 0, %s281
      %s299 = sphi 0, %s299
      %s301 = sphi 0, %s299
      %s302 = sphi 0, %s301
      %s316 = sphi 0, %s302
      %s320 = sphi 0, %s320
      %s322 = sphi 0, %s320
      %s323 = sphi 0, %s322
      %s337 = sphi 0, %s323
      %s341 = sphi 0, %s341
      %s343 = sphi 0, %s341
      %s344 = sphi 0, %s343
      %s358 = sphi 0, %s344
      %s364 = sphi 0, %s366
      %s367 = sphi 0, %s364
      %s368 = sphi 0, %s367
      %s384 = sphi 0, %s368
    $region4: #{tpu_custom_call.1} parent=1 // loop_header_branch
      %27 = sbr.rel (%p25) target = $region8
    $region5: #{tpu_custom_call.1} parent=1 // loop_body
      %s29 = ssub.s32 %s24, 1
      %s30 = ssub.s32 %s24, 2
      %s31 = sadd.s32 %s24, 1
      %s32 = ssub.s32 %s24, %s31
      %p33 = scmp.eq.s32.totalorder %s32, 0
      %s35 = sadd.s32 %s34, 1
      %s36 = scalar_select %p33, %s34, %s35
      %p39 = pneg %p33
      %p40 = scmp.eq.s32.totalorder %s24, 1
      %p41 = por %p39, %p40
      %p42 = scmp.ne.s32.totalorder %s34, %s37
      %p43 = scmp.eq.s32.totalorder %s24, 0
      %p44 = por %p42, %p43
      %p45 = scmp.ne.s32.totalorder %s34, %s37
      %p46 = scmp.eq.s32.totalorder %s29, 1
      %p47 = por %p45, %p46
      %p48 = scmp.ne.s32.totalorder %s37, %s38
      %p49 = scmp.eq.s32.totalorder %s29, 0
      %p50 = por %p48, %p49
      %p51 = scmp.ne.s32.totalorder %s37, %s38
      %p52 = scmp.eq.s32.totalorder %s30, 1
      %p53 = por %p51, %p52
      %p55 = scmp.ne.s32.totalorder %s38, %s54
      %p56 = scmp.eq.s32.totalorder %s30, 0
      %p57 = por %p55, %p56
      %s58 = ssub.s32 %s24, %s31
      %p59 = scmp.eq.s32.totalorder %s58, 0
      %s61 = sadd.s32 %s60, 1
      %s62 = scalar_select %p59, %s60, %s61
      %p65 = pneg %p59
      %p66 = scmp.eq.s32.totalorder %s24, 1
      %p67 = por %p65, %p66
      %p68 = scmp.ne.s32.totalorder %s60, %s63
      %p69 = scmp.eq.s32.totalorder %s24, 0
      %p70 = por %p68, %p69
      %p71 = scmp.ne.s32.totalorder %s60, %s63
      %p72 = scmp.eq.s32.totalorder %s29, 1
      %p73 = por %p71, %p72
      %p74 = scmp.ne.s32.totalorder %s63, %s64
      %p75 = scmp.eq.s32.totalorder %s29, 0
      %p76 = por %p74, %p75
      %p77 = scmp.ne.s32.totalorder %s63, %s64
      %p78 = scmp.eq.s32.totalorder %s30, 1
      %p79 = por %p77, %p78
      %p81 = scmp.ne.s32.totalorder %s64, %s80
      %p82 = scmp.eq.s32.totalorder %s30, 0
      %p83 = por %p81, %p82
      %s84 = ssub.s32 %s24, %s31
      %p85 = scmp.eq.s32.totalorder %s84, 0
      %s87 = sadd.s32 %s86, 1
      %s88 = scalar_select %p85, %s86, %s87
      %p91 = pneg %p85
      %p92 = scmp.eq.s32.totalorder %s24, 1
      %p93 = por %p91, %p92
      %p94 = scmp.ne.s32.totalorder %s86, %s89
      %p95 = scmp.eq.s32.totalorder %s24, 0
      %p96 = por %p94, %p95
      %p97 = scmp.ne.s32.totalorder %s86, %s89
      %p98 = scmp.eq.s32.totalorder %s29, 1
      %p99 = por %p97, %p98
      %p100 = scmp.ne.s32.totalorder %s89, %s90
      %p101 = scmp.eq.s32.totalorder %s29, 0
      %p102 = por %p100, %p101
      %p103 = scmp.ne.s32.totalorder %s89, %s90
      %p104 = scmp.eq.s32.totalorder %s30, 1
      %p105 = por %p103, %p104
      %p107 = scmp.ne.s32.totalorder %s90, %s106
      %p108 = scmp.eq.s32.totalorder %s30, 0
      %p109 = por %p107, %p108
      %s111 = sadd.s32 %s110, 1
      %p114 = scmp.eq.s32.totalorder %s24, 1
      %p115 = scmp.ne.s32.totalorder %s110, %s112
      %p116 = scmp.eq.s32.totalorder %s24, 0
      %p117 = por %p115, %p116
      %p118 = scmp.ne.s32.totalorder %s110, %s112
      %p119 = scmp.eq.s32.totalorder %s29, 1
      %p120 = por %p118, %p119
      %p121 = scmp.ne.s32.totalorder %s112, %s113
      %p122 = scmp.eq.s32.totalorder %s29, 0
      %p123 = por %p121, %p122
      %p124 = scmp.ne.s32.totalorder %s112, %s113
      %p125 = scmp.eq.s32.totalorder %s30, 1
      %p126 = por %p124, %p125
      %p128 = scmp.ne.s32.totalorder %s113, %s127
      %p129 = scmp.eq.s32.totalorder %s30, 0
      %p130 = por %p128, %p129
      %s132 = sadd.s32 %s131, 1
      %p135 = scmp.eq.s32.totalorder %s24, 1
      %p136 = scmp.ne.s32.totalorder %s131, %s133
      %p137 = scmp.eq.s32.totalorder %s24, 0
      %p138 = por %p136, %p137
      %p139 = scmp.ne.s32.totalorder %s131, %s133
      %p140 = scmp.eq.s32.totalorder %s29, 1
      %p141 = por %p139, %p140
      %p142 = scmp.ne.s32.totalorder %s133, %s134
      %p143 = scmp.eq.s32.totalorder %s29, 0
      %p144 = por %p142, %p143
      %p145 = scmp.ne.s32.totalorder %s133, %s134
      %p146 = scmp.eq.s32.totalorder %s30, 1
      %p147 = por %p145, %p146
      %p149 = scmp.ne.s32.totalorder %s134, %s148
      %p150 = scmp.eq.s32.totalorder %s30, 0
      %p151 = por %p149, %p150
      %s153 = sadd.s32 %s152, 1
      %p156 = scmp.eq.s32.totalorder %s24, 1
      %p157 = scmp.ne.s32.totalorder %s152, %s154
      %p158 = scmp.eq.s32.totalorder %s24, 0
      %p159 = por %p157, %p158
      %p160 = scmp.ne.s32.totalorder %s152, %s154
      %p161 = scmp.eq.s32.totalorder %s29, 1
      %p162 = por %p160, %p161
      %p163 = scmp.ne.s32.totalorder %s154, %s155
      %p164 = scmp.eq.s32.totalorder %s29, 0
      %p165 = por %p163, %p164
      %p166 = scmp.ne.s32.totalorder %s154, %s155
      %p167 = scmp.eq.s32.totalorder %s30, 1
      %p168 = por %p166, %p167
      %p170 = scmp.ne.s32.totalorder %s155, %s169
      %p171 = scmp.eq.s32.totalorder %s30, 0
      %p172 = por %p170, %p171
      %s174 = sadd.s32 %s173, 1
      %p177 = scmp.eq.s32.totalorder %s24, 1
      %p178 = scmp.ne.s32.totalorder %s173, %s175
      %p179 = scmp.eq.s32.totalorder %s24, 0
      %p180 = por %p178, %p179
      %p181 = scmp.ne.s32.totalorder %s173, %s175
      %p182 = scmp.eq.s32.totalorder %s29, 1
      %p183 = por %p181, %p182
      %p184 = scmp.ne.s32.totalorder %s175, %s176
      %p185 = scmp.eq.s32.totalorder %s29, 0
      %p186 = por %p184, %p185
      %p187 = scmp.ne.s32.totalorder %s175, %s176
      %p188 = scmp.eq.s32.totalorder %s30, 1
      %p189 = por %p187, %p188
      %p191 = scmp.ne.s32.totalorder %s176, %s190
      %p192 = scmp.eq.s32.totalorder %s30, 0
      %p193 = por %p191, %p192
      %s195 = sadd.s32 %s194, 1
      %p198 = scmp.eq.s32.totalorder %s24, 1
      %p199 = scmp.ne.s32.totalorder %s194, %s196
      %p200 = scmp.eq.s32.totalorder %s24, 0
      %p201 = por %p199, %p200
      %p202 = scmp.ne.s32.totalorder %s194, %s196
      %p203 = scmp.eq.s32.totalorder %s29, 1
      %p204 = por %p202, %p203
      %p205 = scmp.ne.s32.totalorder %s196, %s197
      %p206 = scmp.eq.s32.totalorder %s29, 0
      %p207 = por %p205, %p206
      %p208 = scmp.ne.s32.totalorder %s196, %s197
      %p209 = scmp.eq.s32.totalorder %s30, 1
      %p210 = por %p208, %p209
      %p212 = scmp.ne.s32.totalorder %s197, %s211
      %p213 = scmp.eq.s32.totalorder %s30, 0
      %p214 = por %p212, %p213
      %s216 = sadd.s32 %s215, 1
      %p219 = scmp.eq.s32.totalorder %s24, 1
      %p220 = scmp.ne.s32.totalorder %s215, %s217
      %p221 = scmp.eq.s32.totalorder %s24, 0
      %p222 = por %p220, %p221
      %p223 = scmp.ne.s32.totalorder %s215, %s217
      %p224 = scmp.eq.s32.totalorder %s29, 1
      %p225 = por %p223, %p224
      %p226 = scmp.ne.s32.totalorder %s217, %s218
      %p227 = scmp.eq.s32.totalorder %s29, 0
      %p228 = por %p226, %p227
      %p229 = scmp.ne.s32.totalorder %s217, %s218
      %p230 = scmp.eq.s32.totalorder %s30, 1
      %p231 = por %p229, %p230
      %p233 = scmp.ne.s32.totalorder %s218, %s232
      %p234 = scmp.eq.s32.totalorder %s30, 0
      %p235 = por %p233, %p234
      %s237 = sadd.s32 %s236, 1
      %p240 = scmp.eq.s32.totalorder %s24, 1
      %p241 = scmp.ne.s32.totalorder %s236, %s238
      %p242 = scmp.eq.s32.totalorder %s24, 0
      %p243 = por %p241, %p242
      %p244 = scmp.ne.s32.totalorder %s236, %s238
      %p245 = scmp.eq.s32.totalorder %s29, 1
      %p246 = por %p244, %p245
      %p247 = scmp.ne.s32.totalorder %s238, %s239
      %p248 = scmp.eq.s32.totalorder %s29, 0
      %p249 = por %p247, %p248
      %p250 = scmp.ne.s32.totalorder %s238, %s239
      %p251 = scmp.eq.s32.totalorder %s30, 1
      %p252 = por %p250, %p251
      %p254 = scmp.ne.s32.totalorder %s239, %s253
      %p255 = scmp.eq.s32.totalorder %s30, 0
      %p256 = por %p254, %p255
      %s258 = sadd.s32 %s257, 1
      %p261 = scmp.eq.s32.totalorder %s24, 1
      %p262 = scmp.ne.s32.totalorder %s257, %s259
      %p263 = scmp.eq.s32.totalorder %s24, 0
      %p264 = por %p262, %p263
      %p265 = scmp.ne.s32.totalorder %s257, %s259
      %p266 = scmp.eq.s32.totalorder %s29, 1
      %p267 = por %p265, %p266
      %p268 = scmp.ne.s32.totalorder %s259, %s260
      %p269 = scmp.eq.s32.totalorder %s29, 0
      %p270 = por %p268, %p269
      %p271 = scmp.ne.s32.totalorder %s259, %s260
      %p272 = scmp.eq.s32.totalorder %s30, 1
      %p273 = por %p271, %p272
      %p275 = scmp.ne.s32.totalorder %s260, %s274
      %p276 = scmp.eq.s32.totalorder %s30, 0
      %p277 = por %p275, %p276
      %s279 = sadd.s32 %s278, 1
      %p282 = scmp.eq.s32.totalorder %s24, 1
      %p283 = scmp.ne.s32.totalorder %s278, %s280
      %p284 = scmp.eq.s32.totalorder %s24, 0
      %p285 = por %p283, %p284
      %p286 = scmp.ne.s32.totalorder %s278, %s280
      %p287 = scmp.eq.s32.totalorder %s29, 1
      %p288 = por %p286, %p287
      %p289 = scmp.ne.s32.totalorder %s280, %s281
      %p290 = scmp.eq.s32.totalorder %s29, 0
      %p291 = por %p289, %p290
      %p292 = scmp.ne.s32.totalorder %s280, %s281
      %p293 = scmp.eq.s32.totalorder %s30, 1
      %p294 = por %p292, %p293
      %p296 = scmp.ne.s32.totalorder %s281, %s295
      %p297 = scmp.eq.s32.totalorder %s30, 0
      %p298 = por %p296, %p297
      %s300 = sadd.s32 %s299, 1
      %p303 = scmp.eq.s32.totalorder %s24, 1
      %p304 = scmp.ne.s32.totalorder %s299, %s301
      %p305 = scmp.eq.s32.totalorder %s24, 0
      %p306 = por %p304, %p305
      %p307 = scmp.ne.s32.totalorder %s299, %s301
      %p308 = scmp.eq.s32.totalorder %s29, 1
      %p309 = por %p307, %p308
      %p310 = scmp.ne.s32.totalorder %s301, %s302
      %p311 = scmp.eq.s32.totalorder %s29, 0
      %p312 = por %p310, %p311
      %p313 = scmp.ne.s32.totalorder %s301, %s302
      %p314 = scmp.eq.s32.totalorder %s30, 1
      %p315 = por %p313, %p314
      %p317 = scmp.ne.s32.totalorder %s302, %s316
      %p318 = scmp.eq.s32.totalorder %s30, 0
      %p319 = por %p317, %p318
      %s321 = sadd.s32 %s320, 1
      %p324 = scmp.eq.s32.totalorder %s24, 1
      %p325 = scmp.ne.s32.totalorder %s320, %s322
      %p326 = scmp.eq.s32.totalorder %s24, 0
      %p327 = por %p325, %p326
      %p328 = scmp.ne.s32.totalorder %s320, %s322
      %p329 = scmp.eq.s32.totalorder %s29, 1
      %p330 = por %p328, %p329
      %p331 = scmp.ne.s32.totalorder %s322, %s323
      %p332 = scmp.eq.s32.totalorder %s29, 0
      %p333 = por %p331, %p332
      %p334 = scmp.ne.s32.totalorder %s322, %s323
      %p335 = scmp.eq.s32.totalorder %s30, 1
      %p336 = por %p334, %p335
      %p338 = scmp.ne.s32.totalorder %s323, %s337
      %p339 = scmp.eq.s32.totalorder %s30, 0
      %p340 = por %p338, %p339
      %s342 = sadd.s32 %s341, 1
      %p345 = scmp.eq.s32.totalorder %s24, 1
      %p346 = scmp.ne.s32.totalorder %s341, %s343
      %p347 = scmp.eq.s32.totalorder %s24, 0
      %p348 = por %p346, %p347
      %p349 = scmp.ne.s32.totalorder %s341, %s343
      %p350 = scmp.eq.s32.totalorder %s29, 1
      %p351 = por %p349, %p350
      %p352 = scmp.ne.s32.totalorder %s343, %s344
      %p353 = scmp.eq.s32.totalorder %s29, 0
      %p354 = por %p352, %p353
      %p355 = scmp.ne.s32.totalorder %s343, %s344
      %p356 = scmp.eq.s32.totalorder %s30, 1
      %p357 = por %p355, %p356
      %p359 = scmp.ne.s32.totalorder %s344, %s358
      %p360 = scmp.eq.s32.totalorder %s30, 0
      %p361 = por %p359, %p360
      %s362 = ssub.s32 %s24, %s31
      %p363 = scmp.eq.s32.totalorder %s362, 0
      %s365 = sadd.s32 %s364, 1
      %s366 = scalar_select %p363, %s364, %s365
      %p369 = pneg %p363
      %p370 = scmp.eq.s32.totalorder %s24, 1
      %p371 = por %p369, %p370
      %p372 = scmp.ne.s32.totalorder %s364, %s367
      %p373 = scmp.eq.s32.totalorder %s24, 0
      %p374 = por %p372, %p373
      %p375 = scmp.ne.s32.totalorder %s364, %s367
      %p376 = scmp.eq.s32.totalorder %s29, 1
      %p377 = por %p375, %p376
      %p378 = scmp.ne.s32.totalorder %s367, %s368
      %p379 = scmp.eq.s32.totalorder %s29, 0
      %p380 = por %p378, %p379
      %p381 = scmp.ne.s32.totalorder %s367, %s368
      %p382 = scmp.eq.s32.totalorder %s30, 1
      %p383 = por %p381, %p382
      %p385 = scmp.ne.s32.totalorder %s368, %s384
      %p386 = scmp.eq.s32.totalorder %s30, 0
      %p387 = por %p385, %p386
      %p388 = scmp.le.s32.totalorder 1, %s24
      %p389 = scmp.lt.s32.totalorder %s24, 3
      %p390 = pnand %p388, %p389
      %p391 = pneg %p390
      // Predicated region
      $region9: #{tpu_custom_call.1} parent=5 // pred_check
        _
      $region10: #{tpu_custom_call.1} parent=5 // pred_check_branch
        %393 = sbr.rel (%p390) target = $region12
      $region11: #{tpu_custom_call.1} parent=5 // pred_region
        %s394 = ssub.s32 %s24, 1
        // Predicated region
        $region13: #{tpu_custom_call.1} parent=11 // pred_check
          %p395 = pneg %p123
        $region14: #{tpu_custom_call.1} parent=11 // pred_check_branch
          %397 = sbr.rel (%p395) target = $region16
        $region15: #{tpu_custom_call.1} parent=11 // pred_region
          _
        $region16: #{tpu_custom_call.1} parent=11 // pred_fallthru
          _
        // Predicated region
        $region17: #{tpu_custom_call.1} parent=11 // pred_check
          %p398 = pneg %p144
        $region18: #{tpu_custom_call.1} parent=11 // pred_check_branch
          %400 = sbr.rel (%p398) target = $region20
        $region19: #{tpu_custom_call.1} parent=11 // pred_region
          _
        $region20: #{tpu_custom_call.1} parent=11 // pred_fallthru
          _
        // Predicated region
        $region21: #{tpu_custom_call.1} parent=11 // pred_check
          %p401 = pneg %p165
        $region22: #{tpu_custom_call.1} parent=11 // pred_check_branch
          %403 = sbr.rel (%p401) target = $region24
        $region23: #{tpu_custom_call.1} parent=11 // pred_region
          _
        $region24: #{tpu_custom_call.1} parent=11 // pred_fallthru
          _
        // Predicated region
        $region25: #{tpu_custom_call.1} parent=11 // pred_check
          %p404 = pneg %p186
        $region26: #{tpu_custom_call.1} parent=11 // pred_check_branch
          %406 = sbr.rel (%p404) target = $region28
        $region27: #{tpu_custom_call.1} parent=11 // pred_region
          _
        $region28: #{tpu_custom_call.1} parent=11 // pred_fallthru
          _
        // Predicated region
        $region29: #{tpu_custom_call.1} parent=11 // pred_check
          %p407 = pneg %p207
        $region30: #{tpu_custom_call.1} parent=11 // pred_check_branch
          %409 = sbr.rel (%p407) target = $region32
        $region31: #{tpu_custom_call.1} parent=11 // pred_region
          _
        $region32: #{tpu_custom_call.1} parent=11 // pred_fallthru
          _
        // Predicated region
        $region33: #{tpu_custom_call.1} parent=11 // pred_check
          %p410 = pneg %p228
        $region34: #{tpu_custom_call.1} parent=11 // pred_check_branch
          %412 = sbr.rel (%p410) target = $region36
        $region35: #{tpu_custom_call.1} parent=11 // pred_region
          _
        $region36: #{tpu_custom_call.1} parent=11 // pred_fallthru
          _
        // Predicated region
        $region37: #{tpu_custom_call.1} parent=11 // pred_check
          %p413 = pneg %p249
        $region38: #{tpu_custom_call.1} parent=11 // pred_check_branch
          %415 = sbr.rel (%p413) target = $region40
        $region39: #{tpu_custom_call.1} parent=11 // pred_region
          _
        $region40: #{tpu_custom_call.1} parent=11 // pred_fallthru
          _
        // Predicated region
        $region41: #{tpu_custom_call.1} parent=11 // pred_check
          %p416 = pneg %p270
        $region42: #{tpu_custom_call.1} parent=11 // pred_check_branch
          %418 = sbr.rel (%p416) target = $region44
        $region43: #{tpu_custom_call.1} parent=11 // pred_region
          _
        $region44: #{tpu_custom_call.1} parent=11 // pred_fallthru
          _
        // Predicated region
        $region45: #{tpu_custom_call.1} parent=11 // pred_check
          %p419 = pneg %p291
        $region46: #{tpu_custom_call.1} parent=11 // pred_check_branch
          %421 = sbr.rel (%p419) target = $region48
        $region47: #{tpu_custom_call.1} parent=11 // pred_region
          _
        $region48: #{tpu_custom_call.1} parent=11 // pred_fallthru
          _
        // Predicated region
        $region49: #{tpu_custom_call.1} parent=11 // pred_check
          %p422 = pneg %p312
        $region50: #{tpu_custom_call.1} parent=11 // pred_check_branch
          %424 = sbr.rel (%p422) target = $region52
        $region51: #{tpu_custom_call.1} parent=11 // pred_region
          _
        $region52: #{tpu_custom_call.1} parent=11 // pred_fallthru
          _
        // Predicated region
        $region53: #{tpu_custom_call.1} parent=11 // pred_check
          %p425 = pneg %p333
        $region54: #{tpu_custom_call.1} parent=11 // pred_check_branch
          %427 = sbr.rel (%p425) target = $region56
        $region55: #{tpu_custom_call.1} parent=11 // pred_region
          _
        $region56: #{tpu_custom_call.1} parent=11 // pred_fallthru
          _
        // Predicated region
        $region57: #{tpu_custom_call.1} parent=11 // pred_check
          %p428 = pneg %p354
        $region58: #{tpu_custom_call.1} parent=11 // pred_check_branch
          %430 = sbr.rel (%p428) target = $region60
        $region59: #{tpu_custom_call.1} parent=11 // pred_region
          _
        $region60: #{tpu_custom_call.1} parent=11 // pred_fallthru
          _
      $region12: #{tpu_custom_call.1} parent=5 // pred_fallthru
        _
      %p431 = scmp.lt.s32.totalorder %s24, 2
      // Predicated region
      $region61: #{tpu_custom_call.1} parent=5 // pred_check
        %p432 = pneg %p431
      $region62: #{tpu_custom_call.1} parent=5 // pred_check_branch
        %434 = sbr.rel (%p432) target = $region64
      $region63: #{tpu_custom_call.1} parent=5 // pred_region
        // Predicated region
        $region65: #{tpu_custom_call.1} parent=63 // pred_check
          %p435 = pneg %p44
        $region66: #{tpu_custom_call.1} parent=63 // pred_check_branch
          %437 = sbr.rel (%p435) target = $region68
        $region67: #{tpu_custom_call.1} parent=63 // pred_region
          %p438 = scmp.lt.s32.totalorder %s24, 1
          %s439 = scalar_select %p438, %s24, 1
          %s440 = smul.addr %s439, 4
          %s441 = scalar_lea.vmem %s0, %s440
        $region68: #{tpu_custom_call.1} parent=63 // pred_fallthru
          _
        // Predicated region
        $region69: #{tpu_custom_call.1} parent=63 // pred_check
          %p442 = pneg %p70
        $region70: #{tpu_custom_call.1} parent=63 // pred_check_branch
          %444 = sbr.rel (%p442) target = $region72
        $region71: #{tpu_custom_call.1} parent=63 // pred_region
          %p445 = scmp.lt.s32.totalorder %s24, 1
          %s446 = scalar_select %p445, %s24, 1
          %s447 = scalar_lea.vmem %s1, %s446
        $region72: #{tpu_custom_call.1} parent=63 // pred_fallthru
          _
        // Predicated region
        $region73: #{tpu_custom_call.1} parent=63 // pred_check
          %p448 = pneg %p96
        $region74: #{tpu_custom_call.1} parent=63 // pred_check_branch
          %450 = sbr.rel (%p448) target = $region76
        $region75: #{tpu_custom_call.1} parent=63 // pred_region
          %p451 = scmp.lt.s32.totalorder %s24, 1
          %s452 = scalar_select %p451, %s24, 1
          %s453 = smul.addr %s452, 4
          %s454 = scalar_lea.vmem %s2, %s453
        $region76: #{tpu_custom_call.1} parent=63 // pred_fallthru
          _
      $region64: #{tpu_custom_call.1} parent=5 // pred_fallthru
        _
      %p455 = scmp.le.s32.totalorder 1, %s24
      %p456 = scmp.lt.s32.totalorder %s24, 3
      %p457 = pnand %p455, %p456
      %p458 = pneg %p457
      // Predicated region
      $region77: #{tpu_custom_call.1} parent=5 // pred_check
        _
      $region78: #{tpu_custom_call.1} parent=5 // pred_check_branch
        %460 = sbr.rel (%p457) target = $region80
      $region79: #{tpu_custom_call.1} parent=5 // pred_region
        %s461 = ssub.s32 %s24, 1
        %p462 = scmp.lt.s32.totalorder %s29, 1
        %s463 = scalar_select %p462, %s29, 1
        %s464 = smul.addr %s463, 4
        %s465 = scalar_lea.vmem %s0, %s464
        %p466 = pneg %p50
        %p467 = pneg %p47
        %p468 = scmp.lt.s32.totalorder %s29, 1
        %s469 = scalar_select %p468, %s29, 1
        %s470 = scalar_lea.vmem %s1, %s469
        %p471 = pneg %p76
        %p472 = pneg %p73
        %p473 = scmp.lt.s32.totalorder %s29, 1
        %s474 = scalar_select %p473, %s29, 1
        %s475 = smul.addr %s474, 4
        %s476 = scalar_lea.vmem %s2, %s475
        %p477 = pneg %p102
        %p478 = pneg %p99
        %p479 = pneg %p123
        %p480 = pneg %p120
        %p481 = pneg %p144
        %p482 = pneg %p141
        %p483 = pneg %p165
        %p484 = pneg %p162
        %p485 = pneg %p186
        %p486 = pneg %p183
        %p487 = pneg %p207
        %p488 = pneg %p204
        %p489 = pneg %p228
        %p490 = pneg %p225
        %p491 = pneg %p249
        %p492 = pneg %p246
        %p493 = pneg %p270
        %p494 = pneg %p267
        %p495 = pneg %p291
        %p496 = pneg %p288
        %p497 = pneg %p312
        %p498 = pneg %p309
        %p499 = pneg %p333
        %p500 = pneg %p330
        %p501 = pneg %p354
        %p502 = pneg %p351
        %p503 = pneg %p380
        %p504 = pneg %p377
        %s505 = sand.u32 %s367, 1
        %s506 = scalar_lea.sflag [#allocation4], %s505
        %s507 = sand.u32 %s367, 1
        %s508 = smul.addr %s507, 4
        %s509 = scalar_lea.vmem [#allocation3], %s508
        %p510 = scmp.lt.s32.totalorder %s29, 1
        %s511 = scalar_select %p510, %s29, 1
        %s512 = smul.addr %s511, 4
        %s513 = scalar_lea.vmem %s0, %s512
        %p514 = scmp.lt.s32.totalorder %s29, 1
        %s515 = scalar_select %p514, %s29, 1
        %s516 = scalar_lea.vmem %s1, %s515
        %p517 = scmp.lt.s32.totalorder %s29, 1
        %s518 = scalar_select %p517, %s29, 1
        %s519 = smul.addr %s518, 4
        %s520 = scalar_lea.vmem %s2, %s519
        %v522 = vld [vmem:[%s513] sm:$0xf]
        %v523 = vld [vmem:[%s516] sm:$0x1]
        %v524 = vunpack.c.l.bf16 %v523
        %v525 = vld [vmem:[%s520] sm:$0xf]
        %v526 = vunpack.c.l.bf16 %v525
        %v527 = vsub.f32 1.0, %v524
        %v528 = vmul.f32 %v527, -1e+09
        %v529 = vld [vmem:[%s3] sm:$0xf]
        %v530 = vld [vmem:[%s3 + $0x4] sm:$0xf]
        %v531 = vld [vmem:[%s3 + $0x8] sm:$0xf]
        %v532 = vld [vmem:[%s3 + $0xc] sm:$0xf]
        %v533 = vld [vmem:[%s4] sm:$0x1]
        %v534 = vunpack.c.l.bf16 %v533
        %v535 = vlaneseq
        %v536 = vshrl.u32 %v535, 7
        %v537 = vsub.s32 0, %v536
        %v538 = vrot.slane %v534, %v537
        %v543 = vunpack.c.l.b16 %v529
        %v544 = vunpack.c.l.b16 %v530
        %v545 = vunpack.c.l.b16 %v531
        %v546 = vunpack.c.l.b16 %v532
        %v547 = vpack.c.b16 %v544, %v543
        %v548 = vpack.c.b16 %v546, %v545
        %vm551 = vcmask 261120
        %v553 = vsel %vm551, %v522, 0
        %555 = vmatprep.subr.bf16.mxu0 0
        %556 = vmatpush1.bf16.msra.mxu0 %v547
        %557 = vmatprep.subr.bf16.mxu0 0
        %558 = vmatpush1.bf16.msra.mxu0 %v548
        %559 = vmatprep.subr.bf16.mxu0 0
        %560 = vmatpush1.bf16.msra.mxu0 0
        %561 = vmatprep.subr.bf16.mxu0 0
        %562 = vmatpush1.bf16.msra.mxu0 0
        %563 = vmatprep.subr.bf16.mxu0 0
        %564 = vmatpush1.bf16.msra.mxu0 0
        %565 = vmatprep.subr.bf16.mxu0 0
        %566 = vmatpush1.bf16.msra.mxu0 0
        %567 = vmatprep.subr.bf16.mxu0 0
        %568 = vmatpush1.bf16.msra.mxu0 0
        %569 = vmatprep.subr.bf16.mxu0 0
        %570 = vmatpush1.bf16.msra.mxu0 0
        %571 = vmatprep.subr.bf16.mxu0 0
        %572 = vmatpush1.bf16.msra.mxu0 0
        %573 = vmatprep.subr.bf16.mxu0 0
        %574 = vmatpush1.bf16.msra.mxu0 0
        %575 = vmatprep.subr.bf16.mxu0 0
        %576 = vmatpush1.bf16.msra.mxu0 0
        %577 = vmatprep.subr.bf16.mxu0 0
        %578 = vmatpush1.bf16.msra.mxu0 0
        %579 = vmatprep.subr.bf16.mxu0 0
        %580 = vmatpush1.bf16.msra.mxu0 0
        %581 = vmatprep.subr.bf16.mxu0 0
        %582 = vmatpush1.bf16.msra.mxu0 0
        %583 = vmatprep.subr.bf16.mxu0 0
        %584 = vmatpush1.bf16.msra.mxu0 0
        %585 = vmatprep.subr.bf16.mxu0 0
        %586 = vmatpush1.bf16.msra.mxu0 0
        %587 = vmatprep.mubr.bf16.mxu0 0
        %588 = vmatmul.mubr.bf16.gmra.mrb[0].mxu0 %v553
        %v589 = vpop.f32.mrb[0].mxu0
        %v590 = vadd.f32 %v538, %v589
        %v591 = vpop.f32.mrb[0].mxu0
        %v592 = vpop.f32.mrb[0].mxu0
        %v593 = vpop.f32.mrb[0].mxu0
        %594 = vdwg.mxu0
        %v595 = vpack.c.bf16 %v590, %v590
        %v596 = vlaneseq
        %v597 = vshrl.u32 %v596, 7
        %v598 = vsub.s32 0, %v597
        %v599 = vrot.slane %v528, %v598
        %601 = vrot.lane.b32.xlu0 %v595, 96
        %v602 = vpop.permute.xlu0 %601
        %vm603 = vcmask 64512
        %v605 = vsel %vm603, %v595, 0
        %v608 = vsel %vm603, %v602, 0
        %610 = vmatprep.subr.bf16.mxu0 0
        %611 = vmatpush1.bf16.xpose.msra.mxu0 %v608
        %612 = vmatprep.subr.bf16.mxu0 0
        %613 = vmatpush1.bf16.xpose.msra.mxu0 0
        %614 = vmatprep.subr.bf16.mxu0 0
        %615 = vmatpush1.bf16.xpose.msra.mxu0 0
        %616 = vmatprep.subr.bf16.mxu0 0
        %617 = vmatpush1.bf16.xpose.msra.mxu0 0
        %618 = vmatprep.subr.bf16.mxu0 0
        %619 = vmatpush1.bf16.xpose.msra.mxu0 0
        %620 = vmatprep.subr.bf16.mxu0 0
        %621 = vmatpush1.bf16.xpose.msra.mxu0 0
        %622 = vmatprep.subr.bf16.mxu0 0
        %623 = vmatpush1.bf16.xpose.msra.mxu0 0
        %624 = vmatprep.subr.bf16.mxu0 0
        %625 = vmatpush1.bf16.xpose.msra.mxu0 0
        %626 = vmatprep.subr.bf16.mxu0 0
        %627 = vmatpush1.bf16.xpose.msra.mxu0 0
        %628 = vmatprep.subr.bf16.mxu0 0
        %629 = vmatpush1.bf16.xpose.msra.mxu0 0
        %630 = vmatprep.subr.bf16.mxu0 0
        %631 = vmatpush1.bf16.xpose.msra.mxu0 0
        %632 = vmatprep.subr.bf16.mxu0 0
        %633 = vmatpush1.bf16.xpose.msra.mxu0 0
        %634 = vmatprep.subr.bf16.mxu0 0
        %635 = vmatpush1.bf16.xpose.msra.mxu0 0
        %636 = vmatprep.subr.bf16.mxu0 0
        %637 = vmatpush1.bf16.xpose.msra.mxu0 0
        %638 = vmatprep.subr.bf16.mxu0 0
        %639 = vmatpush1.bf16.xpose.msra.mxu0 0
        %640 = vmatprep.subr.bf16.mxu0 0
        %641 = vmatpush1.bf16.xpose.msra.mxu0 0
        %642 = vmatprep.mubr.bf16.mxu0 0
        %643 = vmatmul.mubr.bf16.gmra.mrb[0].mxu0 %v605
        %v644 = vpop.f32.mrb[0].mxu0
        %v645 = vadd.f32 %v599, %v644
        %v646 = vpop.f32.mrb[0].mxu0
        %v647 = vpop.f32.mrb[0].mxu0
        %v648 = vpop.f32.mrb[0].mxu0
        %649 = vdwg.mxu0
        %v650 = vsel %vm603, %v645, -inf
        %651 = vmax.xlane.f32.xlu0 %v650
        %v652 = vpop.xlane.xlu0 %651
        %v653 = vsub.f32 %v645, %v652
        %v654 = vmul.f32 %v653, 1.442695
        %v655 = vpow.pop %v654
        %v656 = vsel %vm603, %v655, 0.0
        %657 = vadd.xlane.f32.xlu0 %v656
        %v658 = vpop.xlane.xlu0 %657
        %v659 = vrcp.pop %v658
        %v660 = vmul.f32 %v655, %v659
        %v661 = vpack.c.bf16 %v660, %v660
        %662 = vrot.lane.b32.xlu0 %v595, 64
        %v663 = vpop.permute.xlu0 %662
        %v665 = vsel %vm603, %v661, 0
        %vm667 = vcmask 1043456
        %v669 = vsel %vm667, %v663, 0
        %671 = vmatprep.subr.bf16.mxu0 0
        %672 = vmatpush1.bf16.msra.mxu0 %v669
        %673 = vmatprep.subr.bf16.mxu0 0
        %674 = vmatpush1.bf16.msra.mxu0 0
        %675 = vmatprep.subr.bf16.mxu0 0
        %676 = vmatpush1.bf16.msra.mxu0 0
        %677 = vmatprep.subr.bf16.mxu0 0
        %678 = vmatpush1.bf16.msra.mxu0 0
        %679 = vmatprep.subr.bf16.mxu0 0
        %680 = vmatpush1.bf16.msra.mxu0 0
        %681 = vmatprep.subr.bf16.mxu0 0
        %682 = vmatpush1.bf16.msra.mxu0 0
        %683 = vmatprep.subr.bf16.mxu0 0
        %684 = vmatpush1.bf16.msra.mxu0 0
        %685 = vmatprep.subr.bf16.mxu0 0
        %686 = vmatpush1.bf16.msra.mxu0 0
        %687 = vmatprep.subr.bf16.mxu0 0
        %688 = vmatpush1.bf16.msra.mxu0 0
        %689 = vmatprep.subr.bf16.mxu0 0
        %690 = vmatpush1.bf16.msra.mxu0 0
        %691 = vmatprep.subr.bf16.mxu0 0
        %692 = vmatpush1.bf16.msra.mxu0 0
        %693 = vmatprep.subr.bf16.mxu0 0
        %694 = vmatpush1.bf16.msra.mxu0 0
        %695 = vmatprep.subr.bf16.mxu0 0
        %696 = vmatpush1.bf16.msra.mxu0 0
        %697 = vmatprep.subr.bf16.mxu0 0
        %698 = vmatpush1.bf16.msra.mxu0 0
        %699 = vmatprep.subr.bf16.mxu0 0
        %700 = vmatpush1.bf16.msra.mxu0 0
        %701 = vmatprep.subr.bf16.mxu0 0
        %702 = vmatpush1.bf16.msra.mxu0 0
        %703 = vmatprep.mubr.bf16.mxu0 0
        %704 = vmatmul.mubr.bf16.gmra.mrb[0].mxu0 %v665
        %v705 = vpop.f32.mrb[0].mxu0
        %v706 = vadd.f32 0.0, %v705
        %v707 = vpop.f32.mrb[0].mxu0
        %v708 = vpop.f32.mrb[0].mxu0
        %v709 = vpop.f32.mrb[0].mxu0
        %710 = vdwg.mxu0
        %711 = vrot.lane.b32.xlu0 %v595, 120
        %v712 = vpop.permute.xlu0 %711
        %713 = vrot.lane.b32.xlu0 %v595, 88
        %v714 = vpop.permute.xlu0 %713
        %v716 = vsel %vm603, %v712, 0
        %v719 = vsel %vm603, %v714, 0
        %721 = vmatprep.subr.bf16.mxu0 0
        %722 = vmatpush1.bf16.xpose.msra.mxu0 %v719
        %723 = vmatprep.subr.bf16.mxu0 0
        %724 = vmatpush1.bf16.xpose.msra.mxu0 0
        %725 = vmatprep.subr.bf16.mxu0 0
        %726 = vmatpush1.bf16.xpose.msra.mxu0 0
        %727 = vmatprep.subr.bf16.mxu0 0
        %728 = vmatpush1.bf16.xpose.msra.mxu0 0
        %729 = vmatprep.subr.bf16.mxu0 0
        %730 = vmatpush1.bf16.xpose.msra.mxu0 0
        %731 = vmatprep.subr.bf16.mxu0 0
        %732 = vmatpush1.bf16.xpose.msra.mxu0 0
        %733 = vmatprep.subr.bf16.mxu0 0
        %734 = vmatpush1.bf16.xpose.msra.mxu0 0
        %735 = vmatprep.subr.bf16.mxu0 0
        %736 = vmatpush1.bf16.xpose.msra.mxu0 0
        %737 = vmatprep.subr.bf16.mxu0 0
        %738 = vmatpush1.bf16.xpose.msra.mxu0 0
        %739 = vmatprep.subr.bf16.mxu0 0
        %740 = vmatpush1.bf16.xpose.msra.mxu0 0
        %741 = vmatprep.subr.bf16.mxu0 0
        %742 = vmatpush1.bf16.xpose.msra.mxu0 0
        %743 = vmatprep.subr.bf16.mxu0 0
        %744 = vmatpush1.bf16.xpose.msra.mxu0 0
        %745 = vmatprep.subr.bf16.mxu0 0
        %746 = vmatpush1.bf16.xpose.msra.mxu0 0
        %747 = vmatprep.subr.bf16.mxu0 0
        %748 = vmatpush1.bf16.xpose.msra.mxu0 0
        %749 = vmatprep.subr.bf16.mxu0 0
        %750 = vmatpush1.bf16.xpose.msra.mxu0 0
        %751 = vmatprep.subr.bf16.mxu0 0
        %752 = vmatpush1.bf16.xpose.msra.mxu0 0
        %753 = vmatprep.mubr.bf16.mxu0 0
        %754 = vmatmul.mubr.bf16.gmra.mrb[0].mxu0 %v716
        %v755 = vpop.f32.mrb[0].mxu0
        %v756 = vadd.f32 %v599, %v755
        %v757 = vpop.f32.mrb[0].mxu0
        %v758 = vpop.f32.mrb[0].mxu0
        %v759 = vpop.f32.mrb[0].mxu0
        %760 = vdwg.mxu0
        %v761 = vsel %vm603, %v756, -inf
        %762 = vmax.xlane.f32.xlu0 %v761
        %v763 = vpop.xlane.xlu0 %762
        %v764 = vsub.f32 %v756, %v763
        %v765 = vmul.f32 %v764, 1.442695
        %v766 = vpow.pop %v765
        %v767 = vsel %vm603, %v766, 0.0
        %768 = vadd.xlane.f32.xlu0 %v767
        %v769 = vpop.xlane.xlu0 %768
        %v770 = vrcp.pop %v769
        %v771 = vmul.f32 %v766, %v770
        %v772 = vpack.c.bf16 %v771, %v771
        %773 = vrot.lane.b32.xlu0 %v595, 56
        %v774 = vpop.permute.xlu0 %773
        %v776 = vsel %vm603, %v772, 0
        %v779 = vsel %vm667, %v774, 0
        %781 = vmatprep.subr.bf16.mxu0 0
        %782 = vmatpush1.bf16.msra.mxu0 %v779
        %783 = vmatprep.subr.bf16.mxu0 0
        %784 = vmatpush1.bf16.msra.mxu0 0
        %785 = vmatprep.subr.bf16.mxu0 0
        %786 = vmatpush1.bf16.msra.mxu0 0
        %787 = vmatprep.subr.bf16.mxu0 0
        %788 = vmatpush1.bf16.msra.mxu0 0
        %789 = vmatprep.subr.bf16.mxu0 0
        %790 = vmatpush1.bf16.msra.mxu0 0
        %791 = vmatprep.subr.bf16.mxu0 0
        %792 = vmatpush1.bf16.msra.mxu0 0
        %793 = vmatprep.subr.bf16.mxu0 0
        %794 = vmatpush1.bf16.msra.mxu0 0
        %795 = vmatprep.subr.bf16.mxu0 0
        %796 = vmatpush1.bf16.msra.mxu0 0
        %797 = vmatprep.subr.bf16.mxu0 0
        %798 = vmatpush1.bf16.msra.mxu0 0
        %799 = vmatprep.subr.bf16.mxu0 0
        %800 = vmatpush1.bf16.msra.mxu0 0
        %801 = vmatprep.subr.bf16.mxu0 0
        %802 = vmatpush1.bf16.msra.mxu0 0
        %803 = vmatprep.subr.bf16.mxu0 0
        %804 = vmatpush1.bf16.msra.mxu0 0
        %805 = vmatprep.subr.bf16.mxu0 0
        %806 = vmatpush1.bf16.msra.mxu0 0
        %807 = vmatprep.subr.bf16.mxu0 0
        %808 = vmatpush1.bf16.msra.mxu0 0
        %809 = vmatprep.subr.bf16.mxu0 0
        %810 = vmatpush1.bf16.msra.mxu0 0
        %811 = vmatprep.subr.bf16.mxu0 0
        %812 = vmatpush1.bf16.msra.mxu0 0
        %813 = vmatprep.mubr.bf16.mxu0 0
        %814 = vmatmul.mubr.bf16.gmra.mrb[0].mxu0 %v776
        %v815 = vpop.f32.mrb[0].mxu0
        %v816 = vadd.f32 0.0, %v815
        %v817 = vpop.f32.mrb[0].mxu0
        %v818 = vpop.f32.mrb[0].mxu0
        %v819 = vpop.f32.mrb[0].mxu0
        %820 = vdwg.mxu0
        %821 = vrot.lane.b32.xlu0 %v595, 112
        %v822 = vpop.permute.xlu0 %821
        %823 = vrot.lane.b32.xlu0 %v595, 80
        %v824 = vpop.permute.xlu0 %823
        %v826 = vsel %vm603, %v822, 0
        %v829 = vsel %vm603, %v824, 0
        %831 = vmatprep.subr.bf16.mxu0 0
        %832 = vmatpush1.bf16.xpose.msra.mxu0 %v829
        %833 = vmatprep.subr.bf16.mxu0 0
        %834 = vmatpush1.bf16.xpose.msra.mxu0 0
        %835 = vmatprep.subr.bf16.mxu0 0
        %836 = vmatpush1.bf16.xpose.msra.mxu0 0
        %837 = vmatprep.subr.bf16.mxu0 0
        %838 = vmatpush1.bf16.xpose.msra.mxu0 0
        %839 = vmatprep.subr.bf16.mxu0 0
        %840 = vmatpush1.bf16.xpose.msra.mxu0 0
        %841 = vmatprep.subr.bf16.mxu0 0
        %842 = vmatpush1.bf16.xpose.msra.mxu0 0
        %843 = vmatprep.subr.bf16.mxu0 0
        %844 = vmatpush1.bf16.xpose.msra.mxu0 0
        %845 = vmatprep.subr.bf16.mxu0 0
        %846 = vmatpush1.bf16.xpose.msra.mxu0 0
        %847 = vmatprep.subr.bf16.mxu0 0
        %848 = vmatpush1.bf16.xpose.msra.mxu0 0
        %849 = vmatprep.subr.bf16.mxu0 0
        %850 = vmatpush1.bf16.xpose.msra.mxu0 0
        %851 = vmatprep.subr.bf16.mxu0 0
        %852 = vmatpush1.bf16.xpose.msra.mxu0 0
        %853 = vmatprep.subr.bf16.mxu0 0
        %854 = vmatpush1.bf16.xpose.msra.mxu0 0
        %855 = vmatprep.subr.bf16.mxu0 0
        %856 = vmatpush1.bf16.xpose.msra.mxu0 0
        %857 = vmatprep.subr.bf16.mxu0 0
        %858 = vmatpush1.bf16.xpose.msra.mxu0 0
        %859 = vmatprep.subr.bf16.mxu0 0
        %860 = vmatpush1.bf16.xpose.msra.mxu0 0
        %861 = vmatprep.subr.bf16.mxu0 0
        %862 = vmatpush1.bf16.xpose.msra.mxu0 0
        %863 = vmatprep.mubr.bf16.mxu0 0
        %864 = vmatmul.mubr.bf16.gmra.mrb[0].mxu0 %v826
        %v865 = vpop.f32.mrb[0].mxu0
        %v866 = vadd.f32 %v599, %v865
        %v867 = vpop.f32.mrb[0].mxu0
        %v868 = vpop.f32.mrb[0].mxu0
        %v869 = vpop.f32.mrb[0].mxu0
        %870 = vdwg.mxu0
        %v871 = vsel %vm603, %v866, -inf
        %872 = vmax.xlane.f32.xlu0 %v871
        %v873 = vpop.xlane.xlu0 %872
        %v874 = vsub.f32 %v866, %v873
        %v875 = vmul.f32 %v874, 1.442695
        %v876 = vpow.pop %v875
        %v877 = vsel %vm603, %v876, 0.0
        %878 = vadd.xlane.f32.xlu0 %v877
        %v879 = vpop.xlane.xlu0 %878
        %v880 = vrcp.pop %v879
        %v881 = vmul.f32 %v876, %v880
        %v882 = vpack.c.bf16 %v881, %v881
        %883 = vrot.lane.b32.xlu0 %v595, 48
        %v884 = vpop.permute.xlu0 %883
        %v886 = vsel %vm603, %v882, 0
        %v889 = vsel %vm667, %v884, 0
        %891 = vmatprep.subr.bf16.mxu0 0
        %892 = vmatpush1.bf16.msra.mxu0 %v889
        %893 = vmatprep.subr.bf16.mxu0 0
        %894 = vmatpush1.bf16.msra.mxu0 0
        %895 = vmatprep.subr.bf16.mxu0 0
        %896 = vmatpush1.bf16.msra.mxu0 0
        %897 = vmatprep.subr.bf16.mxu0 0
        %898 = vmatpush1.bf16.msra.mxu0 0
        %899 = vmatprep.subr.bf16.mxu0 0
        %900 = vmatpush1.bf16.msra.mxu0 0
        %901 = vmatprep.subr.bf16.mxu0 0
        %902 = vmatpush1.bf16.msra.mxu0 0
        %903 = vmatprep.subr.bf16.mxu0 0
        %904 = vmatpush1.bf16.msra.mxu0 0
        %905 = vmatprep.subr.bf16.mxu0 0
        %906 = vmatpush1.bf16.msra.mxu0 0
        %907 = vmatprep.subr.bf16.mxu0 0
        %908 = vmatpush1.bf16.msra.mxu0 0
        %909 = vmatprep.subr.bf16.mxu0 0
        %910 = vmatpush1.bf16.msra.mxu0 0
        %911 = vmatprep.subr.bf16.mxu0 0
        %912 = vmatpush1.bf16.msra.mxu0 0
        %913 = vmatprep.subr.bf16.mxu0 0
        %914 = vmatpush1.bf16.msra.mxu0 0
        %915 = vmatprep.subr.bf16.mxu0 0
        %916 = vmatpush1.bf16.msra.mxu0 0
        %917 = vmatprep.subr.bf16.mxu0 0
        %918 = vmatpush1.bf16.msra.mxu0 0
        %919 = vmatprep.subr.bf16.mxu0 0
        %920 = vmatpush1.bf16.msra.mxu0 0
        %921 = vmatprep.subr.bf16.mxu0 0
        %922 = vmatpush1.bf16.msra.mxu0 0
        %923 = vmatprep.mubr.bf16.mxu0 0
        %924 = vmatmul.mubr.bf16.gmra.mrb[0].mxu0 %v886
        %v925 = vpop.f32.mrb[0].mxu0
        %v926 = vadd.f32 0.0, %v925
        %v927 = vpop.f32.mrb[0].mxu0
        %v928 = vpop.f32.mrb[0].mxu0
        %v929 = vpop.f32.mrb[0].mxu0
        %930 = vdwg.mxu0
        %931 = vrot.lane.b32.xlu0 %v595, 104
        %v932 = vpop.permute.xlu0 %931
        %933 = vrot.lane.b32.xlu0 %v595, 72
        %v934 = vpop.permute.xlu0 %933
        %v936 = vsel %vm603, %v932, 0
        %v939 = vsel %vm603, %v934, 0
        %941 = vmatprep.subr.bf16.mxu0 0
        %942 = vmatpush1.bf16.xpose.msra.mxu0 %v939
        %943 = vmatprep.subr.bf16.mxu0 0
        %944 = vmatpush1.bf16.xpose.msra.mxu0 0
        %945 = vmatprep.subr.bf16.mxu0 0
        %946 = vmatpush1.bf16.xpose.msra.mxu0 0
        %947 = vmatprep.subr.bf16.mxu0 0
        %948 = vmatpush1.bf16.xpose.msra.mxu0 0
        %949 = vmatprep.subr.bf16.mxu0 0
        %950 = vmatpush1.bf16.xpose.msra.mxu0 0
        %951 = vmatprep.subr.bf16.mxu0 0
        %952 = vmatpush1.bf16.xpose.msra.mxu0 0
        %953 = vmatprep.subr.bf16.mxu0 0
        %954 = vmatpush1.bf16.xpose.msra.mxu0 0
        %955 = vmatprep.subr.bf16.mxu0 0
        %956 = vmatpush1.bf16.xpose.msra.mxu0 0
        %957 = vmatprep.subr.bf16.mxu0 0
        %958 = vmatpush1.bf16.xpose.msra.mxu0 0
        %959 = vmatprep.subr.bf16.mxu0 0
        %960 = vmatpush1.bf16.xpose.msra.mxu0 0
        %961 = vmatprep.subr.bf16.mxu0 0
        %962 = vmatpush1.bf16.xpose.msra.mxu0 0
        %963 = vmatprep.subr.bf16.mxu0 0
        %964 = vmatpush1.bf16.xpose.msra.mxu0 0
        %965 = vmatprep.subr.bf16.mxu0 0
        %966 = vmatpush1.bf16.xpose.msra.mxu0 0
        %967 = vmatprep.subr.bf16.mxu0 0
        %968 = vmatpush1.bf16.xpose.msra.mxu0 0
        %969 = vmatprep.subr.bf16.mxu0 0
        %970 = vmatpush1.bf16.xpose.msra.mxu0 0
        %971 = vmatprep.subr.bf16.mxu0 0
        %972 = vmatpush1.bf16.xpose.msra.mxu0 0
        %973 = vmatprep.mubr.bf16.mxu0 0
        %974 = vmatmul.mubr.bf16.gmra.mrb[0].mxu0 %v936
        %v975 = vpop.f32.mrb[0].mxu0
        %v976 = vadd.f32 %v599, %v975
        %v977 = vpop.f32.mrb[0].mxu0
        %v978 = vpop.f32.mrb[0].mxu0
        %v979 = vpop.f32.mrb[0].mxu0
        %980 = vdwg.mxu0
        %v981 = vsel %vm603, %v976, -inf
        %982 = vmax.xlane.f32.xlu0 %v981
        %v983 = vpop.xlane.xlu0 %982
        %v984 = vsub.f32 %v976, %v983
        %v985 = vmul.f32 %v984, 1.442695
        %v986 = vpow.pop %v985
        %v987 = vsel %vm603, %v986, 0.0
        %988 = vadd.xlane.f32.xlu0 %v987
        %v989 = vpop.xlane.xlu0 %988
        %v990 = vrcp.pop %v989
        %v991 = vmul.f32 %v986, %v990
        %v992 = vpack.c.bf16 %v991, %v991
        %993 = vrot.lane.b32.xlu0 %v595, 40
        %v994 = vpop.permute.xlu0 %993
        %v996 = vsel %vm603, %v992, 0
        %v999 = vsel %vm667, %v994, 0
        %1001 = vmatprep.subr.bf16.mxu0 0
        %1002 = vmatpush1.bf16.msra.mxu0 %v999
        %1003 = vmatprep.subr.bf16.mxu0 0
        %1004 = vmatpush1.bf16.msra.mxu0 0
        %1005 = vmatprep.subr.bf16.mxu0 0
        %1006 = vmatpush1.bf16.msra.mxu0 0
        %1007 = vmatprep.subr.bf16.mxu0 0
        %1008 = vmatpush1.bf16.msra.mxu0 0
        %1009 = vmatprep.subr.bf16.mxu0 0
        %1010 = vmatpush1.bf16.msra.mxu0 0
        %1011 = vmatprep.subr.bf16.mxu0 0
        %1012 = vmatpush1.bf16.msra.mxu0 0
        %1013 = vmatprep.subr.bf16.mxu0 0
        %1014 = vmatpush1.bf16.msra.mxu0 0
        %1015 = vmatprep.subr.bf16.mxu0 0
        %1016 = vmatpush1.bf16.msra.mxu0 0
        %1017 = vmatprep.subr.bf16.mxu0 0
        %1018 = vmatpush1.bf16.msra.mxu0 0
        %1019 = vmatprep.subr.bf16.mxu0 0
        %1020 = vmatpush1.bf16.msra.mxu0 0
        %1021 = vmatprep.subr.bf16.mxu0 0
        %1022 = vmatpush1.bf16.msra.mxu0 0
        %1023 = vmatprep.subr.bf16.mxu0 0
        %1024 = vmatpush1.bf16.msra.mxu0 0
        %1025 = vmatprep.subr.bf16.mxu0 0
        %1026 = vmatpush1.bf16.msra.mxu0 0
        %1027 = vmatprep.subr.bf16.mxu0 0
        %1028 = vmatpush1.bf16.msra.mxu0 0
        %1029 = vmatprep.subr.bf16.mxu0 0
        %1030 = vmatpush1.bf16.msra.mxu0 0
        %1031 = vmatprep.subr.bf16.mxu0 0
        %1032 = vmatpush1.bf16.msra.mxu0 0
        %1033 = vmatprep.mubr.bf16.mxu0 0
        %1034 = vmatmul.mubr.bf16.gmra.mrb[0].mxu0 %v996
        %v1035 = vpop.f32.mrb[0].mxu0
        %v1036 = vadd.f32 0.0, %v1035
        %v1037 = vpop.f32.mrb[0].mxu0
        %v1038 = vpop.f32.mrb[0].mxu0
        %v1039 = vpop.f32.mrb[0].mxu0
        %1040 = vdwg.mxu0
        %1042 = vrot.lane.b32.xlu0 %v816, 8
        %v1043 = vpop.permute.xlu0 %1042
        %1046 = vrot.lane.b32.xlu0 %v926, 16
        %v1047 = vpop.permute.xlu0 %1046
        %1050 = vrot.lane.b32.xlu0 %v1036, 24
        %v1051 = vpop.permute.xlu0 %1050
        %v1053 = vsel %vm603, %v706, %v1043
        %vm1054 = vcmask 130048
        %v1055 = vsel %vm1054, %v1053, %v1047
        %vm1056 = vcmask 195584
        %v1057 = vsel %vm1056, %v1055, %v1051
        %v1058 = vpack.c.bf16 %v1057, %v1057
        %vm1059 = vcmask 257024
        %1060 = vst.msk [vmem:[#allocation2] sm:$0xf] %vm1059, %v1058
        %v1061 = vld [vmem:[#allocation2] sm:$0xf]
        %v1062 = vld [vmem:[%s5] sm:$0xf]
        %v1063 = vld [vmem:[%s5 + $0x4] sm:$0xf]
        %v1064 = vld [vmem:[%s5 + $0x8] sm:$0xf]
        %v1065 = vld [vmem:[%s5 + $0xc] sm:$0xf]
        %v1066 = vld [vmem:[%s6] sm:$0x1]
        %v1067 = vunpack.c.l.bf16 %v1066
        %v1068 = vlaneseq
        %v1069 = vshrl.u32 %v1068, 7
        %v1070 = vsub.s32 0, %v1069
        %v1071 = vrot.slane %v1067, %v1070
        %v1076 = vunpack.c.l.b16 %v1062
        %v1077 = vunpack.c.l.b16 %v1063
        %v1078 = vunpack.c.l.b16 %v1064
        %v1079 = vunpack.c.l.b16 %v1065
        %v1080 = vpack.c.b16 %v1077, %v1076
        %v1081 = vpack.c.b16 %v1079, %v1078
        %v1085 = vsel %vm551, %v1061, 0
        %1087 = vmatprep.subr.bf16.mxu0 0
        %1088 = vmatpush1.bf16.msra.mxu0 %v1080
        %1089 = vmatprep.subr.bf16.mxu0 0
        %1090 = vmatpush1.bf16.msra.mxu0 %v1081
        %1091 = vmatprep.subr.bf16.mxu0 0
        %1092 = vmatpush1.bf16.msra.mxu0 0
        %1093 = vmatprep.subr.bf16.mxu0 0
        %1094 = vmatpush1.bf16.msra.mxu0 0
        %1095 = vmatprep.subr.bf16.mxu0 0
        %1096 = vmatpush1.bf16.msra.mxu0 0
        %1097 = vmatprep.subr.bf16.mxu0 0
        %1098 = vmatpush1.bf16.msra.mxu0 0
        %1099 = vmatprep.subr.bf16.mxu0 0
        %1100 = vmatpush1.bf16.msra.mxu0 0
        %1101 = vmatprep.subr.bf16.mxu0 0
        %1102 = vmatpush1.bf16.msra.mxu0 0
        %1103 = vmatprep.subr.bf16.mxu0 0
        %1104 = vmatpush1.bf16.msra.mxu0 0
        %1105 = vmatprep.subr.bf16.mxu0 0
        %1106 = vmatpush1.bf16.msra.mxu0 0
        %1107 = vmatprep.subr.bf16.mxu0 0
        %1108 = vmatpush1.bf16.msra.mxu0 0
        %1109 = vmatprep.subr.bf16.mxu0 0
        %1110 = vmatpush1.bf16.msra.mxu0 0
        %1111 = vmatprep.subr.bf16.mxu0 0
        %1112 = vmatpush1.bf16.msra.mxu0 0
        %1113 = vmatprep.subr.bf16.mxu0 0
        %1114 = vmatpush1.bf16.msra.mxu0 0
        %1115 = vmatprep.subr.bf16.mxu0 0
        %1116 = vmatpush1.bf16.msra.mxu0 0
        %1117 = vmatprep.subr.bf16.mxu0 0
        %1118 = vmatpush1.bf16.msra.mxu0 0
        %1119 = vmatprep.mubr.bf16.mxu0 0
        %1120 = vmatmul.mubr.bf16.gmra.mrb[0].mxu0 %v1085
        %v1121 = vpop.f32.mrb[0].mxu0
        %v1122 = vadd.f32 %v1071, %v1121
        %v1123 = vpop.f32.mrb[0].mxu0
        %v1124 = vpop.f32.mrb[0].mxu0
        %v1125 = vpop.f32.mrb[0].mxu0
        %1126 = vdwg.mxu0
        %v1127 = vunpack.c.l.bf16 %v522
        %v1128 = vadd.f32 %v1127, %v1122
        %v1129 = vsel %vm551, %v1128, 0.0
        %1130 = vadd.xlane.f32.xlu0 %v1129
        %v1131 = vpop.xlane.xlu0 %1130
        %v1132 = vrcp.pop 32.0
        %v1133 = vmul.f32 %v1131, %v1132
        %v1134 = vsub.f32 %v1128, %v1133
        %v1135 = vmul.f32 %v1134, %v1134
        %v1136 = vsel %vm551, %v1135, 0.0
        %1137 = vadd.xlane.f32.xlu0 %v1136
        %v1138 = vpop.xlane.xlu0 %1137
        %v1139 = vmul.f32 %v1138, %v1132
        %v1140 = vadd.f32 %v1139, 1e-12
        %v1141 = vrsqrt.pop %v1140
        %v1142 = vmul.f32 %v1134, %v1141
        %v1143 = vld [vmem:[%s7] sm:$0x1]
        %v1144 = vunpack.c.l.bf16 %v1143
        %v1145 = vlaneseq
        %v1146 = vshrl.u32 %v1145, 7
        %v1147 = vsub.s32 0, %v1146
        %v1148 = vrot.slane %v1144, %v1147
        %v1149 = vmul.f32 %v1142, %v1148
        %v1150 = vld [vmem:[%s8] sm:$0x1]
        %v1151 = vunpack.c.l.bf16 %v1150
        %v1152 = vlaneseq
        %v1153 = vshrl.u32 %v1152, 7
        %v1154 = vsub.s32 0, %v1153
        %v1155 = vrot.slane %v1151, %v1154
        %v1156 = vadd.f32 %v1149, %v1155
        %v1157 = vpack.c.bf16 %v1156, %v1156
        %v1158 = vld [vmem:[%s9] sm:$0xf]
        %v1159 = vld [vmem:[%s9 + $0x4] sm:$0xf]
        %v1160 = vld [vmem:[%s9 + $0x8] sm:$0xf]
        %v1161 = vld [vmem:[%s9 + $0xc] sm:$0xf]
        %v1162 = vld [vmem:[%s10] sm:$0x1]
        %v1163 = vunpack.c.l.bf16 %v1162
        %v1164 = vlaneseq
        %v1165 = vshrl.u32 %v1164, 7
        %v1166 = vsub.s32 0, %v1165
        %v1167 = vrot.slane %v1163, %v1166
        %v1172 = vunpack.c.l.b16 %v1158
        %v1173 = vunpack.c.l.b16 %v1159
        %v1174 = vunpack.c.l.b16 %v1160
        %v1175 = vunpack.c.l.b16 %v1161
        %v1176 = vpack.c.b16 %v1173, %v1172
        %v1177 = vpack.c.b16 %v1175, %v1174
        %v1181 = vsel %vm551, %v1157, 0
        %1183 = vmatprep.subr.bf16.mxu0 0
        %1184 = vmatpush1.bf16.msra.mxu0 %v1176
        %1185 = vmatprep.subr.bf16.mxu0 0
        %1186 = vmatpush1.bf16.msra.mxu0 %v1177
        %1187 = vmatprep.subr.bf16.mxu0 0
        %1188 = vmatpush1.bf16.msra.mxu0 0
        %1189 = vmatprep.subr.bf16.mxu0 0
        %1190 = vmatpush1.bf16.msra.mxu0 0
        %1191 = vmatprep.subr.bf16.mxu0 0
        %1192 = vmatpush1.bf16.msra.mxu0 0
        %1193 = vmatprep.subr.bf16.mxu0 0
        %1194 = vmatpush1.bf16.msra.mxu0 0
        %1195 = vmatprep.subr.bf16.mxu0 0
        %1196 = vmatpush1.bf16.msra.mxu0 0
        %1197 = vmatprep.subr.bf16.mxu0 0
        %1198 = vmatpush1.bf16.msra.mxu0 0
        %1199 = vmatprep.subr.bf16.mxu0 0
        %1200 = vmatpush1.bf16.msra.mxu0 0
        %1201 = vmatprep.subr.bf16.mxu0 0
        %1202 = vmatpush1.bf16.msra.mxu0 0
        %1203 = vmatprep.subr.bf16.mxu0 0
        %1204 = vmatpush1.bf16.msra.mxu0 0
        %1205 = vmatprep.subr.bf16.mxu0 0
        %1206 = vmatpush1.bf16.msra.mxu0 0
        %1207 = vmatprep.subr.bf16.mxu0 0
        %1208 = vmatpush1.bf16.msra.mxu0 0
        %1209 = vmatprep.subr.bf16.mxu0 0
        %1210 = vmatpush1.bf16.msra.mxu0 0
        %1211 = vmatprep.subr.bf16.mxu0 0
        %1212 = vmatpush1.bf16.msra.mxu0 0
        %1213 = vmatprep.subr.bf16.mxu0 0
        %1214 = vmatpush1.bf16.msra.mxu0 0
        %1215 = vmatprep.mubr.bf16.mxu0 0
        %1216 = vmatmul.mubr.bf16.gmra.mrb[0].mxu0 %v1181
        %v1217 = vpop.f32.mrb[0].mxu0
        %v1218 = vadd.f32 %v1167, %v1217
        %v1219 = vpop.f32.mrb[0].mxu0
        %v1220 = vpop.f32.mrb[0].mxu0
        %v1221 = vpop.f32.mrb[0].mxu0
        %1222 = vdwg.mxu0
        %v1223 = vmul.f32 %v1218, %v1218
        %v1224 = vmul.f32 %v1218, %v1223
        %v1225 = vmul.f32 %v1224, 0.044715
        %v1226 = vadd.f32 %v1218, %v1225
        %v1227 = vmul.f32 %v1226, 0.7978846
        %v1228 = vtanh.pop %v1227
        %v1229 = vadd.f32 %v1228, 1.0
        %v1230 = vmul.f32 %v1229, 0.5
        %v1231 = vmul.f32 %v1218, %v1230
        %v1232 = vpack.c.bf16 %v1231, %v1231
        %v1233 = vld [vmem:[%s11] sm:$0xf]
        %v1234 = vld [vmem:[%s11 + $0x4] sm:$0xf]
        %v1235 = vld [vmem:[%s11 + $0x8] sm:$0xf]
        %v1236 = vld [vmem:[%s11 + $0xc] sm:$0xf]
        %v1237 = vld [vmem:[%s11 + $0x10] sm:$0xf]
        %v1238 = vld [vmem:[%s11 + $0x14] sm:$0xf]
        %v1239 = vld [vmem:[%s11 + $0x18] sm:$0xf]
        %v1240 = vld [vmem:[%s11 + $0x1c] sm:$0xf]
        %v1241 = vld [vmem:[%s11 + $0x20] sm:$0xf]
        %v1242 = vld [vmem:[%s11 + $0x24] sm:$0xf]
        %v1243 = vld [vmem:[%s11 + $0x28] sm:$0xf]
        %v1244 = vld [vmem:[%s11 + $0x2c] sm:$0xf]
        %v1245 = vld [vmem:[%s11 + $0x30] sm:$0xf]
        %v1246 = vld [vmem:[%s11 + $0x34] sm:$0xf]
        %v1247 = vld [vmem:[%s11 + $0x38] sm:$0xf]
        %v1248 = vld [vmem:[%s11 + $0x3c] sm:$0xf]
        %v1249 = vld [vmem:[%s12] sm:$0x1]
        %v1250 = vunpack.c.l.bf16 %v1249
        %v1251 = vlaneseq
        %v1252 = vshrl.u32 %v1251, 7
        %v1253 = vsub.s32 0, %v1252
        %v1254 = vrot.slane %v1250, %v1253
        %v1271 = vunpack.c.l.b16 %v1233
        %v1272 = vunpack.c.l.b16 %v1234
        %v1273 = vunpack.c.l.b16 %v1235
        %v1274 = vunpack.c.l.b16 %v1236
        %v1275 = vunpack.c.l.b16 %v1237
        %v1276 = vunpack.c.l.b16 %v1238
        %v1277 = vunpack.c.l.b16 %v1239
        %v1278 = vunpack.c.l.b16 %v1240
        %v1279 = vunpack.c.l.b16 %v1241
        %v1280 = vunpack.c.l.b16 %v1242
        %v1281 = vunpack.c.l.b16 %v1243
        %v1282 = vunpack.c.l.b16 %v1244
        %v1283 = vunpack.c.l.b16 %v1245
        %v1284 = vunpack.c.l.b16 %v1246
        %v1285 = vunpack.c.l.b16 %v1247
        %v1286 = vunpack.c.l.b16 %v1248
        %v1287 = vpack.c.b16 %v1272, %v1271
        %v1288 = vpack.c.b16 %v1274, %v1273
        %v1289 = vpack.c.b16 %v1276, %v1275
        %v1290 = vpack.c.b16 %v1278, %v1277
        %v1291 = vpack.c.b16 %v1280, %v1279
        %v1292 = vpack.c.b16 %v1282, %v1281
        %v1293 = vpack.c.b16 %v1284, %v1283
        %v1294 = vpack.c.b16 %v1286, %v1285
        %1303 = vmatprep.subr.bf16.mxu0 0
        %1304 = vmatpush1.bf16.msra.mxu0 %v1287
        %1305 = vmatprep.subr.bf16.mxu0 0
        %1306 = vmatpush1.bf16.msra.mxu0 %v1288
        %1307 = vmatprep.subr.bf16.mxu0 0
        %1308 = vmatpush1.bf16.msra.mxu0 %v1289
        %1309 = vmatprep.subr.bf16.mxu0 0
        %1310 = vmatpush1.bf16.msra.mxu0 %v1290
        %1311 = vmatprep.subr.bf16.mxu0 0
        %1312 = vmatpush1.bf16.msra.mxu0 %v1291
        %1313 = vmatprep.subr.bf16.mxu0 0
        %1314 = vmatpush1.bf16.msra.mxu0 %v1292
        %1315 = vmatprep.subr.bf16.mxu0 0
        %1316 = vmatpush1.bf16.msra.mxu0 %v1293
        %1317 = vmatprep.subr.bf16.mxu0 0
        %1318 = vmatpush1.bf16.msra.mxu0 %v1294
        %1319 = vmatprep.subr.bf16.mxu0 0
        %1320 = vmatpush1.bf16.msra.mxu0 0
        %1321 = vmatprep.subr.bf16.mxu0 0
        %1322 = vmatpush1.bf16.msra.mxu0 0
        %1323 = vmatprep.subr.bf16.mxu0 0
        %1324 = vmatpush1.bf16.msra.mxu0 0
        %1325 = vmatprep.subr.bf16.mxu0 0
        %1326 = vmatpush1.bf16.msra.mxu0 0
        %1327 = vmatprep.subr.bf16.mxu0 0
        %1328 = vmatpush1.bf16.msra.mxu0 0
        %1329 = vmatprep.subr.bf16.mxu0 0
        %1330 = vmatpush1.bf16.msra.mxu0 0
        %1331 = vmatprep.subr.bf16.mxu0 0
        %1332 = vmatpush1.bf16.msra.mxu0 0
        %1333 = vmatprep.subr.bf16.mxu0 0
        %1334 = vmatpush1.bf16.msra.mxu0 0
        %1335 = vmatprep.mubr.bf16.mxu0 0
        %1336 = vmatmul.mubr.bf16.gmra.mrb[0].mxu0 %v1232
        %v1337 = vpop.f32.mrb[0].mxu0
        %v1338 = vadd.f32 %v1254, %v1337
        %v1339 = vpop.f32.mrb[0].mxu0
        %v1340 = vpop.f32.mrb[0].mxu0
        %v1341 = vpop.f32.mrb[0].mxu0
        %1342 = vdwg.mxu0
        %v1343 = vadd.f32 %v1156, %v1338
        %v1344 = vsel %vm551, %v1343, 0.0
        %1345 = vadd.xlane.f32.xlu0 %v1344
        %v1346 = vpop.xlane.xlu0 %1345
        %v1347 = vmul.f32 %v1346, %v1132
        %v1348 = vsub.f32 %v1343, %v1347
        %v1349 = vmul.f32 %v1348, %v1348
        %v1350 = vsel %vm551, %v1349, 0.0
        %1351 = vadd.xlane.f32.xlu0 %v1350
        %v1352 = vpop.xlane.xlu0 %1351
        %v1353 = vmul.f32 %v1352, %v1132
        %v1354 = vadd.f32 %v1353, 1e-12
        %v1355 = vrsqrt.pop %v1354
        %v1356 = vmul.f32 %v1348, %v1355
        %v1357 = vld [vmem:[%s13] sm:$0x1]
        %v1358 = vunpack.c.l.bf16 %v1357
        %v1359 = vlaneseq
        %v1360 = vshrl.u32 %v1359, 7
        %v1361 = vsub.s32 0, %v1360
        %v1362 = vrot.slane %v1358, %v1361
        %v1363 = vmul.f32 %v1356, %v1362
        %v1364 = vld [vmem:[%s14] sm:$0x1]
        %v1365 = vunpack.c.l.bf16 %v1364
        %v1366 = vlaneseq
        %v1367 = vshrl.u32 %v1366, 7
        %v1368 = vsub.s32 0, %v1367
        %v1369 = vrot.slane %v1365, %v1368
        %v1370 = vadd.f32 %v1363, %v1369
        %1372 = vset.pattern.permute.xlu0 0
        %1373 = vperm.xlu0 %1372, %v526
        %v1374 = vpop.permute.xlu0 %1373
        %v1376 = vmul.f32 %v1370, %v1374
        %v1377 = vpack.c.bf16 %v1376, %v1376
        %1378 = vst.msk [vmem:[%s509] sm:$0xf] %vm1059, %v1377
        %s1379 = sand.u32 %s367, 1
        %s1380 = scalar_lea.sflag [#allocation4], %s1379
        %s1381 = sand.u32 %s367, 1
        %s1382 = smul.addr %s1381, 4
        %s1383 = scalar_lea.vmem [#allocation3], %s1382
        // Predicated region
        $region81: #{tpu_custom_call.1} parent=79 // pred_check
          %p1384 = pneg %p377
        $region82: #{tpu_custom_call.1} parent=79 // pred_check_branch
          %1386 = sbr.rel (%p1384) target = $region84
        $region83: #{tpu_custom_call.1} parent=79 // pred_region
          %s1388 = ssub.s32 64, 64
          %1389 = vsyncadd %s1380, %s1388
          %s1390 = smul.addr %s29, 64
          %s1391 = scalar_lea.hbm %s15, %s1390
          %s1393 = sshll.u32 %s1383, 4
          %s1394 = int_to_ptr.vmem [resolvable:$true] %s1393
          %1396 = dma.vmem_to_hbm [thread:$0]  %s1394, 64, %s1391, %s1380
        $region84: #{tpu_custom_call.1} parent=79 // pred_fallthru
          _
      $region80: #{tpu_custom_call.1} parent=5 // pred_fallthru
        _
      %p1397 = scmp.le.s32.totalorder 2, %s24
      // Predicated region
      $region85: #{tpu_custom_call.1} parent=5 // pred_check
        %p1398 = pneg %p1397
      $region86: #{tpu_custom_call.1} parent=5 // pred_check_branch
        %1400 = sbr.rel (%p1398) target = $region88
      $region87: #{tpu_custom_call.1} parent=5 // pred_region
        %s1401 = ssub.s32 %s24, 2
        // Predicated region
        $region89: #{tpu_custom_call.1} parent=87 // pred_check
          %p1402 = pneg %p383
        $region90: #{tpu_custom_call.1} parent=87 // pred_check_branch
          %1404 = sbr.rel (%p1402) target = $region92
        $region91: #{tpu_custom_call.1} parent=87 // pred_region
          %s1405 = sand.u32 %s368, 1
          %s1406 = scalar_lea.sflag [#allocation4], %s1405
          %s1407 = sand.u32 %s368, 1
          %s1408 = smul.addr %s1407, 4
          %s1409 = scalar_lea.vmem [#allocation3], %s1408
          %1410 = dma.done %s1406, 64
        $region92: #{tpu_custom_call.1} parent=87 // pred_fallthru
          _
      $region88: #{tpu_custom_call.1} parent=5 // pred_fallthru
        _
    $region6: #{tpu_custom_call.1} parent=1 // loop_footer
      %s28 = sadd.s32 1, %s24
    $region7: #{tpu_custom_call.1} parent=1 // loop_footer_branch
      %23 = sbr.rel target = $region3
    $region8: #{tpu_custom_call.1} parent=1 // loop_exit
      _
    %1411 = vsyncpa [#allocation4], 1
    %s1412 = scalar_lea.sflag [#allocation4], 1
    %1413 = vsyncpa %s1412, 1

</llo_original>
